<compile_context>
chip_gen: v7x
topology: tpu7x:2x2x1
jax: 0.10.0
libtpu: 0.0.40
codegen_flags: <defaults>
</compile_context>

<pallas_src>
import functools

import jax
import jax.numpy as jnp
from jax.experimental import pallas as pl
from jax.experimental.pallas import tpu as pltpu


def _lstm_seq_kernel(num_layers, seq_len, future, hp, *refs):
    """Whole recurrence (sequence + future feedback) in one kernel invocation."""
    x_ref = refs[0]
    wih0 = refs[1][...]        # (1, 4*hp)   layer-0 input row (i/f/o cols pre-scaled by 0.5)
    whh0 = refs[2][...]        # (hp, 4*hp)  layer-0 hidden weights (transposed, padded, scaled)
    b0 = refs[3][...]          # (1, 4*hp)   b_ih + b_hh (padded, scaled)
    w0fut = refs[4][...]       # (hp, 4*hp)  layer-0 weights with the Linear feedback folded in
    b0fut = refs[5][...]       # (1, 4*hp)
    idx = 6
    upper = []
    for _ in range(1, num_layers):
        upper.append((refs[idx][...], refs[idx + 1][...]))   # (hp, 4hp), (1, 4hp)
        idx += 2
    wlin_bd = refs[idx][...]   # (Ttot*hp, Ttot) block-diagonal Linear weight (epilogue)
    blin = refs[idx + 1][...]  # (1, 1)
    out_ref = refs[idx + 2]    # (B, Ttot)

    B = x_ref.shape[0]

    def gates_to_hc(gates, c):
        # i/f/o weight columns were pre-scaled by 0.5, so a single streamed tanh over the
        # full (B, 4*hp) gate tensor yields tanh(z) for g and tanh(z/2) for i/f/o;
        # sigmoid(z) = 0.5*tanh(z/2) + 0.5 finishes i/f/o with one FMA each.
        t4 = jnp.tanh(gates)
        i = 0.5 * t4[:, 0 * hp:1 * hp] + 0.5
        f = 0.5 * t4[:, 1 * hp:2 * hp] + 0.5
        g = t4[:, 2 * hp:3 * hp]
        o = 0.5 * t4[:, 3 * hp:4 * hp] + 0.5
        c_new = f * c + i * g
        h_new = o * jnp.tanh(c_new)
        return h_new, c_new

    def upper_layers(h, c):
        # layers >= 1 consume h as BOTH input and hidden state (PyTorch forward quirk),
        # so w_ih + w_hh were pre-summed -> a single matmul per layer per step.
        for wcT, bc in upper:
            gates = jnp.dot(h, wcT, preferred_element_type=jnp.float32) + bc
            h, c = gates_to_hc(gates, c)
        return h, c

    # Layer-0 input contributions (+ bias) for every sequence step: they depend only on x
    # and weights, i.e. they sit off the recurrent dependency chain -> hoist out of loop.
    x = x_ref[...]                                              # (B, seq_len)
    xin = [x[:, t:t + 1] * wih0 + b0 for t in range(seq_len)]   # each (B, 4*hp)

    h = jnp.zeros((B, hp), jnp.float32)   # padded lanes stay exactly 0 (zero-padded weights)
    c = jnp.zeros((B, hp), jnp.float32)
    h_steps = []

    # Sequence phase (fully unrolled; seq_len is a small static int).
    for t in range(seq_len):
        gates = xin[t] + jnp.dot(h, whh0, preferred_element_type=jnp.float32)
        h, c = gates_to_hc(gates, c)
        h, c = upper_layers(h, c)
        h_steps.append(h)

    # Future-feedback phase: the previous-step Linear output and input broadcast are folded
    # into w0fut/b0fut (exact algebra), so each step is just one matmul + gates per layer.
    for _ in range(future):
        gates = jnp.dot(h, w0fut, preferred_element_type=jnp.float32) + b0fut
        h, c = gates_to_hc(gates, c)
        h, c = upper_layers(h, c)
        h_steps.append(h)

    # Epilogue: all Ttot Linear outputs in one batched MXU pass + one contiguous store
    # (no dependent per-step matmul, no per-step width-1 masked stores).
    hs = jnp.concatenate(h_steps, axis=1)                       # (B, Ttot*hp), lane-aligned
    out_ref[...] = jnp.dot(hs, wlin_bd, preferred_element_type=jnp.float32) + blin


def preprocess_params(params, seq_len, future):
    """One-time parameter plumbing: transpose, pad gate blocks to 128 lanes, fold the 0.5
    sigmoid pre-scale into i/f/o columns, pre-sum upper-layer w_ih + w_hh, fold the Linear
    feedback into the future-phase layer-0 weights, and build the block-diagonal Linear
    weight for the batched output epilogue. Call once; reuse across forward calls."""
    num_layers = len(params["lstm"])
    H = params["lstm"][0]["w_hh"].shape[1]
    hp = ((H + 127) // 128) * 128
    Ttot = seq_len + future
    gate_scale = (0.5, 0.5, 1.0, 0.5)   # PyTorch gate order: i, f, g, o
    f32 = jnp.float32

    def pad_gate_cols(wT):
        # (rows, 4H) -> (rows, 4*hp): gate g's real columns land at [g*hp, g*hp+H), scaled.
        rows = wT.shape[0]
        out = jnp.zeros((rows, 4 * hp), f32)
        for g in range(4):
            out = out.at[:, g * hp:g * hp + H].set(gate_scale[g] * wT[:, g * H:(g + 1) * H])
        return out

    def pad_rows(w, rows_to):
        return jnp.zeros((rows_to, w.shape[1]), f32).at[: w.shape[0]].set(w)

    lp0 = params["lstm"][0]
    wih0 = pad_gate_cols(jnp.transpose(lp0["w_ih"]).astype(f32))                    # (1, 4hp)
    whh0 = pad_rows(pad_gate_cols(jnp.transpose(lp0["w_hh"]).astype(f32)), hp)      # (hp, 4hp)
    b0 = pad_gate_cols((lp0["b_ih"] + lp0["b_hh"]).reshape(1, -1).astype(f32))      # (1, 4hp)

    wlinT = pad_rows(jnp.transpose(params["linear"]["w"]).astype(f32), hp)          # (hp, 1)
    blin = params["linear"]["b"].reshape(1, 1).astype(f32)                          # (1, 1)

    # Future-phase fold: out = h @ wlinT + blin is both the next input and h the hidden
    # state, so out * wih0 = h @ (wlinT @ wih0) + blin * wih0 folds exactly into layer 0.
    w0fut = whh0 + jnp.dot(wlinT, wih0)                                             # (hp, 4hp)
    b0fut = b0 + blin * wih0                                                        # (1, 4hp)

    upper = []
    for lp in params["lstm"][1:]:
        wc = jnp.transpose(lp["w_ih"] + lp["w_hh"]).astype(f32)                     # (H, 4H)
        upper.append(pad_rows(pad_gate_cols(wc), hp))                               # (hp, 4hp)
        upper.append(pad_gate_cols((lp["b_ih"] + lp["b_hh"]).reshape(1, -1).astype(f32)))

    # Block-diagonal Linear weight: out[:, t] = h_t @ wlin via ONE (B, Ttot*hp) matmul.
    wlin_bd = jnp.zeros((Ttot * hp, Ttot), f32)
    for t in range(Ttot):
        wlin_bd = wlin_bd.at[t * hp:(t + 1) * hp, t:t + 1].set(wlinT)

    meta = (num_layers, seq_len, future, hp)
    args = [wih0, whh0, b0, w0fut, b0fut, *upper, wlin_bd, blin]
    return meta, args


def sequence_forward_preprocessed(x, meta, prepped):
    """Run the kernel with already-preprocessed parameters (the fast path)."""
    num_layers, seq_len, future, hp = meta
    B, T = x.shape
    assert T == seq_len, (T, seq_len)
    Ttot = seq_len + future
    kernel = functools.partial(_lstm_seq_kernel, num_layers, seq_len, future, hp)
    vmem = pl.BlockSpec(memory_space=pltpu.MemorySpace.VMEM)
    return pl.pallas_call(
        kernel,
        out_shape=jax.ShapeDtypeStruct((B, Ttot), jnp.float32),
        in_specs=[vmem] * (1 + len(prepped)),
        out_specs=vmem,
    )(x.astype(jnp.float32), *prepped)


def sequence_forward(x, params, future=0):
    """Pallas-backed equivalent of Sequence.forward(input, future)."""
    meta, prepped = preprocess_params(params, x.shape[1], future)
    return sequence_forward_preprocessed(x, meta, prepped)


def sequence_ref(x, params, future=0):
    """Pure-JAX reference mirroring the PyTorch forward exactly (for validation)."""
    B, _ = x.shape
    H = params["lstm"][0]["w_hh"].shape[1]
    h = jnp.zeros((B, H), jnp.float32)
    c = jnp.zeros((B, H), jnp.float32)

    def cell(x_t, h, c, lp):
        gates = x_t @ lp["w_ih"].T + h @ lp["w_hh"].T + lp["b_ih"] + lp["b_hh"]
        i, f, g, o = jnp.split(gates, 4, axis=1)
        i, f, o = jax.nn.sigmoid(i), jax.nn.sigmoid(f), jax.nn.sigmoid(o)
        g = jnp.tanh(g)
        c_new = f * c + i * g
        return o * jnp.tanh(c_new), c_new

    T = x.shape[1]
    out = jnp.zeros((B, 1), jnp.float32)
    outs = []
    for t in range(T + future):
        x_t = x[:, t:t + 1] if t < T else out
        h, c = cell(x_t, h, c, params["lstm"][0])
        for l in range(1, len(params["lstm"])):
            h, c = cell(h, h, c, params["lstm"][l])
        out = h @ params["linear"]["w"].T + params["linear"]["b"]
        outs.append(out)
    return jnp.concatenate(outs, axis=1)


def init_params(key, num_layers=2, hidden_size=51):
    """Deterministic init matching nn.LSTMCell / nn.Linear shapes (uniform ±1/sqrt(H))."""
    bound = 1.0 / (hidden_size ** 0.5)
    lstm = []
    for i in range(num_layers):
        in_size = 1 if i == 0 else hidden_size
        key, k1, k2, k3, k4 = jax.random.split(key, 5)
        lstm.append({
            "w_ih": jax.random.uniform(k1, (4 * hidden_size, in_size), jnp.float32, -bound, bound),
            "w_hh": jax.random.uniform(k2, (4 * hidden_size, hidden_size), jnp.float32, -bound, bound),
            "b_ih": jax.random.uniform(k3, (4 * hidden_size,), jnp.float32, -bound, bound),
            "b_hh": jax.random.uniform(k4, (4 * hidden_size,), jnp.float32, -bound, bound),
        })
    key, k1, k2 = jax.random.split(key, 3)
    linear = {
        "w": jax.random.uniform(k1, (1, hidden_size), jnp.float32, -bound, bound),
        "b": jax.random.uniform(k2, (1,), jnp.float32, -bound, bound),
    }
    return {"lstm": lstm, "linear": linear}


if __name__ == "__main__":
    B, T, FUTURE, H, L = 2, 8, 4, 51, 2

    key = jax.random.PRNGKey(0)
    key, kx = jax.random.split(key)
    params = init_params(key, num_layers=L, hidden_size=H)
    x = jax.random.normal(kx, (B, T), jnp.float32)

    out = sequence_forward(x, params, future=FUTURE)
    out = jax.block_until_ready(out)

    ref = sequence_ref(x, params, future=FUTURE)
    assert out.shape == (B, T + FUTURE), out.shape
    # Merged upper-layer weights, the future-phase Linear fold and the tanh-based sigmoid
    # are exact algebra vs the reference; the residual is f32 reassociation over 12 steps.
    err = float(jnp.max(jnp.abs(out - ref)))
    assert jnp.allclose(out, ref, atol=5e-4, rtol=5e-4), err
    print("KERNEL_OK")
</pallas_src>

<mosaic_0001>
module attributes {stable_mosaic.version = 11 : i64} {
  func.func @_lstm_seq_kernel(%arg0: memref<2x8xf32, #tpu.memory_space<vmem>>, %arg1: memref<1x512xf32, #tpu.memory_space<vmem>>, %arg2: memref<128x512xf32, #tpu.memory_space<vmem>>, %arg3: memref<1x512xf32, #tpu.memory_space<vmem>>, %arg4: memref<128x512xf32, #tpu.memory_space<vmem>>, %arg5: memref<1x512xf32, #tpu.memory_space<vmem>>, %arg6: memref<128x512xf32, #tpu.memory_space<vmem>>, %arg7: memref<1x512xf32, #tpu.memory_space<vmem>>, %arg8: memref<1536x12xf32, #tpu.memory_space<vmem>>, %arg9: memref<1x1xf32, #tpu.memory_space<vmem>>, %arg10: memref<2x12xf32, #tpu.memory_space<vmem>>) attributes {dimension_semantics = [], scalar_prefetch = 0 : i64, scratch_operands = 0 : i64, tpu.core_type = #tpu.core_type<tc>} {
    %c0 = arith.constant 0 : index
    %c0_0 = arith.constant 0 : index
    %0 = vector.load %arg1[%c0, %c0_0] : memref<1x512xf32, #tpu.memory_space<vmem>>, vector<1x512xf32>
    %c0_1 = arith.constant 0 : index
    %c0_2 = arith.constant 0 : index
    %1 = vector.load %arg2[%c0_1, %c0_2] : memref<128x512xf32, #tpu.memory_space<vmem>>, vector<128x512xf32>
    %c0_3 = arith.constant 0 : index
    %c0_4 = arith.constant 0 : index
    %2 = vector.load %arg3[%c0_3, %c0_4] : memref<1x512xf32, #tpu.memory_space<vmem>>, vector<1x512xf32>
    %c0_5 = arith.constant 0 : index
    %c0_6 = arith.constant 0 : index
    %3 = vector.load %arg4[%c0_5, %c0_6] : memref<128x512xf32, #tpu.memory_space<vmem>>, vector<128x512xf32>
    %c0_7 = arith.constant 0 : index
    %c0_8 = arith.constant 0 : index
    %4 = vector.load %arg5[%c0_7, %c0_8] : memref<1x512xf32, #tpu.memory_space<vmem>>, vector<1x512xf32>
    %c0_9 = arith.constant 0 : index
    %c0_10 = arith.constant 0 : index
    %5 = vector.load %arg6[%c0_9, %c0_10] : memref<128x512xf32, #tpu.memory_space<vmem>>, vector<128x512xf32>
    %c0_11 = arith.constant 0 : index
    %c0_12 = arith.constant 0 : index
    %6 = vector.load %arg7[%c0_11, %c0_12] : memref<1x512xf32, #tpu.memory_space<vmem>>, vector<1x512xf32>
    %c0_13 = arith.constant 0 : index
    %c0_14 = arith.constant 0 : index
    %7 = vector.load %arg8[%c0_13, %c0_14] : memref<1536x12xf32, #tpu.memory_space<vmem>>, vector<1536x12xf32>
    %c0_15 = arith.constant 0 : index
    %c0_16 = arith.constant 0 : index
    %8 = vector.load %arg9[%c0_15, %c0_16] : memref<1x1xf32, #tpu.memory_space<vmem>>, vector<1x1xf32>
    %c0_17 = arith.constant 0 : index
    %c0_18 = arith.constant 0 : index
    %9 = vector.load %arg0[%c0_17, %c0_18] : memref<2x8xf32, #tpu.memory_space<vmem>>, vector<2x8xf32>
    %10 = vector.extract_strided_slice %9 {offsets = [0, 0], sizes = [2, 1], strides = [1, 1]} : vector<2x8xf32> to vector<2x1xf32>
    %11 = vector.broadcast %10 : vector<2x1xf32> to vector<2x512xf32>
    %12 = vector.broadcast %0 : vector<1x512xf32> to vector<2x512xf32>
    %13 = arith.mulf %11, %12 : vector<2x512xf32>
    %14 = vector.broadcast %2 : vector<1x512xf32> to vector<2x512xf32>
    %15 = arith.addf %13, %14 : vector<2x512xf32>
    %16 = vector.extract_strided_slice %9 {offsets = [0, 1], sizes = [2, 1], strides = [1, 1]} : vector<2x8xf32> to vector<2x1xf32>
    %17 = vector.broadcast %16 : vector<2x1xf32> to vector<2x512xf32>
    %18 = vector.broadcast %0 : vector<1x512xf32> to vector<2x512xf32>
    %19 = arith.mulf %17, %18 : vector<2x512xf32>
    %20 = vector.broadcast %2 : vector<1x512xf32> to vector<2x512xf32>
    %21 = arith.addf %19, %20 : vector<2x512xf32>
    %22 = vector.extract_strided_slice %9 {offsets = [0, 2], sizes = [2, 1], strides = [1, 1]} : vector<2x8xf32> to vector<2x1xf32>
    %23 = vector.broadcast %22 : vector<2x1xf32> to vector<2x512xf32>
    %24 = vector.broadcast %0 : vector<1x512xf32> to vector<2x512xf32>
    %25 = arith.mulf %23, %24 : vector<2x512xf32>
    %26 = vector.broadcast %2 : vector<1x512xf32> to vector<2x512xf32>
    %27 = arith.addf %25, %26 : vector<2x512xf32>
    %28 = vector.extract_strided_slice %9 {offsets = [0, 3], sizes = [2, 1], strides = [1, 1]} : vector<2x8xf32> to vector<2x1xf32>
    %29 = vector.broadcast %28 : vector<2x1xf32> to vector<2x512xf32>
    %30 = vector.broadcast %0 : vector<1x512xf32> to vector<2x512xf32>
    %31 = arith.mulf %29, %30 : vector<2x512xf32>
    %32 = vector.broadcast %2 : vector<1x512xf32> to vector<2x512xf32>
    %33 = arith.addf %31, %32 : vector<2x512xf32>
    %34 = vector.extract_strided_slice %9 {offsets = [0, 4], sizes = [2, 1], strides = [1, 1]} : vector<2x8xf32> to vector<2x1xf32>
    %35 = vector.broadcast %34 : vector<2x1xf32> to vector<2x512xf32>
    %36 = vector.broadcast %0 : vector<1x512xf32> to vector<2x512xf32>
    %37 = arith.mulf %35, %36 : vector<2x512xf32>
    %38 = vector.broadcast %2 : vector<1x512xf32> to vector<2x512xf32>
    %39 = arith.addf %37, %38 : vector<2x512xf32>
    %40 = vector.extract_strided_slice %9 {offsets = [0, 5], sizes = [2, 1], strides = [1, 1]} : vector<2x8xf32> to vector<2x1xf32>
    %41 = vector.broadcast %40 : vector<2x1xf32> to vector<2x512xf32>
    %42 = vector.broadcast %0 : vector<1x512xf32> to vector<2x512xf32>
    %43 = arith.mulf %41, %42 : vector<2x512xf32>
    %44 = vector.broadcast %2 : vector<1x512xf32> to vector<2x512xf32>
    %45 = arith.addf %43, %44 : vector<2x512xf32>
    %46 = vector.extract_strided_slice %9 {offsets = [0, 6], sizes = [2, 1], strides = [1, 1]} : vector<2x8xf32> to vector<2x1xf32>
    %47 = vector.broadcast %46 : vector<2x1xf32> to vector<2x512xf32>
    %48 = vector.broadcast %0 : vector<1x512xf32> to vector<2x512xf32>
    %49 = arith.mulf %47, %48 : vector<2x512xf32>
    %50 = vector.broadcast %2 : vector<1x512xf32> to vector<2x512xf32>
    %51 = arith.addf %49, %50 : vector<2x512xf32>
    %52 = vector.extract_strided_slice %9 {offsets = [0, 7], sizes = [2, 1], strides = [1, 1]} : vector<2x8xf32> to vector<2x1xf32>
    %53 = vector.broadcast %52 : vector<2x1xf32> to vector<2x512xf32>
    %54 = vector.broadcast %0 : vector<1x512xf32> to vector<2x512xf32>
    %55 = arith.mulf %53, %54 : vector<2x512xf32>
    %56 = vector.broadcast %2 : vector<1x512xf32> to vector<2x512xf32>
    %57 = arith.addf %55, %56 : vector<2x512xf32>
    %cst = arith.constant 0.000000e+00 : f32
    %58 = vector.broadcast %cst : f32 to vector<2x128xf32>
    %cst_19 = arith.constant 0.000000e+00 : f32
    %59 = vector.broadcast %cst_19 : f32 to vector<2x128xf32>
    %cst_20 = arith.constant dense<0.000000e+00> : vector<2x512xf32>
    %60 = tpu.matmul %58, %1, %cst_20 {dimension_numbers = #tpu.dot_dimension_numbers<[1], [0], [0], [1], [0, 0, 1, 1], [], []>} : vector<2x128xf32>, vector<128x512xf32>, vector<2x512xf32> -> vector<2x512xf32>
    %61 = arith.addf %15, %60 : vector<2x512xf32>
    %62 = math.tanh %61 : vector<2x512xf32>
    %63 = vector.extract_strided_slice %62 {offsets = [0, 0], sizes = [2, 128], strides = [1, 1]} : vector<2x512xf32> to vector<2x128xf32>
    %cst_21 = arith.constant 5.000000e-01 : f32
    %64 = vector.broadcast %cst_21 : f32 to vector<2x128xf32>
    %65 = arith.mulf %64, %63 : vector<2x128xf32>
    %cst_22 = arith.constant 5.000000e-01 : f32
    %66 = vector.broadcast %cst_22 : f32 to vector<2x128xf32>
    %67 = arith.addf %65, %66 : vector<2x128xf32>
    %68 = vector.extract_strided_slice %62 {offsets = [0, 128], sizes = [2, 128], strides = [1, 1]} : vector<2x512xf32> to vector<2x128xf32>
    %cst_23 = arith.constant 5.000000e-01 : f32
    %69 = vector.broadcast %cst_23 : f32 to vector<2x128xf32>
    %70 = arith.mulf %69, %68 : vector<2x128xf32>
    %cst_24 = arith.constant 5.000000e-01 : f32
    %71 = vector.broadcast %cst_24 : f32 to vector<2x128xf32>
    %72 = arith.addf %70, %71 : vector<2x128xf32>
    %73 = vector.extract_strided_slice %62 {offsets = [0, 256], sizes = [2, 128], strides = [1, 1]} : vector<2x512xf32> to vector<2x128xf32>
    %74 = vector.extract_strided_slice %62 {offsets = [0, 384], sizes = [2, 128], strides = [1, 1]} : vector<2x512xf32> to vector<2x128xf32>
    %cst_25 = arith.constant 5.000000e-01 : f32
    %75 = vector.broadcast %cst_25 : f32 to vector<2x128xf32>
    %76 = arith.mulf %75, %74 : vector<2x128xf32>
    %cst_26 = arith.constant 5.000000e-01 : f32
    %77 = vector.broadcast %cst_26 : f32 to vector<2x128xf32>
    %78 = arith.addf %76, %77 : vector<2x128xf32>
    %79 = arith.mulf %72, %59 : vector<2x128xf32>
    %80 = arith.mulf %67, %73 : vector<2x128xf32>
    %81 = arith.addf %79, %80 : vector<2x128xf32>
    %82 = math.tanh %81 : vector<2x128xf32>
    %83 = arith.mulf %78, %82 : vector<2x128xf32>
    %cst_27 = arith.constant dense<0.000000e+00> : vector<2x512xf32>
    %84 = tpu.matmul %83, %5, %cst_27 {dimension_numbers = #tpu.dot_dimension_numbers<[1], [0], [0], [1], [0, 0, 1, 1], [], []>} : vector<2x128xf32>, vector<128x512xf32>, vector<2x512xf32> -> vector<2x512xf32>
    %85 = vector.broadcast %6 : vector<1x512xf32> to vector<2x512xf32>
    %86 = arith.addf %84, %85 : vector<2x512xf32>
    %87 = math.tanh %86 : vector<2x512xf32>
    %88 = vector.extract_strided_slice %87 {offsets = [0, 0], sizes = [2, 128], strides = [1, 1]} : vector<2x512xf32> to vector<2x128xf32>
    %cst_28 = arith.constant 5.000000e-01 : f32
    %89 = vector.broadcast %cst_28 : f32 to vector<2x128xf32>
    %90 = arith.mulf %89, %88 : vector<2x128xf32>
    %cst_29 = arith.constant 5.000000e-01 : f32
    %91 = vector.broadcast %cst_29 : f32 to vector<2x128xf32>
    %92 = arith.addf %90, %91 : vector<2x128xf32>
    %93 = vector.extract_strided_slice %87 {offsets = [0, 128], sizes = [2, 128], strides = [1, 1]} : vector<2x512xf32> to vector<2x128xf32>
    %cst_30 = arith.constant 5.000000e-01 : f32
    %94 = vector.broadcast %cst_30 : f32 to vector<2x128xf32>
    %95 = arith.mulf %94, %93 : vector<2x128xf32>
    %cst_31 = arith.constant 5.000000e-01 : f32
    %96 = vector.broadcast %cst_31 : f32 to vector<2x128xf32>
    %97 = arith.addf %95, %96 : vector<2x128xf32>
    %98 = vector.extract_strided_slice %87 {offsets = [0, 256], sizes = [2, 128], strides = [1, 1]} : vector<2x512xf32> to vector<2x128xf32>
    %99 = vector.extract_strided_slice %87 {offsets = [0, 384], sizes = [2, 128], strides = [1, 1]} : vector<2x512xf32> to vector<2x128xf32>
    %cst_32 = arith.constant 5.000000e-01 : f32
    %100 = vector.broadcast %cst_32 : f32 to vector<2x128xf32>
    %101 = arith.mulf %100, %99 : vector<2x128xf32>
    %cst_33 = arith.constant 5.000000e-01 : f32
    %102 = vector.broadcast %cst_33 : f32 to vector<2x128xf32>
    %103 = arith.addf %101, %102 : vector<2x128xf32>
    %104 = arith.mulf %97, %81 : vector<2x128xf32>
    %105 = arith.mulf %92, %98 : vector<2x128xf32>
    %106 = arith.addf %104, %105 : vector<2x128xf32>
    %107 = math.tanh %106 : vector<2x128xf32>
    %108 = arith.mulf %103, %107 : vector<2x128xf32>
    %cst_34 = arith.constant dense<0.000000e+00> : vector<2x512xf32>
    %109 = tpu.matmul %108, %1, %cst_34 {dimension_numbers = #tpu.dot_dimension_numbers<[1], [0], [0], [1], [0, 0, 1, 1], [], []>} : vector<2x128xf32>, vector<128x512xf32>, vector<2x512xf32> -> vector<2x512xf32>
    %110 = arith.addf %21, %109 : vector<2x512xf32>
    %111 = math.tanh %110 : vector<2x512xf32>
    %112 = vector.extract_strided_slice %111 {offsets = [0, 0], sizes = [2, 128], strides = [1, 1]} : vector<2x512xf32> to vector<2x128xf32>
    %cst_35 = arith.constant 5.000000e-01 : f32
    %113 = vector.broadcast %cst_35 : f32 to vector<2x128xf32>
    %114 = arith.mulf %113, %112 : vector<2x128xf32>
    %cst_36 = arith.constant 5.000000e-01 : f32
    %115 = vector.broadcast %cst_36 : f32 to vector<2x128xf32>
    %116 = arith.addf %114, %115 : vector<2x128xf32>
    %117 = vector.extract_strided_slice %111 {offsets = [0, 128], sizes = [2, 128], strides = [1, 1]} : vector<2x512xf32> to vector<2x128xf32>
    %cst_37 = arith.constant 5.000000e-01 : f32
    %118 = vector.broadcast %cst_37 : f32 to vector<2x128xf32>
    %119 = arith.mulf %118, %117 : vector<2x128xf32>
    %cst_38 = arith.constant 5.000000e-01 : f32
    %120 = vector.broadcast %cst_38 : f32 to vector<2x128xf32>
    %121 = arith.addf %119, %120 : vector<2x128xf32>
    %122 = vector.extract_strided_slice %111 {offsets = [0, 256], sizes = [2, 128], strides = [1, 1]} : vector<2x512xf32> to vector<2x128xf32>
    %123 = vector.extract_strided_slice %111 {offsets = [0, 384], sizes = [2, 128], strides = [1, 1]} : vector<2x512xf32> to vector<2x128xf32>
    %cst_39 = arith.constant 5.000000e-01 : f32
    %124 = vector.broadcast %cst_39 : f32 to vector<2x128xf32>
    %125 = arith.mulf %124, %123 : vector<2x128xf32>
    %cst_40 = arith.constant 5.000000e-01 : f32
    %126 = vector.broadcast %cst_40 : f32 to vector<2x128xf32>
    %127 = arith.addf %125, %126 : vector<2x128xf32>
    %128 = arith.mulf %121, %106 : vector<2x128xf32>
    %129 = arith.mulf %116, %122 : vector<2x128xf32>
    %130 = arith.addf %128, %129 : vector<2x128xf32>
    %131 = math.tanh %130 : vector<2x128xf32>
    %132 = arith.mulf %127, %131 : vector<2x128xf32>
    %cst_41 = arith.constant dense<0.000000e+00> : vector<2x512xf32>
    %133 = tpu.matmul %132, %5, %cst_41 {dimension_numbers = #tpu.dot_dimension_numbers<[1], [0], [0], [1], [0, 0, 1, 1], [], []>} : vector<2x128xf32>, vector<128x512xf32>, vector<2x512xf32> -> vector<2x512xf32>
    %134 = vector.broadcast %6 : vector<1x512xf32> to vector<2x512xf32>
    %135 = arith.addf %133, %134 : vector<2x512xf32>
    %136 = math.tanh %135 : vector<2x512xf32>
    %137 = vector.extract_strided_slice %136 {offsets = [0, 0], sizes = [2, 128], strides = [1, 1]} : vector<2x512xf32> to vector<2x128xf32>
    %cst_42 = arith.constant 5.000000e-01 : f32
    %138 = vector.broadcast %cst_42 : f32 to vector<2x128xf32>
    %139 = arith.mulf %138, %137 : vector<2x128xf32>
    %cst_43 = arith.constant 5.000000e-01 : f32
    %140 = vector.broadcast %cst_43 : f32 to vector<2x128xf32>
    %141 = arith.addf %139, %140 : vector<2x128xf32>
    %142 = vector.extract_strided_slice %136 {offsets = [0, 128], sizes = [2, 128], strides = [1, 1]} : vector<2x512xf32> to vector<2x128xf32>
    %cst_44 = arith.constant 5.000000e-01 : f32
    %143 = vector.broadcast %cst_44 : f32 to vector<2x128xf32>
    %144 = arith.mulf %143, %142 : vector<2x128xf32>
    %cst_45 = arith.constant 5.000000e-01 : f32
    %145 = vector.broadcast %cst_45 : f32 to vector<2x128xf32>
    %146 = arith.addf %144, %145 : vector<2x128xf32>
    %147 = vector.extract_strided_slice %136 {offsets = [0, 256], sizes = [2, 128], strides = [1, 1]} : vector<2x512xf32> to vector<2x128xf32>
    %148 = vector.extract_strided_slice %136 {offsets = [0, 384], sizes = [2, 128], strides = [1, 1]} : vector<2x512xf32> to vector<2x128xf32>
    %cst_46 = arith.constant 5.000000e-01 : f32
    %149 = vector.broadcast %cst_46 : f32 to vector<2x128xf32>
    %150 = arith.mulf %149, %148 : vector<2x128xf32>
    %cst_47 = arith.constant 5.000000e-01 : f32
    %151 = vector.broadcast %cst_47 : f32 to vector<2x128xf32>
    %152 = arith.addf %150, %151 : vector<2x128xf32>
    %153 = arith.mulf %146, %130 : vector<2x128xf32>
    %154 = arith.mulf %141, %147 : vector<2x128xf32>
    %155 = arith.addf %153, %154 : vector<2x128xf32>
    %156 = math.tanh %155 : vector<2x128xf32>
    %157 = arith.mulf %152, %156 : vector<2x128xf32>
    %cst_48 = arith.constant dense<0.000000e+00> : vector<2x512xf32>
    %158 = tpu.matmul %157, %1, %cst_48 {dimension_numbers = #tpu.dot_dimension_numbers<[1], [0], [0], [1], [0, 0, 1, 1], [], []>} : vector<2x128xf32>, vector<128x512xf32>, vector<2x512xf32> -> vector<2x512xf32>
    %159 = arith.addf %27, %158 : vector<2x512xf32>
    %160 = math.tanh %159 : vector<2x512xf32>
    %161 = vector.extract_strided_slice %160 {offsets = [0, 0], sizes = [2, 128], strides = [1, 1]} : vector<2x512xf32> to vector<2x128xf32>
    %cst_49 = arith.constant 5.000000e-01 : f32
    %162 = vector.broadcast %cst_49 : f32 to vector<2x128xf32>
    %163 = arith.mulf %162, %161 : vector<2x128xf32>
    %cst_50 = arith.constant 5.000000e-01 : f32
    %164 = vector.broadcast %cst_50 : f32 to vector<2x128xf32>
    %165 = arith.addf %163, %164 : vector<2x128xf32>
    %166 = vector.extract_strided_slice %160 {offsets = [0, 128], sizes = [2, 128], strides = [1, 1]} : vector<2x512xf32> to vector<2x128xf32>
    %cst_51 = arith.constant 5.000000e-01 : f32
    %167 = vector.broadcast %cst_51 : f32 to vector<2x128xf32>
    %168 = arith.mulf %167, %166 : vector<2x128xf32>
    %cst_52 = arith.constant 5.000000e-01 : f32
    %169 = vector.broadcast %cst_52 : f32 to vector<2x128xf32>
    %170 = arith.addf %168, %169 : vector<2x128xf32>
    %171 = vector.extract_strided_slice %160 {offsets = [0, 256], sizes = [2, 128], strides = [1, 1]} : vector<2x512xf32> to vector<2x128xf32>
    %172 = vector.extract_strided_slice %160 {offsets = [0, 384], sizes = [2, 128], strides = [1, 1]} : vector<2x512xf32> to vector<2x128xf32>
    %cst_53 = arith.constant 5.000000e-01 : f32
    %173 = vector.broadcast %cst_53 : f32 to vector<2x128xf32>
    %174 = arith.mulf %173, %172 : vector<2x128xf32>
    %cst_54 = arith.constant 5.000000e-01 : f32
    %175 = vector.broadcast %cst_54 : f32 to vector<2x128xf32>
    %176 = arith.addf %174, %175 : vector<2x128xf32>
    %177 = arith.mulf %170, %155 : vector<2x128xf32>
    %178 = arith.mulf %165, %171 : vector<2x128xf32>
    %179 = arith.addf %177, %178 : vector<2x128xf32>
    %180 = math.tanh %179 : vector<2x128xf32>
    %181 = arith.mulf %176, %180 : vector<2x128xf32>
    %cst_55 = arith.constant dense<0.000000e+00> : vector<2x512xf32>
    %182 = tpu.matmul %181, %5, %cst_55 {dimension_numbers = #tpu.dot_dimension_numbers<[1], [0], [0], [1], [0, 0, 1, 1], [], []>} : vector<2x128xf32>, vector<128x512xf32>, vector<2x512xf32> -> vector<2x512xf32>
    %183 = vector.broadcast %6 : vector<1x512xf32> to vector<2x512xf32>
    %184 = arith.addf %182, %183 : vector<2x512xf32>
    %185 = math.tanh %184 : vector<2x512xf32>
    %186 = vector.extract_strided_slice %185 {offsets = [0, 0], sizes = [2, 128], strides = [1, 1]} : vector<2x512xf32> to vector<2x128xf32>
    %cst_56 = arith.constant 5.000000e-01 : f32
    %187 = vector.broadcast %cst_56 : f32 to vector<2x128xf32>
    %188 = arith.mulf %187, %186 : vector<2x128xf32>
    %cst_57 = arith.constant 5.000000e-01 : f32
    %189 = vector.broadcast %cst_57 : f32 to vector<2x128xf32>
    %190 = arith.addf %188, %189 : vector<2x128xf32>
    %191 = vector.extract_strided_slice %185 {offsets = [0, 128], sizes = [2, 128], strides = [1, 1]} : vector<2x512xf32> to vector<2x128xf32>
    %cst_58 = arith.constant 5.000000e-01 : f32
    %192 = vector.broadcast %cst_58 : f32 to vector<2x128xf32>
    %193 = arith.mulf %192, %191 : vector<2x128xf32>
    %cst_59 = arith.constant 5.000000e-01 : f32
    %194 = vector.broadcast %cst_59 : f32 to vector<2x128xf32>
    %195 = arith.addf %193, %194 : vector<2x128xf32>
    %196 = vector.extract_strided_slice %185 {offsets = [0, 256], sizes = [2, 128], strides = [1, 1]} : vector<2x512xf32> to vector<2x128xf32>
    %197 = vector.extract_strided_slice %185 {offsets = [0, 384], sizes = [2, 128], strides = [1, 1]} : vector<2x512xf32> to vector<2x128xf32>
    %cst_60 = arith.constant 5.000000e-01 : f32
    %198 = vector.broadcast %cst_60 : f32 to vector<2x128xf32>
    %199 = arith.mulf %198, %197 : vector<2x128xf32>
    %cst_61 = arith.constant 5.000000e-01 : f32
    %200 = vector.broadcast %cst_61 : f32 to vector<2x128xf32>
    %201 = arith.addf %199, %200 : vector<2x128xf32>
    %202 = arith.mulf %195, %179 : vector<2x128xf32>
    %203 = arith.mulf %190, %196 : vector<2x128xf32>
    %204 = arith.addf %202, %203 : vector<2x128xf32>
    %205 = math.tanh %204 : vector<2x128xf32>
    %206 = arith.mulf %201, %205 : vector<2x128xf32>
    %cst_62 = arith.constant dense<0.000000e+00> : vector<2x512xf32>
    %207 = tpu.matmul %206, %1, %cst_62 {dimension_numbers = #tpu.dot_dimension_numbers<[1], [0], [0], [1], [0, 0, 1, 1], [], []>} : vector<2x128xf32>, vector<128x512xf32>, vector<2x512xf32> -> vector<2x512xf32>
    %208 = arith.addf %33, %207 : vector<2x512xf32>
    %209 = math.tanh %208 : vector<2x512xf32>
    %210 = vector.extract_strided_slice %209 {offsets = [0, 0], sizes = [2, 128], strides = [1, 1]} : vector<2x512xf32> to vector<2x128xf32>
    %cst_63 = arith.constant 5.000000e-01 : f32
    %211 = vector.broadcast %cst_63 : f32 to vector<2x128xf32>
    %212 = arith.mulf %211, %210 : vector<2x128xf32>
    %cst_64 = arith.constant 5.000000e-01 : f32
    %213 = vector.broadcast %cst_64 : f32 to vector<2x128xf32>
    %214 = arith.addf %212, %213 : vector<2x128xf32>
    %215 = vector.extract_strided_slice %209 {offsets = [0, 128], sizes = [2, 128], strides = [1, 1]} : vector<2x512xf32> to vector<2x128xf32>
    %cst_65 = arith.constant 5.000000e-01 : f32
    %216 = vector.broadcast %cst_65 : f32 to vector<2x128xf32>
    %217 = arith.mulf %216, %215 : vector<2x128xf32>
    %cst_66 = arith.constant 5.000000e-01 : f32
    %218 = vector.broadcast %cst_66 : f32 to vector<2x128xf32>
    %219 = arith.addf %217, %218 : vector<2x128xf32>
    %220 = vector.extract_strided_slice %209 {offsets = [0, 256], sizes = [2, 128], strides = [1, 1]} : vector<2x512xf32> to vector<2x128xf32>
    %221 = vector.extract_strided_slice %209 {offsets = [0, 384], sizes = [2, 128], strides = [1, 1]} : vector<2x512xf32> to vector<2x128xf32>
    %cst_67 = arith.constant 5.000000e-01 : f32
    %222 = vector.broadcast %cst_67 : f32 to vector<2x128xf32>
    %223 = arith.mulf %222, %221 : vector<2x128xf32>
    %cst_68 = arith.constant 5.000000e-01 : f32
    %224 = vector.broadcast %cst_68 : f32 to vector<2x128xf32>
    %225 = arith.addf %223, %224 : vector<2x128xf32>
    %226 = arith.mulf %219, %204 : vector<2x128xf32>
    %227 = arith.mulf %214, %220 : vector<2x128xf32>
    %228 = arith.addf %226, %227 : vector<2x128xf32>
    %229 = math.tanh %228 : vector<2x128xf32>
    %230 = arith.mulf %225, %229 : vector<2x128xf32>
    %cst_69 = arith.constant dense<0.000000e+00> : vector<2x512xf32>
    %231 = tpu.matmul %230, %5, %cst_69 {dimension_numbers = #tpu.dot_dimension_numbers<[1], [0], [0], [1], [0, 0, 1, 1], [], []>} : vector<2x128xf32>, vector<128x512xf32>, vector<2x512xf32> -> vector<2x512xf32>
    %232 = vector.broadcast %6 : vector<1x512xf32> to vector<2x512xf32>
    %233 = arith.addf %231, %232 : vector<2x512xf32>
    %234 = math.tanh %233 : vector<2x512xf32>
    %235 = vector.extract_strided_slice %234 {offsets = [0, 0], sizes = [2, 128], strides = [1, 1]} : vector<2x512xf32> to vector<2x128xf32>
    %cst_70 = arith.constant 5.000000e-01 : f32
    %236 = vector.broadcast %cst_70 : f32 to vector<2x128xf32>
    %237 = arith.mulf %236, %235 : vector<2x128xf32>
    %cst_71 = arith.constant 5.000000e-01 : f32
    %238 = vector.broadcast %cst_71 : f32 to vector<2x128xf32>
    %239 = arith.addf %237, %238 : vector<2x128xf32>
    %240 = vector.extract_strided_slice %234 {offsets = [0, 128], sizes = [2, 128], strides = [1, 1]} : vector<2x512xf32> to vector<2x128xf32>
    %cst_72 = arith.constant 5.000000e-01 : f32
    %241 = vector.broadcast %cst_72 : f32 to vector<2x128xf32>
    %242 = arith.mulf %241, %240 : vector<2x128xf32>
    %cst_73 = arith.constant 5.000000e-01 : f32
    %243 = vector.broadcast %cst_73 : f32 to vector<2x128xf32>
    %244 = arith.addf %242, %243 : vector<2x128xf32>
    %245 = vector.extract_strided_slice %234 {offsets = [0, 256], sizes = [2, 128], strides = [1, 1]} : vector<2x512xf32> to vector<2x128xf32>
    %246 = vector.extract_strided_slice %234 {offsets = [0, 384], sizes = [2, 128], strides = [1, 1]} : vector<2x512xf32> to vector<2x128xf32>
    %cst_74 = arith.constant 5.000000e-01 : f32
    %247 = vector.broadcast %cst_74 : f32 to vector<2x128xf32>
    %248 = arith.mulf %247, %246 : vector<2x128xf32>
    %cst_75 = arith.constant 5.000000e-01 : f32
    %249 = vector.broadcast %cst_75 : f32 to vector<2x128xf32>
    %250 = arith.addf %248, %249 : vector<2x128xf32>
    %251 = arith.mulf %244, %228 : vector<2x128xf32>
    %252 = arith.mulf %239, %245 : vector<2x128xf32>
    %253 = arith.addf %251, %252 : vector<2x128xf32>
    %254 = math.tanh %253 : vector<2x128xf32>
    %255 = arith.mulf %250, %254 : vector<2x128xf32>
    %cst_76 = arith.constant dense<0.000000e+00> : vector<2x512xf32>
    %256 = tpu.matmul %255, %1, %cst_76 {dimension_numbers = #tpu.dot_dimension_numbers<[1], [0], [0], [1], [0, 0, 1, 1], [], []>} : vector<2x128xf32>, vector<128x512xf32>, vector<2x512xf32> -> vector<2x512xf32>
    %257 = arith.addf %39, %256 : vector<2x512xf32>
    %258 = math.tanh %257 : vector<2x512xf32>
    %259 = vector.extract_strided_slice %258 {offsets = [0, 0], sizes = [2, 128], strides = [1, 1]} : vector<2x512xf32> to vector<2x128xf32>
    %cst_77 = arith.constant 5.000000e-01 : f32
    %260 = vector.broadcast %cst_77 : f32 to vector<2x128xf32>
    %261 = arith.mulf %260, %259 : vector<2x128xf32>
    %cst_78 = arith.constant 5.000000e-01 : f32
    %262 = vector.broadcast %cst_78 : f32 to vector<2x128xf32>
    %263 = arith.addf %261, %262 : vector<2x128xf32>
    %264 = vector.extract_strided_slice %258 {offsets = [0, 128], sizes = [2, 128], strides = [1, 1]} : vector<2x512xf32> to vector<2x128xf32>
    %cst_79 = arith.constant 5.000000e-01 : f32
    %265 = vector.broadcast %cst_79 : f32 to vector<2x128xf32>
    %266 = arith.mulf %265, %264 : vector<2x128xf32>
    %cst_80 = arith.constant 5.000000e-01 : f32
    %267 = vector.broadcast %cst_80 : f32 to vector<2x128xf32>
    %268 = arith.addf %266, %267 : vector<2x128xf32>
    %269 = vector.extract_strided_slice %258 {offsets = [0, 256], sizes = [2, 128], strides = [1, 1]} : vector<2x512xf32> to vector<2x128xf32>
    %270 = vector.extract_strided_slice %258 {offsets = [0, 384], sizes = [2, 128], strides = [1, 1]} : vector<2x512xf32> to vector<2x128xf32>
    %cst_81 = arith.constant 5.000000e-01 : f32
    %271 = vector.broadcast %cst_81 : f32 to vector<2x128xf32>
    %272 = arith.mulf %271, %270 : vector<2x128xf32>
    %cst_82 = arith.constant 5.000000e-01 : f32
    %273 = vector.broadcast %cst_82 : f32 to vector<2x128xf32>
    %274 = arith.addf %272, %273 : vector<2x128xf32>
    %275 = arith.mulf %268, %253 : vector<2x128xf32>
    %276 = arith.mulf %263, %269 : vector<2x128xf32>
    %277 = arith.addf %275, %276 : vector<2x128xf32>
    %278 = math.tanh %277 : vector<2x128xf32>
    %279 = arith.mulf %274, %278 : vector<2x128xf32>
    %cst_83 = arith.constant dense<0.000000e+00> : vector<2x512xf32>
    %280 = tpu.matmul %279, %5, %cst_83 {dimension_numbers = #tpu.dot_dimension_numbers<[1], [0], [0], [1], [0, 0, 1, 1], [], []>} : vector<2x128xf32>, vector<128x512xf32>, vector<2x512xf32> -> vector<2x512xf32>
    %281 = vector.broadcast %6 : vector<1x512xf32> to vector<2x512xf32>
    %282 = arith.addf %280, %281 : vector<2x512xf32>
    %283 = math.tanh %282 : vector<2x512xf32>
    %284 = vector.extract_strided_slice %283 {offsets = [0, 0], sizes = [2, 128], strides = [1, 1]} : vector<2x512xf32> to vector<2x128xf32>
    %cst_84 = arith.constant 5.000000e-01 : f32
    %285 = vector.broadcast %cst_84 : f32 to vector<2x128xf32>
    %286 = arith.mulf %285, %284 : vector<2x128xf32>
    %cst_85 = arith.constant 5.000000e-01 : f32
    %287 = vector.broadcast %cst_85 : f32 to vector<2x128xf32>
    %288 = arith.addf %286, %287 : vector<2x128xf32>
    %289 = vector.extract_strided_slice %283 {offsets = [0, 128], sizes = [2, 128], strides = [1, 1]} : vector<2x512xf32> to vector<2x128xf32>
    %cst_86 = arith.constant 5.000000e-01 : f32
    %290 = vector.broadcast %cst_86 : f32 to vector<2x128xf32>
    %291 = arith.mulf %290, %289 : vector<2x128xf32>
    %cst_87 = arith.constant 5.000000e-01 : f32
    %292 = vector.broadcast %cst_87 : f32 to vector<2x128xf32>
    %293 = arith.addf %291, %292 : vector<2x128xf32>
    %294 = vector.extract_strided_slice %283 {offsets = [0, 256], sizes = [2, 128], strides = [1, 1]} : vector<2x512xf32> to vector<2x128xf32>
    %295 = vector.extract_strided_slice %283 {offsets = [0, 384], sizes = [2, 128], strides = [1, 1]} : vector<2x512xf32> to vector<2x128xf32>
    %cst_88 = arith.constant 5.000000e-01 : f32
    %296 = vector.broadcast %cst_88 : f32 to vector<2x128xf32>
    %297 = arith.mulf %296, %295 : vector<2x128xf32>
    %cst_89 = arith.constant 5.000000e-01 : f32
    %298 = vector.broadcast %cst_89 : f32 to vector<2x128xf32>
    %299 = arith.addf %297, %298 : vector<2x128xf32>
    %300 = arith.mulf %293, %277 : vector<2x128xf32>
    %301 = arith.mulf %288, %294 : vector<2x128xf32>
    %302 = arith.addf %300, %301 : vector<2x128xf32>
    %303 = math.tanh %302 : vector<2x128xf32>
    %304 = arith.mulf %299, %303 : vector<2x128xf32>
    %cst_90 = arith.constant dense<0.000000e+00> : vector<2x512xf32>
    %305 = tpu.matmul %304, %1, %cst_90 {dimension_numbers = #tpu.dot_dimension_numbers<[1], [0], [0], [1], [0, 0, 1, 1], [], []>} : vector<2x128xf32>, vector<128x512xf32>, vector<2x512xf32> -> vector<2x512xf32>
    %306 = arith.addf %45, %305 : vector<2x512xf32>
    %307 = math.tanh %306 : vector<2x512xf32>
    %308 = vector.extract_strided_slice %307 {offsets = [0, 0], sizes = [2, 128], strides = [1, 1]} : vector<2x512xf32> to vector<2x128xf32>
    %cst_91 = arith.constant 5.000000e-01 : f32
    %309 = vector.broadcast %cst_91 : f32 to vector<2x128xf32>
    %310 = arith.mulf %309, %308 : vector<2x128xf32>
    %cst_92 = arith.constant 5.000000e-01 : f32
    %311 = vector.broadcast %cst_92 : f32 to vector<2x128xf32>
    %312 = arith.addf %310, %311 : vector<2x128xf32>
    %313 = vector.extract_strided_slice %307 {offsets = [0, 128], sizes = [2, 128], strides = [1, 1]} : vector<2x512xf32> to vector<2x128xf32>
    %cst_93 = arith.constant 5.000000e-01 : f32
    %314 = vector.broadcast %cst_93 : f32 to vector<2x128xf32>
    %315 = arith.mulf %314, %313 : vector<2x128xf32>
    %cst_94 = arith.constant 5.000000e-01 : f32
    %316 = vector.broadcast %cst_94 : f32 to vector<2x128xf32>
    %317 = arith.addf %315, %316 : vector<2x128xf32>
    %318 = vector.extract_strided_slice %307 {offsets = [0, 256], sizes = [2, 128], strides = [1, 1]} : vector<2x512xf32> to vector<2x128xf32>
    %319 = vector.extract_strided_slice %307 {offsets = [0, 384], sizes = [2, 128], strides = [1, 1]} : vector<2x512xf32> to vector<2x128xf32>
    %cst_95 = arith.constant 5.000000e-01 : f32
    %320 = vector.broadcast %cst_95 : f32 to vector<2x128xf32>
    %321 = arith.mulf %320, %319 : vector<2x128xf32>
    %cst_96 = arith.constant 5.000000e-01 : f32
    %322 = vector.broadcast %cst_96 : f32 to vector<2x128xf32>
    %323 = arith.addf %321, %322 : vector<2x128xf32>
    %324 = arith.mulf %317, %302 : vector<2x128xf32>
    %325 = arith.mulf %312, %318 : vector<2x128xf32>
    %326 = arith.addf %324, %325 : vector<2x128xf32>
    %327 = math.tanh %326 : vector<2x128xf32>
    %328 = arith.mulf %323, %327 : vector<2x128xf32>
    %cst_97 = arith.constant dense<0.000000e+00> : vector<2x512xf32>
    %329 = tpu.matmul %328, %5, %cst_97 {dimension_numbers = #tpu.dot_dimension_numbers<[1], [0], [0], [1], [0, 0, 1, 1], [], []>} : vector<2x128xf32>, vector<128x512xf32>, vector<2x512xf32> -> vector<2x512xf32>
    %330 = vector.broadcast %6 : vector<1x512xf32> to vector<2x512xf32>
    %331 = arith.addf %329, %330 : vector<2x512xf32>
    %332 = math.tanh %331 : vector<2x512xf32>
    %333 = vector.extract_strided_slice %332 {offsets = [0, 0], sizes = [2, 128], strides = [1, 1]} : vector<2x512xf32> to vector<2x128xf32>
    %cst_98 = arith.constant 5.000000e-01 : f32
    %334 = vector.broadcast %cst_98 : f32 to vector<2x128xf32>
    %335 = arith.mulf %334, %333 : vector<2x128xf32>
    %cst_99 = arith.constant 5.000000e-01 : f32
    %336 = vector.broadcast %cst_99 : f32 to vector<2x128xf32>
    %337 = arith.addf %335, %336 : vector<2x128xf32>
    %338 = vector.extract_strided_slice %332 {offsets = [0, 128], sizes = [2, 128], strides = [1, 1]} : vector<2x512xf32> to vector<2x128xf32>
    %cst_100 = arith.constant 5.000000e-01 : f32
    %339 = vector.broadcast %cst_100 : f32 to vector<2x128xf32>
    %340 = arith.mulf %339, %338 : vector<2x128xf32>
    %cst_101 = arith.constant 5.000000e-01 : f32
    %341 = vector.broadcast %cst_101 : f32 to vector<2x128xf32>
    %342 = arith.addf %340, %341 : vector<2x128xf32>
    %343 = vector.extract_strided_slice %332 {offsets = [0, 256], sizes = [2, 128], strides = [1, 1]} : vector<2x512xf32> to vector<2x128xf32>
    %344 = vector.extract_strided_slice %332 {offsets = [0, 384], sizes = [2, 128], strides = [1, 1]} : vector<2x512xf32> to vector<2x128xf32>
    %cst_102 = arith.constant 5.000000e-01 : f32
    %345 = vector.broadcast %cst_102 : f32 to vector<2x128xf32>
    %346 = arith.mulf %345, %344 : vector<2x128xf32>
    %cst_103 = arith.constant 5.000000e-01 : f32
    %347 = vector.broadcast %cst_103 : f32 to vector<2x128xf32>
    %348 = arith.addf %346, %347 : vector<2x128xf32>
    %349 = arith.mulf %342, %326 : vector<2x128xf32>
    %350 = arith.mulf %337, %343 : vector<2x128xf32>
    %351 = arith.addf %349, %350 : vector<2x128xf32>
    %352 = math.tanh %351 : vector<2x128xf32>
    %353 = arith.mulf %348, %352 : vector<2x128xf32>
    %cst_104 = arith.constant dense<0.000000e+00> : vector<2x512xf32>
    %354 = tpu.matmul %353, %1, %cst_104 {dimension_numbers = #tpu.dot_dimension_numbers<[1], [0], [0], [1], [0, 0, 1, 1], [], []>} : vector<2x128xf32>, vector<128x512xf32>, vector<2x512xf32> -> vector<2x512xf32>
    %355 = arith.addf %51, %354 : vector<2x512xf32>
    %356 = math.tanh %355 : vector<2x512xf32>
    %357 = vector.extract_strided_slice %356 {offsets = [0, 0], sizes = [2, 128], strides = [1, 1]} : vector<2x512xf32> to vector<2x128xf32>
    %cst_105 = arith.constant 5.000000e-01 : f32
    %358 = vector.broadcast %cst_105 : f32 to vector<2x128xf32>
    %359 = arith.mulf %358, %357 : vector<2x128xf32>
    %cst_106 = arith.constant 5.000000e-01 : f32
    %360 = vector.broadcast %cst_106 : f32 to vector<2x128xf32>
    %361 = arith.addf %359, %360 : vector<2x128xf32>
    %362 = vector.extract_strided_slice %356 {offsets = [0, 128], sizes = [2, 128], strides = [1, 1]} : vector<2x512xf32> to vector<2x128xf32>
    %cst_107 = arith.constant 5.000000e-01 : f32
    %363 = vector.broadcast %cst_107 : f32 to vector<2x128xf32>
    %364 = arith.mulf %363, %362 : vector<2x128xf32>
    %cst_108 = arith.constant 5.000000e-01 : f32
    %365 = vector.broadcast %cst_108 : f32 to vector<2x128xf32>
    %366 = arith.addf %364, %365 : vector<2x128xf32>
    %367 = vector.extract_strided_slice %356 {offsets = [0, 256], sizes = [2, 128], strides = [1, 1]} : vector<2x512xf32> to vector<2x128xf32>
    %368 = vector.extract_strided_slice %356 {offsets = [0, 384], sizes = [2, 128], strides = [1, 1]} : vector<2x512xf32> to vector<2x128xf32>
    %cst_109 = arith.constant 5.000000e-01 : f32
    %369 = vector.broadcast %cst_109 : f32 to vector<2x128xf32>
    %370 = arith.mulf %369, %368 : vector<2x128xf32>
    %cst_110 = arith.constant 5.000000e-01 : f32
    %371 = vector.broadcast %cst_110 : f32 to vector<2x128xf32>
    %372 = arith.addf %370, %371 : vector<2x128xf32>
    %373 = arith.mulf %366, %351 : vector<2x128xf32>
    %374 = arith.mulf %361, %367 : vector<2x128xf32>
    %375 = arith.addf %373, %374 : vector<2x128xf32>
    %376 = math.tanh %375 : vector<2x128xf32>
    %377 = arith.mulf %372, %376 : vector<2x128xf32>
    %cst_111 = arith.constant dense<0.000000e+00> : vector<2x512xf32>
    %378 = tpu.matmul %377, %5, %cst_111 {dimension_numbers = #tpu.dot_dimension_numbers<[1], [0], [0], [1], [0, 0, 1, 1], [], []>} : vector<2x128xf32>, vector<128x512xf32>, vector<2x512xf32> -> vector<2x512xf32>
    %379 = vector.broadcast %6 : vector<1x512xf32> to vector<2x512xf32>
    %380 = arith.addf %378, %379 : vector<2x512xf32>
    %381 = math.tanh %380 : vector<2x512xf32>
    %382 = vector.extract_strided_slice %381 {offsets = [0, 0], sizes = [2, 128], strides = [1, 1]} : vector<2x512xf32> to vector<2x128xf32>
    %cst_112 = arith.constant 5.000000e-01 : f32
    %383 = vector.broadcast %cst_112 : f32 to vector<2x128xf32>
    %384 = arith.mulf %383, %382 : vector<2x128xf32>
    %cst_113 = arith.constant 5.000000e-01 : f32
    %385 = vector.broadcast %cst_113 : f32 to vector<2x128xf32>
    %386 = arith.addf %384, %385 : vector<2x128xf32>
    %387 = vector.extract_strided_slice %381 {offsets = [0, 128], sizes = [2, 128], strides = [1, 1]} : vector<2x512xf32> to vector<2x128xf32>
    %cst_114 = arith.constant 5.000000e-01 : f32
    %388 = vector.broadcast %cst_114 : f32 to vector<2x128xf32>
    %389 = arith.mulf %388, %387 : vector<2x128xf32>
    %cst_115 = arith.constant 5.000000e-01 : f32
    %390 = vector.broadcast %cst_115 : f32 to vector<2x128xf32>
    %391 = arith.addf %389, %390 : vector<2x128xf32>
    %392 = vector.extract_strided_slice %381 {offsets = [0, 256], sizes = [2, 128], strides = [1, 1]} : vector<2x512xf32> to vector<2x128xf32>
    %393 = vector.extract_strided_slice %381 {offsets = [0, 384], sizes = [2, 128], strides = [1, 1]} : vector<2x512xf32> to vector<2x128xf32>
    %cst_116 = arith.constant 5.000000e-01 : f32
    %394 = vector.broadcast %cst_116 : f32 to vector<2x128xf32>
    %395 = arith.mulf %394, %393 : vector<2x128xf32>
    %cst_117 = arith.constant 5.000000e-01 : f32
    %396 = vector.broadcast %cst_117 : f32 to vector<2x128xf32>
    %397 = arith.addf %395, %396 : vector<2x128xf32>
    %398 = arith.mulf %391, %375 : vector<2x128xf32>
    %399 = arith.mulf %386, %392 : vector<2x128xf32>
    %400 = arith.addf %398, %399 : vector<2x128xf32>
    %401 = math.tanh %400 : vector<2x128xf32>
    %402 = arith.mulf %397, %401 : vector<2x128xf32>
    %cst_118 = arith.constant dense<0.000000e+00> : vector<2x512xf32>
    %403 = tpu.matmul %402, %1, %cst_118 {dimension_numbers = #tpu.dot_dimension_numbers<[1], [0], [0], [1], [0, 0, 1, 1], [], []>} : vector<2x128xf32>, vector<128x512xf32>, vector<2x512xf32> -> vector<2x512xf32>
    %404 = arith.addf %57, %403 : vector<2x512xf32>
    %405 = math.tanh %404 : vector<2x512xf32>
    %406 = vector.extract_strided_slice %405 {offsets = [0, 0], sizes = [2, 128], strides = [1, 1]} : vector<2x512xf32> to vector<2x128xf32>
    %cst_119 = arith.constant 5.000000e-01 : f32
    %407 = vector.broadcast %cst_119 : f32 to vector<2x128xf32>
    %408 = arith.mulf %407, %406 : vector<2x128xf32>
    %cst_120 = arith.constant 5.000000e-01 : f32
    %409 = vector.broadcast %cst_120 : f32 to vector<2x128xf32>
    %410 = arith.addf %408, %409 : vector<2x128xf32>
    %411 = vector.extract_strided_slice %405 {offsets = [0, 128], sizes = [2, 128], strides = [1, 1]} : vector<2x512xf32> to vector<2x128xf32>
    %cst_121 = arith.constant 5.000000e-01 : f32
    %412 = vector.broadcast %cst_121 : f32 to vector<2x128xf32>
    %413 = arith.mulf %412, %411 : vector<2x128xf32>
    %cst_122 = arith.constant 5.000000e-01 : f32
    %414 = vector.broadcast %cst_122 : f32 to vector<2x128xf32>
    %415 = arith.addf %413, %414 : vector<2x128xf32>
    %416 = vector.extract_strided_slice %405 {offsets = [0, 256], sizes = [2, 128], strides = [1, 1]} : vector<2x512xf32> to vector<2x128xf32>
    %417 = vector.extract_strided_slice %405 {offsets = [0, 384], sizes = [2, 128], strides = [1, 1]} : vector<2x512xf32> to vector<2x128xf32>
    %cst_123 = arith.constant 5.000000e-01 : f32
    %418 = vector.broadcast %cst_123 : f32 to vector<2x128xf32>
    %419 = arith.mulf %418, %417 : vector<2x128xf32>
    %cst_124 = arith.constant 5.000000e-01 : f32
    %420 = vector.broadcast %cst_124 : f32 to vector<2x128xf32>
    %421 = arith.addf %419, %420 : vector<2x128xf32>
    %422 = arith.mulf %415, %400 : vector<2x128xf32>
    %423 = arith.mulf %410, %416 : vector<2x128xf32>
    %424 = arith.addf %422, %423 : vector<2x128xf32>
    %425 = math.tanh %424 : vector<2x128xf32>
    %426 = arith.mulf %421, %425 : vector<2x128xf32>
    %cst_125 = arith.constant dense<0.000000e+00> : vector<2x512xf32>
    %427 = tpu.matmul %426, %5, %cst_125 {dimension_numbers = #tpu.dot_dimension_numbers<[1], [0], [0], [1], [0, 0, 1, 1], [], []>} : vector<2x128xf32>, vector<128x512xf32>, vector<2x512xf32> -> vector<2x512xf32>
    %428 = vector.broadcast %6 : vector<1x512xf32> to vector<2x512xf32>
    %429 = arith.addf %427, %428 : vector<2x512xf32>
    %430 = math.tanh %429 : vector<2x512xf32>
    %431 = vector.extract_strided_slice %430 {offsets = [0, 0], sizes = [2, 128], strides = [1, 1]} : vector<2x512xf32> to vector<2x128xf32>
    %cst_126 = arith.constant 5.000000e-01 : f32
    %432 = vector.broadcast %cst_126 : f32 to vector<2x128xf32>
    %433 = arith.mulf %432, %431 : vector<2x128xf32>
    %cst_127 = arith.constant 5.000000e-01 : f32
    %434 = vector.broadcast %cst_127 : f32 to vector<2x128xf32>
    %435 = arith.addf %433, %434 : vector<2x128xf32>
    %436 = vector.extract_strided_slice %430 {offsets = [0, 128], sizes = [2, 128], strides = [1, 1]} : vector<2x512xf32> to vector<2x128xf32>
    %cst_128 = arith.constant 5.000000e-01 : f32
    %437 = vector.broadcast %cst_128 : f32 to vector<2x128xf32>
    %438 = arith.mulf %437, %436 : vector<2x128xf32>
    %cst_129 = arith.constant 5.000000e-01 : f32
    %439 = vector.broadcast %cst_129 : f32 to vector<2x128xf32>
    %440 = arith.addf %438, %439 : vector<2x128xf32>
    %441 = vector.extract_strided_slice %430 {offsets = [0, 256], sizes = [2, 128], strides = [1, 1]} : vector<2x512xf32> to vector<2x128xf32>
    %442 = vector.extract_strided_slice %430 {offsets = [0, 384], sizes = [2, 128], strides = [1, 1]} : vector<2x512xf32> to vector<2x128xf32>
    %cst_130 = arith.constant 5.000000e-01 : f32
    %443 = vector.broadcast %cst_130 : f32 to vector<2x128xf32>
    %444 = arith.mulf %443, %442 : vector<2x128xf32>
    %cst_131 = arith.constant 5.000000e-01 : f32
    %445 = vector.broadcast %cst_131 : f32 to vector<2x128xf32>
    %446 = arith.addf %444, %445 : vector<2x128xf32>
    %447 = arith.mulf %440, %424 : vector<2x128xf32>
    %448 = arith.mulf %435, %441 : vector<2x128xf32>
    %449 = arith.addf %447, %448 : vector<2x128xf32>
    %450 = math.tanh %449 : vector<2x128xf32>
    %451 = arith.mulf %446, %450 : vector<2x128xf32>
    %cst_132 = arith.constant dense<0.000000e+00> : vector<2x512xf32>
    %452 = tpu.matmul %451, %3, %cst_132 {dimension_numbers = #tpu.dot_dimension_numbers<[1], [0], [0], [1], [0, 0, 1, 1], [], []>} : vector<2x128xf32>, vector<128x512xf32>, vector<2x512xf32> -> vector<2x512xf32>
    %453 = vector.broadcast %4 : vector<1x512xf32> to vector<2x512xf32>
    %454 = arith.addf %452, %453 : vector<2x512xf32>
    %455 = math.tanh %454 : vector<2x512xf32>
    %456 = vector.extract_strided_slice %455 {offsets = [0, 0], sizes = [2, 128], strides = [1, 1]} : vector<2x512xf32> to vector<2x128xf32>
    %cst_133 = arith.constant 5.000000e-01 : f32
    %457 = vector.broadcast %cst_133 : f32 to vector<2x128xf32>
    %458 = arith.mulf %457, %456 : vector<2x128xf32>
    %cst_134 = arith.constant 5.000000e-01 : f32
    %459 = vector.broadcast %cst_134 : f32 to vector<2x128xf32>
    %460 = arith.addf %458, %459 : vector<2x128xf32>
    %461 = vector.extract_strided_slice %455 {offsets = [0, 128], sizes = [2, 128], strides = [1, 1]} : vector<2x512xf32> to vector<2x128xf32>
    %cst_135 = arith.constant 5.000000e-01 : f32
    %462 = vector.broadcast %cst_135 : f32 to vector<2x128xf32>
    %463 = arith.mulf %462, %461 : vector<2x128xf32>
    %cst_136 = arith.constant 5.000000e-01 : f32
    %464 = vector.broadcast %cst_136 : f32 to vector<2x128xf32>
    %465 = arith.addf %463, %464 : vector<2x128xf32>
    %466 = vector.extract_strided_slice %455 {offsets = [0, 256], sizes = [2, 128], strides = [1, 1]} : vector<2x512xf32> to vector<2x128xf32>
    %467 = vector.extract_strided_slice %455 {offsets = [0, 384], sizes = [2, 128], strides = [1, 1]} : vector<2x512xf32> to vector<2x128xf32>
    %cst_137 = arith.constant 5.000000e-01 : f32
    %468 = vector.broadcast %cst_137 : f32 to vector<2x128xf32>
    %469 = arith.mulf %468, %467 : vector<2x128xf32>
    %cst_138 = arith.constant 5.000000e-01 : f32
    %470 = vector.broadcast %cst_138 : f32 to vector<2x128xf32>
    %471 = arith.addf %469, %470 : vector<2x128xf32>
    %472 = arith.mulf %465, %449 : vector<2x128xf32>
    %473 = arith.mulf %460, %466 : vector<2x128xf32>
    %474 = arith.addf %472, %473 : vector<2x128xf32>
    %475 = math.tanh %474 : vector<2x128xf32>
    %476 = arith.mulf %471, %475 : vector<2x128xf32>
    %cst_139 = arith.constant dense<0.000000e+00> : vector<2x512xf32>
    %477 = tpu.matmul %476, %5, %cst_139 {dimension_numbers = #tpu.dot_dimension_numbers<[1], [0], [0], [1], [0, 0, 1, 1], [], []>} : vector<2x128xf32>, vector<128x512xf32>, vector<2x512xf32> -> vector<2x512xf32>
    %478 = vector.broadcast %6 : vector<1x512xf32> to vector<2x512xf32>
    %479 = arith.addf %477, %478 : vector<2x512xf32>
    %480 = math.tanh %479 : vector<2x512xf32>
    %481 = vector.extract_strided_slice %480 {offsets = [0, 0], sizes = [2, 128], strides = [1, 1]} : vector<2x512xf32> to vector<2x128xf32>
    %cst_140 = arith.constant 5.000000e-01 : f32
    %482 = vector.broadcast %cst_140 : f32 to vector<2x128xf32>
    %483 = arith.mulf %482, %481 : vector<2x128xf32>
    %cst_141 = arith.constant 5.000000e-01 : f32
    %484 = vector.broadcast %cst_141 : f32 to vector<2x128xf32>
    %485 = arith.addf %483, %484 : vector<2x128xf32>
    %486 = vector.extract_strided_slice %480 {offsets = [0, 128], sizes = [2, 128], strides = [1, 1]} : vector<2x512xf32> to vector<2x128xf32>
    %cst_142 = arith.constant 5.000000e-01 : f32
    %487 = vector.broadcast %cst_142 : f32 to vector<2x128xf32>
    %488 = arith.mulf %487, %486 : vector<2x128xf32>
    %cst_143 = arith.constant 5.000000e-01 : f32
    %489 = vector.broadcast %cst_143 : f32 to vector<2x128xf32>
    %490 = arith.addf %488, %489 : vector<2x128xf32>
    %491 = vector.extract_strided_slice %480 {offsets = [0, 256], sizes = [2, 128], strides = [1, 1]} : vector<2x512xf32> to vector<2x128xf32>
    %492 = vector.extract_strided_slice %480 {offsets = [0, 384], sizes = [2, 128], strides = [1, 1]} : vector<2x512xf32> to vector<2x128xf32>
    %cst_144 = arith.constant 5.000000e-01 : f32
    %493 = vector.broadcast %cst_144 : f32 to vector<2x128xf32>
    %494 = arith.mulf %493, %492 : vector<2x128xf32>
    %cst_145 = arith.constant 5.000000e-01 : f32
    %495 = vector.broadcast %cst_145 : f32 to vector<2x128xf32>
    %496 = arith.addf %494, %495 : vector<2x128xf32>
    %497 = arith.mulf %490, %474 : vector<2x128xf32>
    %498 = arith.mulf %485, %491 : vector<2x128xf32>
    %499 = arith.addf %497, %498 : vector<2x128xf32>
    %500 = math.tanh %499 : vector<2x128xf32>
    %501 = arith.mulf %496, %500 : vector<2x128xf32>
    %cst_146 = arith.constant dense<0.000000e+00> : vector<2x512xf32>
    %502 = tpu.matmul %501, %3, %cst_146 {dimension_numbers = #tpu.dot_dimension_numbers<[1], [0], [0], [1], [0, 0, 1, 1], [], []>} : vector<2x128xf32>, vector<128x512xf32>, vector<2x512xf32> -> vector<2x512xf32>
    %503 = vector.broadcast %4 : vector<1x512xf32> to vector<2x512xf32>
    %504 = arith.addf %502, %503 : vector<2x512xf32>
    %505 = math.tanh %504 : vector<2x512xf32>
    %506 = vector.extract_strided_slice %505 {offsets = [0, 0], sizes = [2, 128], strides = [1, 1]} : vector<2x512xf32> to vector<2x128xf32>
    %cst_147 = arith.constant 5.000000e-01 : f32
    %507 = vector.broadcast %cst_147 : f32 to vector<2x128xf32>
    %508 = arith.mulf %507, %506 : vector<2x128xf32>
    %cst_148 = arith.constant 5.000000e-01 : f32
    %509 = vector.broadcast %cst_148 : f32 to vector<2x128xf32>
    %510 = arith.addf %508, %509 : vector<2x128xf32>
    %511 = vector.extract_strided_slice %505 {offsets = [0, 128], sizes = [2, 128], strides = [1, 1]} : vector<2x512xf32> to vector<2x128xf32>
    %cst_149 = arith.constant 5.000000e-01 : f32
    %512 = vector.broadcast %cst_149 : f32 to vector<2x128xf32>
    %513 = arith.mulf %512, %511 : vector<2x128xf32>
    %cst_150 = arith.constant 5.000000e-01 : f32
    %514 = vector.broadcast %cst_150 : f32 to vector<2x128xf32>
    %515 = arith.addf %513, %514 : vector<2x128xf32>
    %516 = vector.extract_strided_slice %505 {offsets = [0, 256], sizes = [2, 128], strides = [1, 1]} : vector<2x512xf32> to vector<2x128xf32>
    %517 = vector.extract_strided_slice %505 {offsets = [0, 384], sizes = [2, 128], strides = [1, 1]} : vector<2x512xf32> to vector<2x128xf32>
    %cst_151 = arith.constant 5.000000e-01 : f32
    %518 = vector.broadcast %cst_151 : f32 to vector<2x128xf32>
    %519 = arith.mulf %518, %517 : vector<2x128xf32>
    %cst_152 = arith.constant 5.000000e-01 : f32
    %520 = vector.broadcast %cst_152 : f32 to vector<2x128xf32>
    %521 = arith.addf %519, %520 : vector<2x128xf32>
    %522 = arith.mulf %515, %499 : vector<2x128xf32>
    %523 = arith.mulf %510, %516 : vector<2x128xf32>
    %524 = arith.addf %522, %523 : vector<2x128xf32>
    %525 = math.tanh %524 : vector<2x128xf32>
    %526 = arith.mulf %521, %525 : vector<2x128xf32>
    %cst_153 = arith.constant dense<0.000000e+00> : vector<2x512xf32>
    %527 = tpu.matmul %526, %5, %cst_153 {dimension_numbers = #tpu.dot_dimension_numbers<[1], [0], [0], [1], [0, 0, 1, 1], [], []>} : vector<2x128xf32>, vector<128x512xf32>, vector<2x512xf32> -> vector<2x512xf32>
    %528 = vector.broadcast %6 : vector<1x512xf32> to vector<2x512xf32>
    %529 = arith.addf %527, %528 : vector<2x512xf32>
    %530 = math.tanh %529 : vector<2x512xf32>
    %531 = vector.extract_strided_slice %530 {offsets = [0, 0], sizes = [2, 128], strides = [1, 1]} : vector<2x512xf32> to vector<2x128xf32>
    %cst_154 = arith.constant 5.000000e-01 : f32
    %532 = vector.broadcast %cst_154 : f32 to vector<2x128xf32>
    %533 = arith.mulf %532, %531 : vector<2x128xf32>
    %cst_155 = arith.constant 5.000000e-01 : f32
    %534 = vector.broadcast %cst_155 : f32 to vector<2x128xf32>
    %535 = arith.addf %533, %534 : vector<2x128xf32>
    %536 = vector.extract_strided_slice %530 {offsets = [0, 128], sizes = [2, 128], strides = [1, 1]} : vector<2x512xf32> to vector<2x128xf32>
    %cst_156 = arith.constant 5.000000e-01 : f32
    %537 = vector.broadcast %cst_156 : f32 to vector<2x128xf32>
    %538 = arith.mulf %537, %536 : vector<2x128xf32>
    %cst_157 = arith.constant 5.000000e-01 : f32
    %539 = vector.broadcast %cst_157 : f32 to vector<2x128xf32>
    %540 = arith.addf %538, %539 : vector<2x128xf32>
    %541 = vector.extract_strided_slice %530 {offsets = [0, 256], sizes = [2, 128], strides = [1, 1]} : vector<2x512xf32> to vector<2x128xf32>
    %542 = vector.extract_strided_slice %530 {offsets = [0, 384], sizes = [2, 128], strides = [1, 1]} : vector<2x512xf32> to vector<2x128xf32>
    %cst_158 = arith.constant 5.000000e-01 : f32
    %543 = vector.broadcast %cst_158 : f32 to vector<2x128xf32>
    %544 = arith.mulf %543, %542 : vector<2x128xf32>
    %cst_159 = arith.constant 5.000000e-01 : f32
    %545 = vector.broadcast %cst_159 : f32 to vector<2x128xf32>
    %546 = arith.addf %544, %545 : vector<2x128xf32>
    %547 = arith.mulf %540, %524 : vector<2x128xf32>
    %548 = arith.mulf %535, %541 : vector<2x128xf32>
    %549 = arith.addf %547, %548 : vector<2x128xf32>
    %550 = math.tanh %549 : vector<2x128xf32>
    %551 = arith.mulf %546, %550 : vector<2x128xf32>
    %cst_160 = arith.constant dense<0.000000e+00> : vector<2x512xf32>
    %552 = tpu.matmul %551, %3, %cst_160 {dimension_numbers = #tpu.dot_dimension_numbers<[1], [0], [0], [1], [0, 0, 1, 1], [], []>} : vector<2x128xf32>, vector<128x512xf32>, vector<2x512xf32> -> vector<2x512xf32>
    %553 = vector.broadcast %4 : vector<1x512xf32> to vector<2x512xf32>
    %554 = arith.addf %552, %553 : vector<2x512xf32>
    %555 = math.tanh %554 : vector<2x512xf32>
    %556 = vector.extract_strided_slice %555 {offsets = [0, 0], sizes = [2, 128], strides = [1, 1]} : vector<2x512xf32> to vector<2x128xf32>
    %cst_161 = arith.constant 5.000000e-01 : f32
    %557 = vector.broadcast %cst_161 : f32 to vector<2x128xf32>
    %558 = arith.mulf %557, %556 : vector<2x128xf32>
    %cst_162 = arith.constant 5.000000e-01 : f32
    %559 = vector.broadcast %cst_162 : f32 to vector<2x128xf32>
    %560 = arith.addf %558, %559 : vector<2x128xf32>
    %561 = vector.extract_strided_slice %555 {offsets = [0, 128], sizes = [2, 128], strides = [1, 1]} : vector<2x512xf32> to vector<2x128xf32>
    %cst_163 = arith.constant 5.000000e-01 : f32
    %562 = vector.broadcast %cst_163 : f32 to vector<2x128xf32>
    %563 = arith.mulf %562, %561 : vector<2x128xf32>
    %cst_164 = arith.constant 5.000000e-01 : f32
    %564 = vector.broadcast %cst_164 : f32 to vector<2x128xf32>
    %565 = arith.addf %563, %564 : vector<2x128xf32>
    %566 = vector.extract_strided_slice %555 {offsets = [0, 256], sizes = [2, 128], strides = [1, 1]} : vector<2x512xf32> to vector<2x128xf32>
    %567 = vector.extract_strided_slice %555 {offsets = [0, 384], sizes = [2, 128], strides = [1, 1]} : vector<2x512xf32> to vector<2x128xf32>
    %cst_165 = arith.constant 5.000000e-01 : f32
    %568 = vector.broadcast %cst_165 : f32 to vector<2x128xf32>
    %569 = arith.mulf %568, %567 : vector<2x128xf32>
    %cst_166 = arith.constant 5.000000e-01 : f32
    %570 = vector.broadcast %cst_166 : f32 to vector<2x128xf32>
    %571 = arith.addf %569, %570 : vector<2x128xf32>
    %572 = arith.mulf %565, %549 : vector<2x128xf32>
    %573 = arith.mulf %560, %566 : vector<2x128xf32>
    %574 = arith.addf %572, %573 : vector<2x128xf32>
    %575 = math.tanh %574 : vector<2x128xf32>
    %576 = arith.mulf %571, %575 : vector<2x128xf32>
    %cst_167 = arith.constant dense<0.000000e+00> : vector<2x512xf32>
    %577 = tpu.matmul %576, %5, %cst_167 {dimension_numbers = #tpu.dot_dimension_numbers<[1], [0], [0], [1], [0, 0, 1, 1], [], []>} : vector<2x128xf32>, vector<128x512xf32>, vector<2x512xf32> -> vector<2x512xf32>
    %578 = vector.broadcast %6 : vector<1x512xf32> to vector<2x512xf32>
    %579 = arith.addf %577, %578 : vector<2x512xf32>
    %580 = math.tanh %579 : vector<2x512xf32>
    %581 = vector.extract_strided_slice %580 {offsets = [0, 0], sizes = [2, 128], strides = [1, 1]} : vector<2x512xf32> to vector<2x128xf32>
    %cst_168 = arith.constant 5.000000e-01 : f32
    %582 = vector.broadcast %cst_168 : f32 to vector<2x128xf32>
    %583 = arith.mulf %582, %581 : vector<2x128xf32>
    %cst_169 = arith.constant 5.000000e-01 : f32
    %584 = vector.broadcast %cst_169 : f32 to vector<2x128xf32>
    %585 = arith.addf %583, %584 : vector<2x128xf32>
    %586 = vector.extract_strided_slice %580 {offsets = [0, 128], sizes = [2, 128], strides = [1, 1]} : vector<2x512xf32> to vector<2x128xf32>
    %cst_170 = arith.constant 5.000000e-01 : f32
    %587 = vector.broadcast %cst_170 : f32 to vector<2x128xf32>
    %588 = arith.mulf %587, %586 : vector<2x128xf32>
    %cst_171 = arith.constant 5.000000e-01 : f32
    %589 = vector.broadcast %cst_171 : f32 to vector<2x128xf32>
    %590 = arith.addf %588, %589 : vector<2x128xf32>
    %591 = vector.extract_strided_slice %580 {offsets = [0, 256], sizes = [2, 128], strides = [1, 1]} : vector<2x512xf32> to vector<2x128xf32>
    %592 = vector.extract_strided_slice %580 {offsets = [0, 384], sizes = [2, 128], strides = [1, 1]} : vector<2x512xf32> to vector<2x128xf32>
    %cst_172 = arith.constant 5.000000e-01 : f32
    %593 = vector.broadcast %cst_172 : f32 to vector<2x128xf32>
    %594 = arith.mulf %593, %592 : vector<2x128xf32>
    %cst_173 = arith.constant 5.000000e-01 : f32
    %595 = vector.broadcast %cst_173 : f32 to vector<2x128xf32>
    %596 = arith.addf %594, %595 : vector<2x128xf32>
    %597 = arith.mulf %590, %574 : vector<2x128xf32>
    %598 = arith.mulf %585, %591 : vector<2x128xf32>
    %599 = arith.addf %597, %598 : vector<2x128xf32>
    %600 = math.tanh %599 : vector<2x128xf32>
    %601 = arith.mulf %596, %600 : vector<2x128xf32>
    %cst_174 = arith.constant dense<0.000000e+00> : vector<2x512xf32>
    %602 = tpu.matmul %601, %3, %cst_174 {dimension_numbers = #tpu.dot_dimension_numbers<[1], [0], [0], [1], [0, 0, 1, 1], [], []>} : vector<2x128xf32>, vector<128x512xf32>, vector<2x512xf32> -> vector<2x512xf32>
    %603 = vector.broadcast %4 : vector<1x512xf32> to vector<2x512xf32>
    %604 = arith.addf %602, %603 : vector<2x512xf32>
    %605 = math.tanh %604 : vector<2x512xf32>
    %606 = vector.extract_strided_slice %605 {offsets = [0, 0], sizes = [2, 128], strides = [1, 1]} : vector<2x512xf32> to vector<2x128xf32>
    %cst_175 = arith.constant 5.000000e-01 : f32
    %607 = vector.broadcast %cst_175 : f32 to vector<2x128xf32>
    %608 = arith.mulf %607, %606 : vector<2x128xf32>
    %cst_176 = arith.constant 5.000000e-01 : f32
    %609 = vector.broadcast %cst_176 : f32 to vector<2x128xf32>
    %610 = arith.addf %608, %609 : vector<2x128xf32>
    %611 = vector.extract_strided_slice %605 {offsets = [0, 128], sizes = [2, 128], strides = [1, 1]} : vector<2x512xf32> to vector<2x128xf32>
    %cst_177 = arith.constant 5.000000e-01 : f32
    %612 = vector.broadcast %cst_177 : f32 to vector<2x128xf32>
    %613 = arith.mulf %612, %611 : vector<2x128xf32>
    %cst_178 = arith.constant 5.000000e-01 : f32
    %614 = vector.broadcast %cst_178 : f32 to vector<2x128xf32>
    %615 = arith.addf %613, %614 : vector<2x128xf32>
    %616 = vector.extract_strided_slice %605 {offsets = [0, 256], sizes = [2, 128], strides = [1, 1]} : vector<2x512xf32> to vector<2x128xf32>
    %617 = vector.extract_strided_slice %605 {offsets = [0, 384], sizes = [2, 128], strides = [1, 1]} : vector<2x512xf32> to vector<2x128xf32>
    %cst_179 = arith.constant 5.000000e-01 : f32
    %618 = vector.broadcast %cst_179 : f32 to vector<2x128xf32>
    %619 = arith.mulf %618, %617 : vector<2x128xf32>
    %cst_180 = arith.constant 5.000000e-01 : f32
    %620 = vector.broadcast %cst_180 : f32 to vector<2x128xf32>
    %621 = arith.addf %619, %620 : vector<2x128xf32>
    %622 = arith.mulf %615, %599 : vector<2x128xf32>
    %623 = arith.mulf %610, %616 : vector<2x128xf32>
    %624 = arith.addf %622, %623 : vector<2x128xf32>
    %625 = math.tanh %624 : vector<2x128xf32>
    %626 = arith.mulf %621, %625 : vector<2x128xf32>
    %cst_181 = arith.constant dense<0.000000e+00> : vector<2x512xf32>
    %627 = tpu.matmul %626, %5, %cst_181 {dimension_numbers = #tpu.dot_dimension_numbers<[1], [0], [0], [1], [0, 0, 1, 1], [], []>} : vector<2x128xf32>, vector<128x512xf32>, vector<2x512xf32> -> vector<2x512xf32>
    %628 = vector.broadcast %6 : vector<1x512xf32> to vector<2x512xf32>
    %629 = arith.addf %627, %628 : vector<2x512xf32>
    %630 = math.tanh %629 : vector<2x512xf32>
    %631 = vector.extract_strided_slice %630 {offsets = [0, 0], sizes = [2, 128], strides = [1, 1]} : vector<2x512xf32> to vector<2x128xf32>
    %cst_182 = arith.constant 5.000000e-01 : f32
    %632 = vector.broadcast %cst_182 : f32 to vector<2x128xf32>
    %633 = arith.mulf %632, %631 : vector<2x128xf32>
    %cst_183 = arith.constant 5.000000e-01 : f32
    %634 = vector.broadcast %cst_183 : f32 to vector<2x128xf32>
    %635 = arith.addf %633, %634 : vector<2x128xf32>
    %636 = vector.extract_strided_slice %630 {offsets = [0, 128], sizes = [2, 128], strides = [1, 1]} : vector<2x512xf32> to vector<2x128xf32>
    %cst_184 = arith.constant 5.000000e-01 : f32
    %637 = vector.broadcast %cst_184 : f32 to vector<2x128xf32>
    %638 = arith.mulf %637, %636 : vector<2x128xf32>
    %cst_185 = arith.constant 5.000000e-01 : f32
    %639 = vector.broadcast %cst_185 : f32 to vector<2x128xf32>
    %640 = arith.addf %638, %639 : vector<2x128xf32>
    %641 = vector.extract_strided_slice %630 {offsets = [0, 256], sizes = [2, 128], strides = [1, 1]} : vector<2x512xf32> to vector<2x128xf32>
    %642 = vector.extract_strided_slice %630 {offsets = [0, 384], sizes = [2, 128], strides = [1, 1]} : vector<2x512xf32> to vector<2x128xf32>
    %cst_186 = arith.constant 5.000000e-01 : f32
    %643 = vector.broadcast %cst_186 : f32 to vector<2x128xf32>
    %644 = arith.mulf %643, %642 : vector<2x128xf32>
    %cst_187 = arith.constant 5.000000e-01 : f32
    %645 = vector.broadcast %cst_187 : f32 to vector<2x128xf32>
    %646 = arith.addf %644, %645 : vector<2x128xf32>
    %647 = arith.mulf %640, %624 : vector<2x128xf32>
    %648 = arith.mulf %635, %641 : vector<2x128xf32>
    %649 = arith.addf %647, %648 : vector<2x128xf32>
    %650 = math.tanh %649 : vector<2x128xf32>
    %651 = arith.mulf %646, %650 : vector<2x128xf32>
    %652 = tpu.concatenate %108, %157, %206, %255, %304, %353, %402, %451, %501, %551, %601, %651 in 1 : vector<2x128xf32>, vector<2x128xf32>, vector<2x128xf32>, vector<2x128xf32>, vector<2x128xf32>, vector<2x128xf32>, vector<2x128xf32>, vector<2x128xf32>, vector<2x128xf32>, vector<2x128xf32>, vector<2x128xf32>, vector<2x128xf32> -> vector<2x1536xf32>
    %cst_188 = arith.constant dense<0.000000e+00> : vector<2x12xf32>
    %653 = tpu.matmul %652, %7, %cst_188 {dimension_numbers = #tpu.dot_dimension_numbers<[1], [0], [0], [1], [0, 0, 1, 1], [], []>} : vector<2x1536xf32>, vector<1536x12xf32>, vector<2x12xf32> -> vector<2x12xf32>
    %654 = vector.broadcast %8 : vector<1x1xf32> to vector<2x12xf32>
    %655 = arith.addf %653, %654 : vector<2x12xf32>
    %c0_189 = arith.constant 0 : index
    %c0_190 = arith.constant 0 : index
    %656 = vector.load %arg10[%c0_189, %c0_190] : memref<2x12xf32, #tpu.memory_space<vmem>>, vector<2x12xf32>
    tpu.vector_store %arg10[%c0_189, %c0_190], %655 {strides = array<i32>} : memref<2x12xf32, #tpu.memory_space<vmem>>, vector<2x12xf32>,
    return
  }
}

</mosaic_0001>

<llo_original>
// kernel: tpu_custom_call.1
$region0: #{tpu_custom_call.1}
  #allocation0 [shape = 'u32[]', space=smem, size = 0x4, offset = 0x4, fixed_abs, tag = 'smem constant byte address 0x4 - core index']
  #allocation1 [shape = 'u32[144,128]{1,0:T(1,128)}', space=vmem, size = 0x12000, scoped, tag = 'internal scratch']
  #allocation2 [shape = 'f32[1,1]{1,0:T(1,128)S(1)}', space=vmem, size = 0x200, scoped, tag = 'scoped memory for tpu_custom_call.1']
  %s0 = inlined_call_operand.vmem [shape: f32[2,8], index: 0, kind: input, shape index: {}]
  %s1 = inlined_call_operand.vmem [shape: f32[1,512], index: 1, kind: input, shape index: {}]
  %s2 = inlined_call_operand.vmem [shape: f32[128,512], index: 2, kind: input, shape index: {}]
  %s3 = inlined_call_operand.vmem [shape: f32[1,512], index: 3, kind: input, shape index: {}]
  %s4 = inlined_call_operand.vmem [shape: f32[128,512], index: 4, kind: input, shape index: {}]
  %s5 = inlined_call_operand.vmem [shape: f32[1,512], index: 5, kind: input, shape index: {}]
  %s6 = inlined_call_operand.vmem [shape: f32[128,512], index: 6, kind: input, shape index: {}]
  %s7 = inlined_call_operand.vmem [shape: f32[1,512], index: 7, kind: input, shape index: {}]
  %s8 = inlined_call_operand.vmem [shape: f32[1536,12], index: 8, kind: input, shape index: {}]
  %s9 = inlined_call_operand.<no memory space> [shape: f32[1,1], index: 9, kind: input, shape index: {}]
  %s10 = inlined_call_operand.hbm [shape: f32[2,12], index: 10, kind: output, shape index: {}]
  %s11 = sld [smem:[#allocation0]]
  $region50: #{tpu_custom_call.1} parent=0
    _
  %s13 = ssub.s32 1, %s11
  %s14 = scalar_select 0, %s13, %s11
  %v15 = vstv %s9
  %16 = vst [vmem:[#allocation2] sm:$0x1] %v15
  $region1: #{tpu_custom_call.1} parent=0
    #allocation3 [shape = 'u8[1024]{0}', space=vmem, size = 0x400, scoped, tag = 'output window, operand 0, single buffered']
    #allocation4 [shape = 's32[1]{0}', space=sflag, size = 0x4, scoped, tag = 'scoped memory for tpu_custom_call.1']
    %17 = vsyncpa [#allocation4], 0
    // Predicated region
    $region2: #{tpu_custom_call.1} parent=1 // pred_check
      _
    $region3: #{tpu_custom_call.1} parent=1 // pred_check_branch
      %19 = sbr.rel (0) target = $region5
    $region4: #{tpu_custom_call.1} parent=1 // pred_region
      _
    $region5: #{tpu_custom_call.1} parent=1 // pred_fallthru
      _
    // Predicated region
    $region6: #{tpu_custom_call.1} parent=1 // pred_check
      _
    $region7: #{tpu_custom_call.1} parent=1 // pred_check_branch
      %21 = sbr.rel (0) target = $region9
    $region8: #{tpu_custom_call.1} parent=1 // pred_region
      _
    $region9: #{tpu_custom_call.1} parent=1 // pred_fallthru
      _
    // Predicated region
    $region10: #{tpu_custom_call.1} parent=1 // pred_check
      _
    $region11: #{tpu_custom_call.1} parent=1 // pred_check_branch
      %23 = sbr.rel (0) target = $region13
    $region12: #{tpu_custom_call.1} parent=1 // pred_region
      _
    $region13: #{tpu_custom_call.1} parent=1 // pred_fallthru
      _
    // Predicated region
    $region14: #{tpu_custom_call.1} parent=1 // pred_check
      _
    $region15: #{tpu_custom_call.1} parent=1 // pred_check_branch
      %25 = sbr.rel (0) target = $region17
    $region16: #{tpu_custom_call.1} parent=1 // pred_region
      _
    $region17: #{tpu_custom_call.1} parent=1 // pred_fallthru
      _
    // Predicated region
    $region18: #{tpu_custom_call.1} parent=1 // pred_check
      _
    $region19: #{tpu_custom_call.1} parent=1 // pred_check_branch
      %27 = sbr.rel (0) target = $region21
    $region20: #{tpu_custom_call.1} parent=1 // pred_region
      _
    $region21: #{tpu_custom_call.1} parent=1 // pred_fallthru
      _
    // Predicated region
    $region22: #{tpu_custom_call.1} parent=1 // pred_check
      _
    $region23: #{tpu_custom_call.1} parent=1 // pred_check_branch
      %29 = sbr.rel (0) target = $region25
    $region24: #{tpu_custom_call.1} parent=1 // pred_region
      _
    $region25: #{tpu_custom_call.1} parent=1 // pred_fallthru
      _
    // Predicated region
    $region26: #{tpu_custom_call.1} parent=1 // pred_check
      _
    $region27: #{tpu_custom_call.1} parent=1 // pred_check_branch
      %31 = sbr.rel (0) target = $region29
    $region28: #{tpu_custom_call.1} parent=1 // pred_region
      _
    $region29: #{tpu_custom_call.1} parent=1 // pred_fallthru
      _
    // Predicated region
    $region30: #{tpu_custom_call.1} parent=1 // pred_check
      _
    $region31: #{tpu_custom_call.1} parent=1 // pred_check_branch
      %33 = sbr.rel (0) target = $region33
    $region32: #{tpu_custom_call.1} parent=1 // pred_region
      _
    $region33: #{tpu_custom_call.1} parent=1 // pred_fallthru
      _
    // Predicated region
    $region34: #{tpu_custom_call.1} parent=1 // pred_check
      _
    $region35: #{tpu_custom_call.1} parent=1 // pred_check_branch
      %35 = sbr.rel (0) target = $region37
    $region36: #{tpu_custom_call.1} parent=1 // pred_region
      _
    $region37: #{tpu_custom_call.1} parent=1 // pred_fallthru
      _
    // Predicated region
    $region38: #{tpu_custom_call.1} parent=1 // pred_check
      _
    $region39: #{tpu_custom_call.1} parent=1 // pred_check_branch
      %37 = sbr.rel (0) target = $region41
    $region40: #{tpu_custom_call.1} parent=1 // pred_region
      _
    $region41: #{tpu_custom_call.1} parent=1 // pred_fallthru
      _
    %v38 = vld [vmem:[%s1] sm:$0xf]
    %v39 = vld [vmem:[%s2] sm:$0xff]
    %v40 = vld [vmem:[%s2 + $0x8] sm:$0xff]
    %v41 = vld [vmem:[%s2 + $0x10] sm:$0xff]
    %v42 = vld [vmem:[%s2 + $0x18] sm:$0xff]
    %v43 = vld [vmem:[%s2 + $0x20] sm:$0xff]
    %v44 = vld [vmem:[%s2 + $0x28] sm:$0xff]
    %v45 = vld [vmem:[%s2 + $0x30] sm:$0xff]
    %v46 = vld [vmem:[%s2 + $0x38] sm:$0xff]
    %v47 = vld [vmem:[%s2 + $0x40] sm:$0xff]
    %v48 = vld [vmem:[%s2 + $0x48] sm:$0xff]
    %v49 = vld [vmem:[%s2 + $0x50] sm:$0xff]
    %v50 = vld [vmem:[%s2 + $0x58] sm:$0xff]
    %v51 = vld [vmem:[%s2 + $0x60] sm:$0xff]
    %v52 = vld [vmem:[%s2 + $0x68] sm:$0xff]
    %v53 = vld [vmem:[%s2 + $0x70] sm:$0xff]
    %v54 = vld [vmem:[%s2 + $0x78] sm:$0xff]
    %v55 = vld [vmem:[%s2 + $0x80] sm:$0xff]
    %v56 = vld [vmem:[%s2 + $0x88] sm:$0xff]
    %v57 = vld [vmem:[%s2 + $0x90] sm:$0xff]
    %v58 = vld [vmem:[%s2 + $0x98] sm:$0xff]
    %v59 = vld [vmem:[%s2 + $0xa0] sm:$0xff]
    %v60 = vld [vmem:[%s2 + $0xa8] sm:$0xff]
    %v61 = vld [vmem:[%s2 + $0xb0] sm:$0xff]
    %v62 = vld [vmem:[%s2 + $0xb8] sm:$0xff]
    %v63 = vld [vmem:[%s2 + $0xc0] sm:$0xff]
    %v64 = vld [vmem:[%s2 + $0xc8] sm:$0xff]
    %v65 = vld [vmem:[%s2 + $0xd0] sm:$0xff]
    %v66 = vld [vmem:[%s2 + $0xd8] sm:$0xff]
    %v67 = vld [vmem:[%s2 + $0xe0] sm:$0xff]
    %v68 = vld [vmem:[%s2 + $0xe8] sm:$0xff]
    %v69 = vld [vmem:[%s2 + $0xf0] sm:$0xff]
    %v70 = vld [vmem:[%s2 + $0xf8] sm:$0xff]
    %v71 = vld [vmem:[%s2 + $0x100] sm:$0xff]
    %v72 = vld [vmem:[%s2 + $0x108] sm:$0xff]
    %v73 = vld [vmem:[%s2 + $0x110] sm:$0xff]
    %v74 = vld [vmem:[%s2 + $0x118] sm:$0xff]
    %v75 = vld [vmem:[%s2 + $0x120] sm:$0xff]
    %v76 = vld [vmem:[%s2 + $0x128] sm:$0xff]
    %v77 = vld [vmem:[%s2 + $0x130] sm:$0xff]
    %v78 = vld [vmem:[%s2 + $0x138] sm:$0xff]
    %v79 = vld [vmem:[%s2 + $0x140] sm:$0xff]
    %v80 = vld [vmem:[%s2 + $0x148] sm:$0xff]
    %v81 = vld [vmem:[%s2 + $0x150] sm:$0xff]
    %v82 = vld [vmem:[%s2 + $0x158] sm:$0xff]
    %v83 = vld [vmem:[%s2 + $0x160] sm:$0xff]
    %v84 = vld [vmem:[%s2 + $0x168] sm:$0xff]
    %v85 = vld [vmem:[%s2 + $0x170] sm:$0xff]
    %v86 = vld [vmem:[%s2 + $0x178] sm:$0xff]
    %v87 = vld [vmem:[%s2 + $0x180] sm:$0xff]
    %v88 = vld [vmem:[%s2 + $0x188] sm:$0xff]
    %v89 = vld [vmem:[%s2 + $0x190] sm:$0xff]
    %v90 = vld [vmem:[%s2 + $0x198] sm:$0xff]
    %v91 = vld [vmem:[%s2 + $0x1a0] sm:$0xff]
    %v92 = vld [vmem:[%s2 + $0x1a8] sm:$0xff]
    %v93 = vld [vmem:[%s2 + $0x1b0] sm:$0xff]
    %v94 = vld [vmem:[%s2 + $0x1b8] sm:$0xff]
    %v95 = vld [vmem:[%s2 + $0x1c0] sm:$0xff]
    %v96 = vld [vmem:[%s2 + $0x1c8] sm:$0xff]
    %v97 = vld [vmem:[%s2 + $0x1d0] sm:$0xff]
    %v98 = vld [vmem:[%s2 + $0x1d8] sm:$0xff]
    %v99 = vld [vmem:[%s2 + $0x1e0] sm:$0xff]
    %v100 = vld [vmem:[%s2 + $0x1e8] sm:$0xff]
    %v101 = vld [vmem:[%s2 + $0x1f0] sm:$0xff]
    %v102 = vld [vmem:[%s2 + $0x1f8] sm:$0xff]
    %v103 = vld [vmem:[%s3] sm:$0xf]
    %v104 = vld [vmem:[%s4] sm:$0xff]
    %v105 = vld [vmem:[%s4 + $0x8] sm:$0xff]
    %v106 = vld [vmem:[%s4 + $0x10] sm:$0xff]
    %v107 = vld [vmem:[%s4 + $0x18] sm:$0xff]
    %v108 = vld [vmem:[%s4 + $0x20] sm:$0xff]
    %v109 = vld [vmem:[%s4 + $0x28] sm:$0xff]
    %v110 = vld [vmem:[%s4 + $0x30] sm:$0xff]
    %v111 = vld [vmem:[%s4 + $0x38] sm:$0xff]
    %v112 = vld [vmem:[%s4 + $0x40] sm:$0xff]
    %v113 = vld [vmem:[%s4 + $0x48] sm:$0xff]
    %v114 = vld [vmem:[%s4 + $0x50] sm:$0xff]
    %v115 = vld [vmem:[%s4 + $0x58] sm:$0xff]
    %v116 = vld [vmem:[%s4 + $0x60] sm:$0xff]
    %v117 = vld [vmem:[%s4 + $0x68] sm:$0xff]
    %v118 = vld [vmem:[%s4 + $0x70] sm:$0xff]
    %v119 = vld [vmem:[%s4 + $0x78] sm:$0xff]
    %v120 = vld [vmem:[%s4 + $0x80] sm:$0xff]
    %v121 = vld [vmem:[%s4 + $0x88] sm:$0xff]
    %v122 = vld [vmem:[%s4 + $0x90] sm:$0xff]
    %v123 = vld [vmem:[%s4 + $0x98] sm:$0xff]
    %v124 = vld [vmem:[%s4 + $0xa0] sm:$0xff]
    %v125 = vld [vmem:[%s4 + $0xa8] sm:$0xff]
    %v126 = vld [vmem:[%s4 + $0xb0] sm:$0xff]
    %v127 = vld [vmem:[%s4 + $0xb8] sm:$0xff]
    %v128 = vld [vmem:[%s4 + $0xc0] sm:$0xff]
    %v129 = vld [vmem:[%s4 + $0xc8] sm:$0xff]
    %v130 = vld [vmem:[%s4 + $0xd0] sm:$0xff]
    %v131 = vld [vmem:[%s4 + $0xd8] sm:$0xff]
    %v132 = vld [vmem:[%s4 + $0xe0] sm:$0xff]
    %v133 = vld [vmem:[%s4 + $0xe8] sm:$0xff]
    %v134 = vld [vmem:[%s4 + $0xf0] sm:$0xff]
    %v135 = vld [vmem:[%s4 + $0xf8] sm:$0xff]
    %v136 = vld [vmem:[%s4 + $0x100] sm:$0xff]
    %v137 = vld [vmem:[%s4 + $0x108] sm:$0xff]
    %v138 = vld [vmem:[%s4 + $0x110] sm:$0xff]
    %v139 = vld [vmem:[%s4 + $0x118] sm:$0xff]
    %v140 = vld [vmem:[%s4 + $0x120] sm:$0xff]
    %v141 = vld [vmem:[%s4 + $0x128] sm:$0xff]
    %v142 = vld [vmem:[%s4 + $0x130] sm:$0xff]
    %v143 = vld [vmem:[%s4 + $0x138] sm:$0xff]
    %v144 = vld [vmem:[%s4 + $0x140] sm:$0xff]
    %v145 = vld [vmem:[%s4 + $0x148] sm:$0xff]
    %v146 = vld [vmem:[%s4 + $0x150] sm:$0xff]
    %v147 = vld [vmem:[%s4 + $0x158] sm:$0xff]
    %v148 = vld [vmem:[%s4 + $0x160] sm:$0xff]
    %v149 = vld [vmem:[%s4 + $0x168] sm:$0xff]
    %v150 = vld [vmem:[%s4 + $0x170] sm:$0xff]
    %v151 = vld [vmem:[%s4 + $0x178] sm:$0xff]
    %v152 = vld [vmem:[%s4 + $0x180] sm:$0xff]
    %v153 = vld [vmem:[%s4 + $0x188] sm:$0xff]
    %v154 = vld [vmem:[%s4 + $0x190] sm:$0xff]
    %v155 = vld [vmem:[%s4 + $0x198] sm:$0xff]
    %v156 = vld [vmem:[%s4 + $0x1a0] sm:$0xff]
    %v157 = vld [vmem:[%s4 + $0x1a8] sm:$0xff]
    %v158 = vld [vmem:[%s4 + $0x1b0] sm:$0xff]
    %v159 = vld [vmem:[%s4 + $0x1b8] sm:$0xff]
    %v160 = vld [vmem:[%s4 + $0x1c0] sm:$0xff]
    %v161 = vld [vmem:[%s4 + $0x1c8] sm:$0xff]
    %v162 = vld [vmem:[%s4 + $0x1d0] sm:$0xff]
    %v163 = vld [vmem:[%s4 + $0x1d8] sm:$0xff]
    %v164 = vld [vmem:[%s4 + $0x1e0] sm:$0xff]
    %v165 = vld [vmem:[%s4 + $0x1e8] sm:$0xff]
    %v166 = vld [vmem:[%s4 + $0x1f0] sm:$0xff]
    %v167 = vld [vmem:[%s4 + $0x1f8] sm:$0xff]
    %v168 = vld [vmem:[%s5] sm:$0xf]
    %v169 = vld [vmem:[%s6] sm:$0xff]
    %v170 = vld [vmem:[%s6 + $0x8] sm:$0xff]
    %v171 = vld [vmem:[%s6 + $0x10] sm:$0xff]
    %v172 = vld [vmem:[%s6 + $0x18] sm:$0xff]
    %v173 = vld [vmem:[%s6 + $0x20] sm:$0xff]
    %v174 = vld [vmem:[%s6 + $0x28] sm:$0xff]
    %v175 = vld [vmem:[%s6 + $0x30] sm:$0xff]
    %v176 = vld [vmem:[%s6 + $0x38] sm:$0xff]
    %v177 = vld [vmem:[%s6 + $0x40] sm:$0xff]
    %v178 = vld [vmem:[%s6 + $0x48] sm:$0xff]
    %v179 = vld [vmem:[%s6 + $0x50] sm:$0xff]
    %v180 = vld [vmem:[%s6 + $0x58] sm:$0xff]
    %v181 = vld [vmem:[%s6 + $0x60] sm:$0xff]
    %v182 = vld [vmem:[%s6 + $0x68] sm:$0xff]
    %v183 = vld [vmem:[%s6 + $0x70] sm:$0xff]
    %v184 = vld [vmem:[%s6 + $0x78] sm:$0xff]
    %v185 = vld [vmem:[%s6 + $0x80] sm:$0xff]
    %v186 = vld [vmem:[%s6 + $0x88] sm:$0xff]
    %v187 = vld [vmem:[%s6 + $0x90] sm:$0xff]
    %v188 = vld [vmem:[%s6 + $0x98] sm:$0xff]
    %v189 = vld [vmem:[%s6 + $0xa0] sm:$0xff]
    %v190 = vld [vmem:[%s6 + $0xa8] sm:$0xff]
    %v191 = vld [vmem:[%s6 + $0xb0] sm:$0xff]
    %v192 = vld [vmem:[%s6 + $0xb8] sm:$0xff]
    %v193 = vld [vmem:[%s6 + $0xc0] sm:$0xff]
    %v194 = vld [vmem:[%s6 + $0xc8] sm:$0xff]
    %v195 = vld [vmem:[%s6 + $0xd0] sm:$0xff]
    %v196 = vld [vmem:[%s6 + $0xd8] sm:$0xff]
    %v197 = vld [vmem:[%s6 + $0xe0] sm:$0xff]
    %v198 = vld [vmem:[%s6 + $0xe8] sm:$0xff]
    %v199 = vld [vmem:[%s6 + $0xf0] sm:$0xff]
    %v200 = vld [vmem:[%s6 + $0xf8] sm:$0xff]
    %v201 = vld [vmem:[%s6 + $0x100] sm:$0xff]
    %v202 = vld [vmem:[%s6 + $0x108] sm:$0xff]
    %v203 = vld [vmem:[%s6 + $0x110] sm:$0xff]
    %v204 = vld [vmem:[%s6 + $0x118] sm:$0xff]
    %v205 = vld [vmem:[%s6 + $0x120] sm:$0xff]
    %v206 = vld [vmem:[%s6 + $0x128] sm:$0xff]
    %v207 = vld [vmem:[%s6 + $0x130] sm:$0xff]
    %v208 = vld [vmem:[%s6 + $0x138] sm:$0xff]
    %v209 = vld [vmem:[%s6 + $0x140] sm:$0xff]
    %v210 = vld [vmem:[%s6 + $0x148] sm:$0xff]
    %v211 = vld [vmem:[%s6 + $0x150] sm:$0xff]
    %v212 = vld [vmem:[%s6 + $0x158] sm:$0xff]
    %v213 = vld [vmem:[%s6 + $0x160] sm:$0xff]
    %v214 = vld [vmem:[%s6 + $0x168] sm:$0xff]
    %v215 = vld [vmem:[%s6 + $0x170] sm:$0xff]
    %v216 = vld [vmem:[%s6 + $0x178] sm:$0xff]
    %v217 = vld [vmem:[%s6 + $0x180] sm:$0xff]
    %v218 = vld [vmem:[%s6 + $0x188] sm:$0xff]
    %v219 = vld [vmem:[%s6 + $0x190] sm:$0xff]
    %v220 = vld [vmem:[%s6 + $0x198] sm:$0xff]
    %v221 = vld [vmem:[%s6 + $0x1a0] sm:$0xff]
    %v222 = vld [vmem:[%s6 + $0x1a8] sm:$0xff]
    %v223 = vld [vmem:[%s6 + $0x1b0] sm:$0xff]
    %v224 = vld [vmem:[%s6 + $0x1b8] sm:$0xff]
    %v225 = vld [vmem:[%s6 + $0x1c0] sm:$0xff]
    %v226 = vld [vmem:[%s6 + $0x1c8] sm:$0xff]
    %v227 = vld [vmem:[%s6 + $0x1d0] sm:$0xff]
    %v228 = vld [vmem:[%s6 + $0x1d8] sm:$0xff]
    %v229 = vld [vmem:[%s6 + $0x1e0] sm:$0xff]
    %v230 = vld [vmem:[%s6 + $0x1e8] sm:$0xff]
    %v231 = vld [vmem:[%s6 + $0x1f0] sm:$0xff]
    %v232 = vld [vmem:[%s6 + $0x1f8] sm:$0xff]
    %v233 = vld [vmem:[%s7] sm:$0xf]
    %v234 = vld [vmem:[%s8] sm:$0xff]
    %v235 = vld [vmem:[%s8 + $0x8] sm:$0xff]
    %v236 = vld [vmem:[%s8 + $0x10] sm:$0xff]
    %v237 = vld [vmem:[%s8 + $0x18] sm:$0xff]
    %v238 = vld [vmem:[%s8 + $0x20] sm:$0xff]
    %v239 = vld [vmem:[%s8 + $0x28] sm:$0xff]
    %v240 = vld [vmem:[%s8 + $0x30] sm:$0xff]
    %v241 = vld [vmem:[%s8 + $0x38] sm:$0xff]
    %v242 = vld [vmem:[%s8 + $0x40] sm:$0xff]
    %v243 = vld [vmem:[%s8 + $0x48] sm:$0xff]
    %v244 = vld [vmem:[%s8 + $0x50] sm:$0xff]
    %v245 = vld [vmem:[%s8 + $0x58] sm:$0xff]
    %v246 = vld [vmem:[%s8 + $0x60] sm:$0xff]
    %v247 = vld [vmem:[%s8 + $0x68] sm:$0xff]
    %v248 = vld [vmem:[%s8 + $0x70] sm:$0xff]
    %v249 = vld [vmem:[%s8 + $0x78] sm:$0xff]
    %v250 = vld [vmem:[%s8 + $0x80] sm:$0xff]
    %v251 = vld [vmem:[%s8 + $0x88] sm:$0xff]
    %v252 = vld [vmem:[%s8 + $0x90] sm:$0xff]
    %v253 = vld [vmem:[%s8 + $0x98] sm:$0xff]
    %v254 = vld [vmem:[%s8 + $0xa0] sm:$0xff]
    %v255 = vld [vmem:[%s8 + $0xa8] sm:$0xff]
    %v256 = vld [vmem:[%s8 + $0xb0] sm:$0xff]
    %v257 = vld [vmem:[%s8 + $0xb8] sm:$0xff]
    %v258 = vld [vmem:[%s8 + $0xc0] sm:$0xff]
    %v259 = vld [vmem:[%s8 + $0xc8] sm:$0xff]
    %v260 = vld [vmem:[%s8 + $0xd0] sm:$0xff]
    %v261 = vld [vmem:[%s8 + $0xd8] sm:$0xff]
    %v262 = vld [vmem:[%s8 + $0xe0] sm:$0xff]
    %v263 = vld [vmem:[%s8 + $0xe8] sm:$0xff]
    %v264 = vld [vmem:[%s8 + $0xf0] sm:$0xff]
    %v265 = vld [vmem:[%s8 + $0xf8] sm:$0xff]
    %v266 = vld [vmem:[%s8 + $0x100] sm:$0xff]
    %v267 = vld [vmem:[%s8 + $0x108] sm:$0xff]
    %v268 = vld [vmem:[%s8 + $0x110] sm:$0xff]
    %v269 = vld [vmem:[%s8 + $0x118] sm:$0xff]
    %v270 = vld [vmem:[%s8 + $0x120] sm:$0xff]
    %v271 = vld [vmem:[%s8 + $0x128] sm:$0xff]
    %v272 = vld [vmem:[%s8 + $0x130] sm:$0xff]
    %v273 = vld [vmem:[%s8 + $0x138] sm:$0xff]
    %v274 = vld [vmem:[%s8 + $0x140] sm:$0xff]
    %v275 = vld [vmem:[%s8 + $0x148] sm:$0xff]
    %v276 = vld [vmem:[%s8 + $0x150] sm:$0xff]
    %v277 = vld [vmem:[%s8 + $0x158] sm:$0xff]
    %v278 = vld [vmem:[%s8 + $0x160] sm:$0xff]
    %v279 = vld [vmem:[%s8 + $0x168] sm:$0xff]
    %v280 = vld [vmem:[%s8 + $0x170] sm:$0xff]
    %v281 = vld [vmem:[%s8 + $0x178] sm:$0xff]
    %v282 = vld [vmem:[%s8 + $0x180] sm:$0xff]
    %v283 = vld [vmem:[%s8 + $0x188] sm:$0xff]
    %v284 = vld [vmem:[%s8 + $0x190] sm:$0xff]
    %v285 = vld [vmem:[%s8 + $0x198] sm:$0xff]
    %v286 = vld [vmem:[%s8 + $0x1a0] sm:$0xff]
    %v287 = vld [vmem:[%s8 + $0x1a8] sm:$0xff]
    %v288 = vld [vmem:[%s8 + $0x1b0] sm:$0xff]
    %v289 = vld [vmem:[%s8 + $0x1b8] sm:$0xff]
    %v290 = vld [vmem:[%s8 + $0x1c0] sm:$0xff]
    %v291 = vld [vmem:[%s8 + $0x1c8] sm:$0xff]
    %v292 = vld [vmem:[%s8 + $0x1d0] sm:$0xff]
    %v293 = vld [vmem:[%s8 + $0x1d8] sm:$0xff]
    %v294 = vld [vmem:[%s8 + $0x1e0] sm:$0xff]
    %v295 = vld [vmem:[%s8 + $0x1e8] sm:$0xff]
    %v296 = vld [vmem:[%s8 + $0x1f0] sm:$0xff]
    %v297 = vld [vmem:[%s8 + $0x1f8] sm:$0xff]
    %v298 = vld [vmem:[%s8 + $0x200] sm:$0xff]
    %v299 = vld [vmem:[%s8 + $0x208] sm:$0xff]
    %v300 = vld [vmem:[%s8 + $0x210] sm:$0xff]
    %v301 = vld [vmem:[%s8 + $0x218] sm:$0xff]
    %v302 = vld [vmem:[%s8 + $0x220] sm:$0xff]
    %v303 = vld [vmem:[%s8 + $0x228] sm:$0xff]
    %v304 = vld [vmem:[%s8 + $0x230] sm:$0xff]
    %v305 = vld [vmem:[%s8 + $0x238] sm:$0xff]
    %v306 = vld [vmem:[%s8 + $0x240] sm:$0xff]
    %v307 = vld [vmem:[%s8 + $0x248] sm:$0xff]
    %v308 = vld [vmem:[%s8 + $0x250] sm:$0xff]
    %v309 = vld [vmem:[%s8 + $0x258] sm:$0xff]
    %v310 = vld [vmem:[%s8 + $0x260] sm:$0xff]
    %v311 = vld [vmem:[%s8 + $0x268] sm:$0xff]
    %v312 = vld [vmem:[%s8 + $0x270] sm:$0xff]
    %v313 = vld [vmem:[%s8 + $0x278] sm:$0xff]
    %v314 = vld [vmem:[%s8 + $0x280] sm:$0xff]
    %v315 = vld [vmem:[%s8 + $0x288] sm:$0xff]
    %v316 = vld [vmem:[%s8 + $0x290] sm:$0xff]
    %v317 = vld [vmem:[%s8 + $0x298] sm:$0xff]
    %v318 = vld [vmem:[%s8 + $0x2a0] sm:$0xff]
    %v319 = vld [vmem:[%s8 + $0x2a8] sm:$0xff]
    %v320 = vld [vmem:[%s8 + $0x2b0] sm:$0xff]
    %v321 = vld [vmem:[%s8 + $0x2b8] sm:$0xff]
    %v322 = vld [vmem:[%s8 + $0x2c0] sm:$0xff]
    %v323 = vld [vmem:[%s8 + $0x2c8] sm:$0xff]
    %v324 = vld [vmem:[%s8 + $0x2d0] sm:$0xff]
    %v325 = vld [vmem:[%s8 + $0x2d8] sm:$0xff]
    %v326 = vld [vmem:[%s8 + $0x2e0] sm:$0xff]
    %v327 = vld [vmem:[%s8 + $0x2e8] sm:$0xff]
    %v328 = vld [vmem:[%s8 + $0x2f0] sm:$0xff]
    %v329 = vld [vmem:[%s8 + $0x2f8] sm:$0xff]
    %v330 = vld [vmem:[%s8 + $0x300] sm:$0xff]
    %v331 = vld [vmem:[%s8 + $0x308] sm:$0xff]
    %v332 = vld [vmem:[%s8 + $0x310] sm:$0xff]
    %v333 = vld [vmem:[%s8 + $0x318] sm:$0xff]
    %v334 = vld [vmem:[%s8 + $0x320] sm:$0xff]
    %v335 = vld [vmem:[%s8 + $0x328] sm:$0xff]
    %v336 = vld [vmem:[%s8 + $0x330] sm:$0xff]
    %v337 = vld [vmem:[%s8 + $0x338] sm:$0xff]
    %v338 = vld [vmem:[%s8 + $0x340] sm:$0xff]
    %v339 = vld [vmem:[%s8 + $0x348] sm:$0xff]
    %v340 = vld [vmem:[%s8 + $0x350] sm:$0xff]
    %v341 = vld [vmem:[%s8 + $0x358] sm:$0xff]
    %v342 = vld [vmem:[%s8 + $0x360] sm:$0xff]
    %v343 = vld [vmem:[%s8 + $0x368] sm:$0xff]
    %v344 = vld [vmem:[%s8 + $0x370] sm:$0xff]
    %v345 = vld [vmem:[%s8 + $0x378] sm:$0xff]
    %v346 = vld [vmem:[%s8 + $0x380] sm:$0xff]
    %v347 = vld [vmem:[%s8 + $0x388] sm:$0xff]
    %v348 = vld [vmem:[%s8 + $0x390] sm:$0xff]
    %v349 = vld [vmem:[%s8 + $0x398] sm:$0xff]
    %v350 = vld [vmem:[%s8 + $0x3a0] sm:$0xff]
    %v351 = vld [vmem:[%s8 + $0x3a8] sm:$0xff]
    %v352 = vld [vmem:[%s8 + $0x3b0] sm:$0xff]
    %v353 = vld [vmem:[%s8 + $0x3b8] sm:$0xff]
    %v354 = vld [vmem:[%s8 + $0x3c0] sm:$0xff]
    %v355 = vld [vmem:[%s8 + $0x3c8] sm:$0xff]
    %v356 = vld [vmem:[%s8 + $0x3d0] sm:$0xff]
    %v357 = vld [vmem:[%s8 + $0x3d8] sm:$0xff]
    %v358 = vld [vmem:[%s8 + $0x3e0] sm:$0xff]
    %v359 = vld [vmem:[%s8 + $0x3e8] sm:$0xff]
    %v360 = vld [vmem:[%s8 + $0x3f0] sm:$0xff]
    %v361 = vld [vmem:[%s8 + $0x3f8] sm:$0xff]
    %v362 = vld [vmem:[%s8 + $0x400] sm:$0xff]
    %v363 = vld [vmem:[%s8 + $0x408] sm:$0xff]
    %v364 = vld [vmem:[%s8 + $0x410] sm:$0xff]
    %v365 = vld [vmem:[%s8 + $0x418] sm:$0xff]
    %v366 = vld [vmem:[%s8 + $0x420] sm:$0xff]
    %v367 = vld [vmem:[%s8 + $0x428] sm:$0xff]
    %v368 = vld [vmem:[%s8 + $0x430] sm:$0xff]
    %v369 = vld [vmem:[%s8 + $0x438] sm:$0xff]
    %v370 = vld [vmem:[%s8 + $0x440] sm:$0xff]
    %v371 = vld [vmem:[%s8 + $0x448] sm:$0xff]
    %v372 = vld [vmem:[%s8 + $0x450] sm:$0xff]
    %v373 = vld [vmem:[%s8 + $0x458] sm:$0xff]
    %v374 = vld [vmem:[%s8 + $0x460] sm:$0xff]
    %v375 = vld [vmem:[%s8 + $0x468] sm:$0xff]
    %v376 = vld [vmem:[%s8 + $0x470] sm:$0xff]
    %v377 = vld [vmem:[%s8 + $0x478] sm:$0xff]
    %v378 = vld [vmem:[%s8 + $0x480] sm:$0xff]
    %v379 = vld [vmem:[%s8 + $0x488] sm:$0xff]
    %v380 = vld [vmem:[%s8 + $0x490] sm:$0xff]
    %v381 = vld [vmem:[%s8 + $0x498] sm:$0xff]
    %v382 = vld [vmem:[%s8 + $0x4a0] sm:$0xff]
    %v383 = vld [vmem:[%s8 + $0x4a8] sm:$0xff]
    %v384 = vld [vmem:[%s8 + $0x4b0] sm:$0xff]
    %v385 = vld [vmem:[%s8 + $0x4b8] sm:$0xff]
    %v386 = vld [vmem:[%s8 + $0x4c0] sm:$0xff]
    %v387 = vld [vmem:[%s8 + $0x4c8] sm:$0xff]
    %v388 = vld [vmem:[%s8 + $0x4d0] sm:$0xff]
    %v389 = vld [vmem:[%s8 + $0x4d8] sm:$0xff]
    %v390 = vld [vmem:[%s8 + $0x4e0] sm:$0xff]
    %v391 = vld [vmem:[%s8 + $0x4e8] sm:$0xff]
    %v392 = vld [vmem:[%s8 + $0x4f0] sm:$0xff]
    %v393 = vld [vmem:[%s8 + $0x4f8] sm:$0xff]
    %v394 = vld [vmem:[%s8 + $0x500] sm:$0xff]
    %v395 = vld [vmem:[%s8 + $0x508] sm:$0xff]
    %v396 = vld [vmem:[%s8 + $0x510] sm:$0xff]
    %v397 = vld [vmem:[%s8 + $0x518] sm:$0xff]
    %v398 = vld [vmem:[%s8 + $0x520] sm:$0xff]
    %v399 = vld [vmem:[%s8 + $0x528] sm:$0xff]
    %v400 = vld [vmem:[%s8 + $0x530] sm:$0xff]
    %v401 = vld [vmem:[%s8 + $0x538] sm:$0xff]
    %v402 = vld [vmem:[%s8 + $0x540] sm:$0xff]
    %v403 = vld [vmem:[%s8 + $0x548] sm:$0xff]
    %v404 = vld [vmem:[%s8 + $0x550] sm:$0xff]
    %v405 = vld [vmem:[%s8 + $0x558] sm:$0xff]
    %v406 = vld [vmem:[%s8 + $0x560] sm:$0xff]
    %v407 = vld [vmem:[%s8 + $0x568] sm:$0xff]
    %v408 = vld [vmem:[%s8 + $0x570] sm:$0xff]
    %v409 = vld [vmem:[%s8 + $0x578] sm:$0xff]
    %v410 = vld [vmem:[%s8 + $0x580] sm:$0xff]
    %v411 = vld [vmem:[%s8 + $0x588] sm:$0xff]
    %v412 = vld [vmem:[%s8 + $0x590] sm:$0xff]
    %v413 = vld [vmem:[%s8 + $0x598] sm:$0xff]
    %v414 = vld [vmem:[%s8 + $0x5a0] sm:$0xff]
    %v415 = vld [vmem:[%s8 + $0x5a8] sm:$0xff]
    %v416 = vld [vmem:[%s8 + $0x5b0] sm:$0xff]
    %v417 = vld [vmem:[%s8 + $0x5b8] sm:$0xff]
    %v418 = vld [vmem:[%s8 + $0x5c0] sm:$0xff]
    %v419 = vld [vmem:[%s8 + $0x5c8] sm:$0xff]
    %v420 = vld [vmem:[%s8 + $0x5d0] sm:$0xff]
    %v421 = vld [vmem:[%s8 + $0x5d8] sm:$0xff]
    %v422 = vld [vmem:[%s8 + $0x5e0] sm:$0xff]
    %v423 = vld [vmem:[%s8 + $0x5e8] sm:$0xff]
    %v424 = vld [vmem:[%s8 + $0x5f0] sm:$0xff]
    %v425 = vld [vmem:[%s8 + $0x5f8] sm:$0xff]
    %v426 = vld [vmem:[#allocation2] sm:$0x1]
    %v427 = vld [vmem:[%s0] sm:$0x3]
    %429 = vset.pattern.permute.xlu0 0
    %430 = vperm.xlu0 %429, %v427
    %v431 = vpop.permute.xlu0 %430
    %v434 = vlaneseq
    %v435 = vshrl.u32 %v434, 7
    %v436 = vsub.s32 0, %v435
    %v437 = vrot.slane %v38, %v436
    %v438 = vlaneseq
    %v439 = vshrl.u32 %v438, 7
    %v440 = vsub.s32 1, %v439
    %v441 = vrot.slane %v38, %v440
    %v442 = vlaneseq
    %v443 = vshrl.u32 %v442, 7
    %v444 = vsub.s32 2, %v443
    %v445 = vrot.slane %v38, %v444
    %v446 = vlaneseq
    %v447 = vshrl.u32 %v446, 7
    %v448 = vsub.s32 3, %v447
    %v449 = vrot.slane %v38, %v448
    %v454 = vmul.f32 %v431, %v437
    %v455 = vmul.f32 %v431, %v441
    %v456 = vmul.f32 %v431, %v445
    %v457 = vmul.f32 %v431, %v449
    %v459 = vlaneseq
    %v460 = vshrl.u32 %v459, 7
    %v461 = vsub.s32 0, %v460
    %v462 = vrot.slane %v103, %v461
    %v463 = vlaneseq
    %v464 = vshrl.u32 %v463, 7
    %v465 = vsub.s32 1, %v464
    %v466 = vrot.slane %v103, %v465
    %v467 = vlaneseq
    %v468 = vshrl.u32 %v467, 7
    %v469 = vsub.s32 2, %v468
    %v470 = vrot.slane %v103, %v469
    %v471 = vlaneseq
    %v472 = vshrl.u32 %v471, 7
    %v473 = vsub.s32 3, %v472
    %v474 = vrot.slane %v103, %v473
    %v479 = vadd.f32 %v454, %v462
    %v480 = vadd.f32 %v455, %v466
    %v481 = vadd.f32 %v456, %v470
    %v482 = vadd.f32 %v457, %v474
    %483 = vset.pattern.permute.xlu0 1
    %484 = vperm.xlu0 %483, %v427
    %v485 = vpop.permute.xlu0 %484
    %v487 = vmul.f32 %v485, %v437
    %v488 = vmul.f32 %v485, %v441
    %v489 = vmul.f32 %v485, %v445
    %v490 = vmul.f32 %v485, %v449
    %v491 = vadd.f32 %v487, %v462
    %v492 = vadd.f32 %v488, %v466
    %v493 = vadd.f32 %v489, %v470
    %v494 = vadd.f32 %v490, %v474
    %495 = vset.pattern.permute.xlu0 2
    %496 = vperm.xlu0 %495, %v427
    %v497 = vpop.permute.xlu0 %496
    %v499 = vmul.f32 %v497, %v437
    %v500 = vmul.f32 %v497, %v441
    %v501 = vmul.f32 %v497, %v445
    %v502 = vmul.f32 %v497, %v449
    %v503 = vadd.f32 %v499, %v462
    %v504 = vadd.f32 %v500, %v466
    %v505 = vadd.f32 %v501, %v470
    %v506 = vadd.f32 %v502, %v474
    %507 = vset.pattern.permute.xlu0 3
    %508 = vperm.xlu0 %507, %v427
    %v509 = vpop.permute.xlu0 %508
    %v511 = vmul.f32 %v509, %v437
    %v512 = vmul.f32 %v509, %v441
    %v513 = vmul.f32 %v509, %v445
    %v514 = vmul.f32 %v509, %v449
    %v515 = vadd.f32 %v511, %v462
    %v516 = vadd.f32 %v512, %v466
    %v517 = vadd.f32 %v513, %v470
    %v518 = vadd.f32 %v514, %v474
    %519 = vset.pattern.permute.xlu0 4
    %520 = vperm.xlu0 %519, %v427
    %v521 = vpop.permute.xlu0 %520
    %v523 = vmul.f32 %v521, %v437
    %v524 = vmul.f32 %v521, %v441
    %v525 = vmul.f32 %v521, %v445
    %v526 = vmul.f32 %v521, %v449
    %v527 = vadd.f32 %v523, %v462
    %v528 = vadd.f32 %v524, %v466
    %v529 = vadd.f32 %v525, %v470
    %v530 = vadd.f32 %v526, %v474
    %531 = vset.pattern.permute.xlu0 5
    %532 = vperm.xlu0 %531, %v427
    %v533 = vpop.permute.xlu0 %532
    %v535 = vmul.f32 %v533, %v437
    %v536 = vmul.f32 %v533, %v441
    %v537 = vmul.f32 %v533, %v445
    %v538 = vmul.f32 %v533, %v449
    %v539 = vadd.f32 %v535, %v462
    %v540 = vadd.f32 %v536, %v466
    %v541 = vadd.f32 %v537, %v470
    %v542 = vadd.f32 %v538, %v474
    %543 = vset.pattern.permute.xlu0 6
    %544 = vperm.xlu0 %543, %v427
    %v545 = vpop.permute.xlu0 %544
    %v547 = vmul.f32 %v545, %v437
    %v548 = vmul.f32 %v545, %v441
    %v549 = vmul.f32 %v545, %v445
    %v550 = vmul.f32 %v545, %v449
    %v551 = vadd.f32 %v547, %v462
    %v552 = vadd.f32 %v548, %v466
    %v553 = vadd.f32 %v549, %v470
    %v554 = vadd.f32 %v550, %v474
    %555 = vset.pattern.permute.xlu0 7
    %556 = vperm.xlu0 %555, %v427
    %v557 = vpop.permute.xlu0 %556
    %v559 = vmul.f32 %v557, %v437
    %v560 = vmul.f32 %v557, %v441
    %v561 = vmul.f32 %v557, %v445
    %v562 = vmul.f32 %v557, %v449
    %v563 = vadd.f32 %v559, %v462
    %v564 = vadd.f32 %v560, %v466
    %v565 = vadd.f32 %v561, %v470
    %v566 = vadd.f32 %v562, %v474
    %567 = vmatprep.subr.mxu0 %v40
    %568 = vmatpush1.msra.mxu0 %v39
    %569 = vmatprep.subr.mxu0 %v44
    %570 = vmatpush1.msra.mxu0 %v43
    %571 = vmatprep.subr.mxu0 %v48
    %572 = vmatpush1.msra.mxu0 %v47
    %573 = vmatprep.subr.mxu0 %v52
    %574 = vmatpush1.msra.mxu0 %v51
    %575 = vmatprep.subr.mxu0 %v56
    %576 = vmatpush1.msra.mxu0 %v55
    %577 = vmatprep.subr.mxu0 %v60
    %578 = vmatpush1.msra.mxu0 %v59
    %579 = vmatprep.subr.mxu0 %v64
    %580 = vmatpush1.msra.mxu0 %v63
    %581 = vmatprep.subr.mxu0 %v68
    %582 = vmatpush1.msra.mxu0 %v67
    %583 = vmatprep.subr.mxu0 %v72
    %584 = vmatpush1.msra.mxu0 %v71
    %585 = vmatprep.subr.mxu0 %v76
    %586 = vmatpush1.msra.mxu0 %v75
    %587 = vmatprep.subr.mxu0 %v80
    %588 = vmatpush1.msra.mxu0 %v79
    %589 = vmatprep.subr.mxu0 %v84
    %590 = vmatpush1.msra.mxu0 %v83
    %591 = vmatprep.subr.mxu0 %v88
    %592 = vmatpush1.msra.mxu0 %v87
    %593 = vmatprep.subr.mxu0 %v92
    %594 = vmatpush1.msra.mxu0 %v91
    %595 = vmatprep.subr.mxu0 %v96
    %596 = vmatpush1.msra.mxu0 %v95
    %597 = vmatprep.subr.mxu0 %v100
    %598 = vmatpush1.msra.mxu0 %v99
    %599 = vmatprep.subr.mxu0 0.0
    %600 = vmatpush1.msra.mxu0 0.0
    %601 = vmatprep.subr.mxu0 0.0
    %602 = vmatpush1.msra.mxu0 0.0
    %603 = vmatprep.subr.mxu0 0.0
    %604 = vmatpush1.msra.mxu0 0.0
    %605 = vmatprep.subr.mxu0 0.0
    %606 = vmatpush1.msra.mxu0 0.0
    %607 = vmatprep.subr.mxu0 0.0
    %608 = vmatpush1.msra.mxu0 0.0
    %609 = vmatprep.subr.mxu0 0.0
    %610 = vmatpush1.msra.mxu0 0.0
    %611 = vmatprep.subr.mxu0 0.0
    %612 = vmatpush1.msra.mxu0 0.0
    %613 = vmatprep.subr.mxu0 0.0
    %614 = vmatpush1.msra.mxu0 0.0
    %615 = vmatprep.subr.mxu0 0.0
    %616 = vmatpush1.msra.mxu0 0.0
    %617 = vmatprep.subr.mxu0 0.0
    %618 = vmatpush1.msra.mxu0 0.0
    %619 = vmatprep.subr.mxu0 0.0
    %620 = vmatpush1.msra.mxu0 0.0
    %621 = vmatprep.subr.mxu0 0.0
    %622 = vmatpush1.msra.mxu0 0.0
    %623 = vmatprep.subr.mxu0 0.0
    %624 = vmatpush1.msra.mxu0 0.0
    %625 = vmatprep.subr.mxu0 0.0
    %626 = vmatpush1.msra.mxu0 0.0
    %627 = vmatprep.subr.mxu0 0.0
    %628 = vmatpush1.msra.mxu0 0.0
    %629 = vmatprep.subr.mxu0 0.0
    %630 = vmatpush1.msra.mxu0 0.0
    %631 = vmatprep.mubr.f32.mxu0 0.0
    %632 = vmatmul.mubr.f32.gmra.mrb[0].mxu0 0.0
    %v633 = vpop.f32.mrb[0].mxu0
    %v634 = vadd.f32 0.0, %v633
    %v635 = vpop.f32.mrb[0].mxu0
    %v636 = vadd.f32 0.0, %v635
    %637 = vdwg.mxu0
    %638 = vmatprep.subr.mxu0 %v42
    %639 = vmatpush1.msra.mxu0 %v41
    %640 = vmatprep.subr.mxu0 %v46
    %641 = vmatpush1.msra.mxu0 %v45
    %642 = vmatprep.subr.mxu0 %v50
    %643 = vmatpush1.msra.mxu0 %v49
    %644 = vmatprep.subr.mxu0 %v54
    %645 = vmatpush1.msra.mxu0 %v53
    %646 = vmatprep.subr.mxu0 %v58
    %647 = vmatpush1.msra.mxu0 %v57
    %648 = vmatprep.subr.mxu0 %v62
    %649 = vmatpush1.msra.mxu0 %v61
    %650 = vmatprep.subr.mxu0 %v66
    %651 = vmatpush1.msra.mxu0 %v65
    %652 = vmatprep.subr.mxu0 %v70
    %653 = vmatpush1.msra.mxu0 %v69
    %654 = vmatprep.subr.mxu0 %v74
    %655 = vmatpush1.msra.mxu0 %v73
    %656 = vmatprep.subr.mxu0 %v78
    %657 = vmatpush1.msra.mxu0 %v77
    %658 = vmatprep.subr.mxu0 %v82
    %659 = vmatpush1.msra.mxu0 %v81
    %660 = vmatprep.subr.mxu0 %v86
    %661 = vmatpush1.msra.mxu0 %v85
    %662 = vmatprep.subr.mxu0 %v90
    %663 = vmatpush1.msra.mxu0 %v89
    %664 = vmatprep.subr.mxu0 %v94
    %665 = vmatpush1.msra.mxu0 %v93
    %666 = vmatprep.subr.mxu0 %v98
    %667 = vmatpush1.msra.mxu0 %v97
    %668 = vmatprep.subr.mxu0 %v102
    %669 = vmatpush1.msra.mxu0 %v101
    %670 = vmatprep.subr.mxu0 0.0
    %671 = vmatpush1.msra.mxu0 0.0
    %672 = vmatprep.subr.mxu0 0.0
    %673 = vmatpush1.msra.mxu0 0.0
    %674 = vmatprep.subr.mxu0 0.0
    %675 = vmatpush1.msra.mxu0 0.0
    %676 = vmatprep.subr.mxu0 0.0
    %677 = vmatpush1.msra.mxu0 0.0
    %678 = vmatprep.subr.mxu0 0.0
    %679 = vmatpush1.msra.mxu0 0.0
    %680 = vmatprep.subr.mxu0 0.0
    %681 = vmatpush1.msra.mxu0 0.0
    %682 = vmatprep.subr.mxu0 0.0
    %683 = vmatpush1.msra.mxu0 0.0
    %684 = vmatprep.subr.mxu0 0.0
    %685 = vmatpush1.msra.mxu0 0.0
    %686 = vmatprep.subr.mxu0 0.0
    %687 = vmatpush1.msra.mxu0 0.0
    %688 = vmatprep.subr.mxu0 0.0
    %689 = vmatpush1.msra.mxu0 0.0
    %690 = vmatprep.subr.mxu0 0.0
    %691 = vmatpush1.msra.mxu0 0.0
    %692 = vmatprep.subr.mxu0 0.0
    %693 = vmatpush1.msra.mxu0 0.0
    %694 = vmatprep.subr.mxu0 0.0
    %695 = vmatpush1.msra.mxu0 0.0
    %696 = vmatprep.subr.mxu0 0.0
    %697 = vmatpush1.msra.mxu0 0.0
    %698 = vmatprep.subr.mxu0 0.0
    %699 = vmatpush1.msra.mxu0 0.0
    %700 = vmatprep.subr.mxu0 0.0
    %701 = vmatpush1.msra.mxu0 0.0
    %702 = vmatprep.mubr.f32.mxu0 0.0
    %703 = vmatmul.mubr.f32.gmra.mrb[0].mxu0 0.0
    %v704 = vpop.f32.mrb[0].mxu0
    %v705 = vadd.f32 0.0, %v704
    %v706 = vpop.f32.mrb[0].mxu0
    %v707 = vadd.f32 0.0, %v706
    %708 = vdwg.mxu0
    %v709 = vadd.f32 %v479, %v634
    %v710 = vadd.f32 %v480, %v636
    %v711 = vadd.f32 %v481, %v705
    %v712 = vadd.f32 %v482, %v707
    %v713 = vtanh.pop %v709
    %v714 = vtanh.pop %v710
    %v715 = vtanh.pop %v711
    %v716 = vtanh.pop %v712
    %v717 = vmul.f32 %v713, 0.5
    %v718 = vadd.f32 %v717, 0.5
    %v719 = vmul.f32 %v714, 0.5
    %v720 = vadd.f32 %v719, 0.5
    %v721 = vmul.f32 %v716, 0.5
    %v722 = vadd.f32 %v721, 0.5
    %v723 = vmul.f32 %v720, 0.0
    %v724 = vmul.f32 %v718, %v715
    %v725 = vadd.f32 %v723, %v724
    %v726 = vtanh.pop %v725
    %v727 = vmul.f32 %v722, %v726
    %v729 = vlaneseq
    %v730 = vshrl.u32 %v729, 7
    %v731 = vsub.s32 0, %v730
    %v732 = vrot.slane %v233, %v731
    %v733 = vlaneseq
    %v734 = vshrl.u32 %v733, 7
    %v735 = vsub.s32 1, %v734
    %v736 = vrot.slane %v233, %v735
    %v737 = vlaneseq
    %v738 = vshrl.u32 %v737, 7
    %v739 = vsub.s32 2, %v738
    %v740 = vrot.slane %v233, %v739
    %v741 = vlaneseq
    %v742 = vshrl.u32 %v741, 7
    %v743 = vsub.s32 3, %v742
    %v744 = vrot.slane %v233, %v743
    %749 = vmatprep.subr.mxu0 %v170
    %750 = vmatpush1.msra.mxu0 %v169
    %751 = vmatprep.subr.mxu0 %v174
    %752 = vmatpush1.msra.mxu0 %v173
    %753 = vmatprep.subr.mxu0 %v178
    %754 = vmatpush1.msra.mxu0 %v177
    %755 = vmatprep.subr.mxu0 %v182
    %756 = vmatpush1.msra.mxu0 %v181
    %757 = vmatprep.subr.mxu0 %v186
    %758 = vmatpush1.msra.mxu0 %v185
    %759 = vmatprep.subr.mxu0 %v190
    %760 = vmatpush1.msra.mxu0 %v189
    %761 = vmatprep.subr.mxu0 %v194
    %762 = vmatpush1.msra.mxu0 %v193
    %763 = vmatprep.subr.mxu0 %v198
    %764 = vmatpush1.msra.mxu0 %v197
    %765 = vmatprep.subr.mxu0 %v202
    %766 = vmatpush1.msra.mxu0 %v201
    %767 = vmatprep.subr.mxu0 %v206
    %768 = vmatpush1.msra.mxu0 %v205
    %769 = vmatprep.subr.mxu0 %v210
    %770 = vmatpush1.msra.mxu0 %v209
    %771 = vmatprep.subr.mxu0 %v214
    %772 = vmatpush1.msra.mxu0 %v213
    %773 = vmatprep.subr.mxu0 %v218
    %774 = vmatpush1.msra.mxu0 %v217
    %775 = vmatprep.subr.mxu0 %v222
    %776 = vmatpush1.msra.mxu0 %v221
    %777 = vmatprep.subr.mxu0 %v226
    %778 = vmatpush1.msra.mxu0 %v225
    %779 = vmatprep.subr.mxu0 %v230
    %780 = vmatpush1.msra.mxu0 %v229
    %781 = vmatprep.subr.mxu0 0.0
    %782 = vmatpush1.msra.mxu0 0.0
    %783 = vmatprep.subr.mxu0 0.0
    %784 = vmatpush1.msra.mxu0 0.0
    %785 = vmatprep.subr.mxu0 0.0
    %786 = vmatpush1.msra.mxu0 0.0
    %787 = vmatprep.subr.mxu0 0.0
    %788 = vmatpush1.msra.mxu0 0.0
    %789 = vmatprep.subr.mxu0 0.0
    %790 = vmatpush1.msra.mxu0 0.0
    %791 = vmatprep.subr.mxu0 0.0
    %792 = vmatpush1.msra.mxu0 0.0
    %793 = vmatprep.subr.mxu0 0.0
    %794 = vmatpush1.msra.mxu0 0.0
    %795 = vmatprep.subr.mxu0 0.0
    %796 = vmatpush1.msra.mxu0 0.0
    %797 = vmatprep.subr.mxu0 0.0
    %798 = vmatpush1.msra.mxu0 0.0
    %799 = vmatprep.subr.mxu0 0.0
    %800 = vmatpush1.msra.mxu0 0.0
    %801 = vmatprep.subr.mxu0 0.0
    %802 = vmatpush1.msra.mxu0 0.0
    %803 = vmatprep.subr.mxu0 0.0
    %804 = vmatpush1.msra.mxu0 0.0
    %805 = vmatprep.subr.mxu0 0.0
    %806 = vmatpush1.msra.mxu0 0.0
    %807 = vmatprep.subr.mxu0 0.0
    %808 = vmatpush1.msra.mxu0 0.0
    %809 = vmatprep.subr.mxu0 0.0
    %810 = vmatpush1.msra.mxu0 0.0
    %811 = vmatprep.subr.mxu0 0.0
    %812 = vmatpush1.msra.mxu0 0.0
    %813 = vmatprep.mubr.f32.mxu0 0.0
    %814 = vmatmul.mubr.f32.gmra.mrb[0].mxu0 %v727
    %v815 = vpop.f32.mrb[0].mxu0
    %v816 = vadd.f32 %v732, %v815
    %v817 = vpop.f32.mrb[0].mxu0
    %v818 = vadd.f32 %v736, %v817
    %819 = vdwg.mxu0
    %820 = vmatprep.subr.mxu0 %v172
    %821 = vmatpush1.msra.mxu0 %v171
    %822 = vmatprep.subr.mxu0 %v176
    %823 = vmatpush1.msra.mxu0 %v175
    %824 = vmatprep.subr.mxu0 %v180
    %825 = vmatpush1.msra.mxu0 %v179
    %826 = vmatprep.subr.mxu0 %v184
    %827 = vmatpush1.msra.mxu0 %v183
    %828 = vmatprep.subr.mxu0 %v188
    %829 = vmatpush1.msra.mxu0 %v187
    %830 = vmatprep.subr.mxu0 %v192
    %831 = vmatpush1.msra.mxu0 %v191
    %832 = vmatprep.subr.mxu0 %v196
    %833 = vmatpush1.msra.mxu0 %v195
    %834 = vmatprep.subr.mxu0 %v200
    %835 = vmatpush1.msra.mxu0 %v199
    %836 = vmatprep.subr.mxu0 %v204
    %837 = vmatpush1.msra.mxu0 %v203
    %838 = vmatprep.subr.mxu0 %v208
    %839 = vmatpush1.msra.mxu0 %v207
    %840 = vmatprep.subr.mxu0 %v212
    %841 = vmatpush1.msra.mxu0 %v211
    %842 = vmatprep.subr.mxu0 %v216
    %843 = vmatpush1.msra.mxu0 %v215
    %844 = vmatprep.subr.mxu0 %v220
    %845 = vmatpush1.msra.mxu0 %v219
    %846 = vmatprep.subr.mxu0 %v224
    %847 = vmatpush1.msra.mxu0 %v223
    %848 = vmatprep.subr.mxu0 %v228
    %849 = vmatpush1.msra.mxu0 %v227
    %850 = vmatprep.subr.mxu0 %v232
    %851 = vmatpush1.msra.mxu0 %v231
    %852 = vmatprep.subr.mxu0 0.0
    %853 = vmatpush1.msra.mxu0 0.0
    %854 = vmatprep.subr.mxu0 0.0
    %855 = vmatpush1.msra.mxu0 0.0
    %856 = vmatprep.subr.mxu0 0.0
    %857 = vmatpush1.msra.mxu0 0.0
    %858 = vmatprep.subr.mxu0 0.0
    %859 = vmatpush1.msra.mxu0 0.0
    %860 = vmatprep.subr.mxu0 0.0
    %861 = vmatpush1.msra.mxu0 0.0
    %862 = vmatprep.subr.mxu0 0.0
    %863 = vmatpush1.msra.mxu0 0.0
    %864 = vmatprep.subr.mxu0 0.0
    %865 = vmatpush1.msra.mxu0 0.0
    %866 = vmatprep.subr.mxu0 0.0
    %867 = vmatpush1.msra.mxu0 0.0
    %868 = vmatprep.subr.mxu0 0.0
    %869 = vmatpush1.msra.mxu0 0.0
    %870 = vmatprep.subr.mxu0 0.0
    %871 = vmatpush1.msra.mxu0 0.0
    %872 = vmatprep.subr.mxu0 0.0
    %873 = vmatpush1.msra.mxu0 0.0
    %874 = vmatprep.subr.mxu0 0.0
    %875 = vmatpush1.msra.mxu0 0.0
    %876 = vmatprep.subr.mxu0 0.0
    %877 = vmatpush1.msra.mxu0 0.0
    %878 = vmatprep.subr.mxu0 0.0
    %879 = vmatpush1.msra.mxu0 0.0
    %880 = vmatprep.subr.mxu0 0.0
    %881 = vmatpush1.msra.mxu0 0.0
    %882 = vmatprep.subr.mxu0 0.0
    %883 = vmatpush1.msra.mxu0 0.0
    %884 = vmatprep.mubr.f32.mxu0 0.0
    %885 = vmatmul.mubr.f32.gmra.mrb[0].mxu0 %v727
    %v886 = vpop.f32.mrb[0].mxu0
    %v887 = vadd.f32 %v740, %v886
    %v888 = vpop.f32.mrb[0].mxu0
    %v889 = vadd.f32 %v744, %v888
    %890 = vdwg.mxu0
    %v891 = vtanh.pop %v816
    %v892 = vtanh.pop %v818
    %v893 = vtanh.pop %v887
    %v894 = vtanh.pop %v889
    %v895 = vmul.f32 %v891, 0.5
    %v896 = vadd.f32 %v895, 0.5
    %v897 = vmul.f32 %v892, 0.5
    %v898 = vadd.f32 %v897, 0.5
    %v899 = vmul.f32 %v894, 0.5
    %v900 = vadd.f32 %v899, 0.5
    %v901 = vmul.f32 %v898, %v725
    %v902 = vmul.f32 %v896, %v893
    %v903 = vadd.f32 %v901, %v902
    %v904 = vtanh.pop %v903
    %v905 = vmul.f32 %v900, %v904
    %906 = vmatprep.subr.mxu0 %v40
    %907 = vmatpush1.msra.mxu0 %v39
    %908 = vmatprep.subr.mxu0 %v44
    %909 = vmatpush1.msra.mxu0 %v43
    %910 = vmatprep.subr.mxu0 %v48
    %911 = vmatpush1.msra.mxu0 %v47
    %912 = vmatprep.subr.mxu0 %v52
    %913 = vmatpush1.msra.mxu0 %v51
    %914 = vmatprep.subr.mxu0 %v56
    %915 = vmatpush1.msra.mxu0 %v55
    %916 = vmatprep.subr.mxu0 %v60
    %917 = vmatpush1.msra.mxu0 %v59
    %918 = vmatprep.subr.mxu0 %v64
    %919 = vmatpush1.msra.mxu0 %v63
    %920 = vmatprep.subr.mxu0 %v68
    %921 = vmatpush1.msra.mxu0 %v67
    %922 = vmatprep.subr.mxu0 %v72
    %923 = vmatpush1.msra.mxu0 %v71
    %924 = vmatprep.subr.mxu0 %v76
    %925 = vmatpush1.msra.mxu0 %v75
    %926 = vmatprep.subr.mxu0 %v80
    %927 = vmatpush1.msra.mxu0 %v79
    %928 = vmatprep.subr.mxu0 %v84
    %929 = vmatpush1.msra.mxu0 %v83
    %930 = vmatprep.subr.mxu0 %v88
    %931 = vmatpush1.msra.mxu0 %v87
    %932 = vmatprep.subr.mxu0 %v92
    %933 = vmatpush1.msra.mxu0 %v91
    %934 = vmatprep.subr.mxu0 %v96
    %935 = vmatpush1.msra.mxu0 %v95
    %936 = vmatprep.subr.mxu0 %v100
    %937 = vmatpush1.msra.mxu0 %v99
    %938 = vmatprep.subr.mxu0 0.0
    %939 = vmatpush1.msra.mxu0 0.0
    %940 = vmatprep.subr.mxu0 0.0
    %941 = vmatpush1.msra.mxu0 0.0
    %942 = vmatprep.subr.mxu0 0.0
    %943 = vmatpush1.msra.mxu0 0.0
    %944 = vmatprep.subr.mxu0 0.0
    %945 = vmatpush1.msra.mxu0 0.0
    %946 = vmatprep.subr.mxu0 0.0
    %947 = vmatpush1.msra.mxu0 0.0
    %948 = vmatprep.subr.mxu0 0.0
    %949 = vmatpush1.msra.mxu0 0.0
    %950 = vmatprep.subr.mxu0 0.0
    %951 = vmatpush1.msra.mxu0 0.0
    %952 = vmatprep.subr.mxu0 0.0
    %953 = vmatpush1.msra.mxu0 0.0
    %954 = vmatprep.subr.mxu0 0.0
    %955 = vmatpush1.msra.mxu0 0.0
    %956 = vmatprep.subr.mxu0 0.0
    %957 = vmatpush1.msra.mxu0 0.0
    %958 = vmatprep.subr.mxu0 0.0
    %959 = vmatpush1.msra.mxu0 0.0
    %960 = vmatprep.subr.mxu0 0.0
    %961 = vmatpush1.msra.mxu0 0.0
    %962 = vmatprep.subr.mxu0 0.0
    %963 = vmatpush1.msra.mxu0 0.0
    %964 = vmatprep.subr.mxu0 0.0
    %965 = vmatpush1.msra.mxu0 0.0
    %966 = vmatprep.subr.mxu0 0.0
    %967 = vmatpush1.msra.mxu0 0.0
    %968 = vmatprep.subr.mxu0 0.0
    %969 = vmatpush1.msra.mxu0 0.0
    %970 = vmatprep.mubr.f32.mxu0 0.0
    %971 = vmatmul.mubr.f32.gmra.mrb[0].mxu0 %v905
    %v972 = vpop.f32.mrb[0].mxu0
    %v973 = vadd.f32 0.0, %v972
    %v974 = vpop.f32.mrb[0].mxu0
    %v975 = vadd.f32 0.0, %v974
    %976 = vdwg.mxu0
    %977 = vmatprep.subr.mxu0 %v42
    %978 = vmatpush1.msra.mxu0 %v41
    %979 = vmatprep.subr.mxu0 %v46
    %980 = vmatpush1.msra.mxu0 %v45
    %981 = vmatprep.subr.mxu0 %v50
    %982 = vmatpush1.msra.mxu0 %v49
    %983 = vmatprep.subr.mxu0 %v54
    %984 = vmatpush1.msra.mxu0 %v53
    %985 = vmatprep.subr.mxu0 %v58
    %986 = vmatpush1.msra.mxu0 %v57
    %987 = vmatprep.subr.mxu0 %v62
    %988 = vmatpush1.msra.mxu0 %v61
    %989 = vmatprep.subr.mxu0 %v66
    %990 = vmatpush1.msra.mxu0 %v65
    %991 = vmatprep.subr.mxu0 %v70
    %992 = vmatpush1.msra.mxu0 %v69
    %993 = vmatprep.subr.mxu0 %v74
    %994 = vmatpush1.msra.mxu0 %v73
    %995 = vmatprep.subr.mxu0 %v78
    %996 = vmatpush1.msra.mxu0 %v77
    %997 = vmatprep.subr.mxu0 %v82
    %998 = vmatpush1.msra.mxu0 %v81
    %999 = vmatprep.subr.mxu0 %v86
    %1000 = vmatpush1.msra.mxu0 %v85
    %1001 = vmatprep.subr.mxu0 %v90
    %1002 = vmatpush1.msra.mxu0 %v89
    %1003 = vmatprep.subr.mxu0 %v94
    %1004 = vmatpush1.msra.mxu0 %v93
    %1005 = vmatprep.subr.mxu0 %v98
    %1006 = vmatpush1.msra.mxu0 %v97
    %1007 = vmatprep.subr.mxu0 %v102
    %1008 = vmatpush1.msra.mxu0 %v101
    %1009 = vmatprep.subr.mxu0 0.0
    %1010 = vmatpush1.msra.mxu0 0.0
    %1011 = vmatprep.subr.mxu0 0.0
    %1012 = vmatpush1.msra.mxu0 0.0
    %1013 = vmatprep.subr.mxu0 0.0
    %1014 = vmatpush1.msra.mxu0 0.0
    %1015 = vmatprep.subr.mxu0 0.0
    %1016 = vmatpush1.msra.mxu0 0.0
    %1017 = vmatprep.subr.mxu0 0.0
    %1018 = vmatpush1.msra.mxu0 0.0
    %1019 = vmatprep.subr.mxu0 0.0
    %1020 = vmatpush1.msra.mxu0 0.0
    %1021 = vmatprep.subr.mxu0 0.0
    %1022 = vmatpush1.msra.mxu0 0.0
    %1023 = vmatprep.subr.mxu0 0.0
    %1024 = vmatpush1.msra.mxu0 0.0
    %1025 = vmatprep.subr.mxu0 0.0
    %1026 = vmatpush1.msra.mxu0 0.0
    %1027 = vmatprep.subr.mxu0 0.0
    %1028 = vmatpush1.msra.mxu0 0.0
    %1029 = vmatprep.subr.mxu0 0.0
    %1030 = vmatpush1.msra.mxu0 0.0
    %1031 = vmatprep.subr.mxu0 0.0
    %1032 = vmatpush1.msra.mxu0 0.0
    %1033 = vmatprep.subr.mxu0 0.0
    %1034 = vmatpush1.msra.mxu0 0.0
    %1035 = vmatprep.subr.mxu0 0.0
    %1036 = vmatpush1.msra.mxu0 0.0
    %1037 = vmatprep.subr.mxu0 0.0
    %1038 = vmatpush1.msra.mxu0 0.0
    %1039 = vmatprep.subr.mxu0 0.0
    %1040 = vmatpush1.msra.mxu0 0.0
    %1041 = vmatprep.mubr.f32.mxu0 0.0
    %1042 = vmatmul.mubr.f32.gmra.mrb[0].mxu0 %v905
    %v1043 = vpop.f32.mrb[0].mxu0
    %v1044 = vadd.f32 0.0, %v1043
    %v1045 = vpop.f32.mrb[0].mxu0
    %v1046 = vadd.f32 0.0, %v1045
    %1047 = vdwg.mxu0
    %v1048 = vadd.f32 %v491, %v973
    %v1049 = vadd.f32 %v492, %v975
    %v1050 = vadd.f32 %v493, %v1044
    %v1051 = vadd.f32 %v494, %v1046
    %v1052 = vtanh.pop %v1048
    %v1053 = vtanh.pop %v1049
    %v1054 = vtanh.pop %v1050
    %v1055 = vtanh.pop %v1051
    %v1056 = vmul.f32 %v1052, 0.5
    %v1057 = vadd.f32 %v1056, 0.5
    %v1058 = vmul.f32 %v1053, 0.5
    %v1059 = vadd.f32 %v1058, 0.5
    %v1060 = vmul.f32 %v1055, 0.5
    %v1061 = vadd.f32 %v1060, 0.5
    %v1062 = vmul.f32 %v1059, %v903
    %v1063 = vmul.f32 %v1057, %v1054
    %v1064 = vadd.f32 %v1062, %v1063
    %v1065 = vtanh.pop %v1064
    %v1066 = vmul.f32 %v1061, %v1065
    %1067 = vmatprep.subr.mxu0 %v170
    %1068 = vmatpush1.msra.mxu0 %v169
    %1069 = vmatprep.subr.mxu0 %v174
    %1070 = vmatpush1.msra.mxu0 %v173
    %1071 = vmatprep.subr.mxu0 %v178
    %1072 = vmatpush1.msra.mxu0 %v177
    %1073 = vmatprep.subr.mxu0 %v182
    %1074 = vmatpush1.msra.mxu0 %v181
    %1075 = vmatprep.subr.mxu0 %v186
    %1076 = vmatpush1.msra.mxu0 %v185
    %1077 = vmatprep.subr.mxu0 %v190
    %1078 = vmatpush1.msra.mxu0 %v189
    %1079 = vmatprep.subr.mxu0 %v194
    %1080 = vmatpush1.msra.mxu0 %v193
    %1081 = vmatprep.subr.mxu0 %v198
    %1082 = vmatpush1.msra.mxu0 %v197
    %1083 = vmatprep.subr.mxu0 %v202
    %1084 = vmatpush1.msra.mxu0 %v201
    %1085 = vmatprep.subr.mxu0 %v206
    %1086 = vmatpush1.msra.mxu0 %v205
    %1087 = vmatprep.subr.mxu0 %v210
    %1088 = vmatpush1.msra.mxu0 %v209
    %1089 = vmatprep.subr.mxu0 %v214
    %1090 = vmatpush1.msra.mxu0 %v213
    %1091 = vmatprep.subr.mxu0 %v218
    %1092 = vmatpush1.msra.mxu0 %v217
    %1093 = vmatprep.subr.mxu0 %v222
    %1094 = vmatpush1.msra.mxu0 %v221
    %1095 = vmatprep.subr.mxu0 %v226
    %1096 = vmatpush1.msra.mxu0 %v225
    %1097 = vmatprep.subr.mxu0 %v230
    %1098 = vmatpush1.msra.mxu0 %v229
    %1099 = vmatprep.subr.mxu0 0.0
    %1100 = vmatpush1.msra.mxu0 0.0
    %1101 = vmatprep.subr.mxu0 0.0
    %1102 = vmatpush1.msra.mxu0 0.0
    %1103 = vmatprep.subr.mxu0 0.0
    %1104 = vmatpush1.msra.mxu0 0.0
    %1105 = vmatprep.subr.mxu0 0.0
    %1106 = vmatpush1.msra.mxu0 0.0
    %1107 = vmatprep.subr.mxu0 0.0
    %1108 = vmatpush1.msra.mxu0 0.0
    %1109 = vmatprep.subr.mxu0 0.0
    %1110 = vmatpush1.msra.mxu0 0.0
    %1111 = vmatprep.subr.mxu0 0.0
    %1112 = vmatpush1.msra.mxu0 0.0
    %1113 = vmatprep.subr.mxu0 0.0
    %1114 = vmatpush1.msra.mxu0 0.0
    %1115 = vmatprep.subr.mxu0 0.0
    %1116 = vmatpush1.msra.mxu0 0.0
    %1117 = vmatprep.subr.mxu0 0.0
    %1118 = vmatpush1.msra.mxu0 0.0
    %1119 = vmatprep.subr.mxu0 0.0
    %1120 = vmatpush1.msra.mxu0 0.0
    %1121 = vmatprep.subr.mxu0 0.0
    %1122 = vmatpush1.msra.mxu0 0.0
    %1123 = vmatprep.subr.mxu0 0.0
    %1124 = vmatpush1.msra.mxu0 0.0
    %1125 = vmatprep.subr.mxu0 0.0
    %1126 = vmatpush1.msra.mxu0 0.0
    %1127 = vmatprep.subr.mxu0 0.0
    %1128 = vmatpush1.msra.mxu0 0.0
    %1129 = vmatprep.subr.mxu0 0.0
    %1130 = vmatpush1.msra.mxu0 0.0
    %1131 = vmatprep.mubr.f32.mxu0 0.0
    %1132 = vmatmul.mubr.f32.gmra.mrb[0].mxu0 %v1066
    %v1133 = vpop.f32.mrb[0].mxu0
    %v1134 = vadd.f32 %v732, %v1133
    %v1135 = vpop.f32.mrb[0].mxu0
    %v1136 = vadd.f32 %v736, %v1135
    %1137 = vdwg.mxu0
    %1138 = vmatprep.subr.mxu0 %v172
    %1139 = vmatpush1.msra.mxu0 %v171
    %1140 = vmatprep.subr.mxu0 %v176
    %1141 = vmatpush1.msra.mxu0 %v175
    %1142 = vmatprep.subr.mxu0 %v180
    %1143 = vmatpush1.msra.mxu0 %v179
    %1144 = vmatprep.subr.mxu0 %v184
    %1145 = vmatpush1.msra.mxu0 %v183
    %1146 = vmatprep.subr.mxu0 %v188
    %1147 = vmatpush1.msra.mxu0 %v187
    %1148 = vmatprep.subr.mxu0 %v192
    %1149 = vmatpush1.msra.mxu0 %v191
    %1150 = vmatprep.subr.mxu0 %v196
    %1151 = vmatpush1.msra.mxu0 %v195
    %1152 = vmatprep.subr.mxu0 %v200
    %1153 = vmatpush1.msra.mxu0 %v199
    %1154 = vmatprep.subr.mxu0 %v204
    %1155 = vmatpush1.msra.mxu0 %v203
    %1156 = vmatprep.subr.mxu0 %v208
    %1157 = vmatpush1.msra.mxu0 %v207
    %1158 = vmatprep.subr.mxu0 %v212
    %1159 = vmatpush1.msra.mxu0 %v211
    %1160 = vmatprep.subr.mxu0 %v216
    %1161 = vmatpush1.msra.mxu0 %v215
    %1162 = vmatprep.subr.mxu0 %v220
    %1163 = vmatpush1.msra.mxu0 %v219
    %1164 = vmatprep.subr.mxu0 %v224
    %1165 = vmatpush1.msra.mxu0 %v223
    %1166 = vmatprep.subr.mxu0 %v228
    %1167 = vmatpush1.msra.mxu0 %v227
    %1168 = vmatprep.subr.mxu0 %v232
    %1169 = vmatpush1.msra.mxu0 %v231
    %1170 = vmatprep.subr.mxu0 0.0
    %1171 = vmatpush1.msra.mxu0 0.0
    %1172 = vmatprep.subr.mxu0 0.0
    %1173 = vmatpush1.msra.mxu0 0.0
    %1174 = vmatprep.subr.mxu0 0.0
    %1175 = vmatpush1.msra.mxu0 0.0
    %1176 = vmatprep.subr.mxu0 0.0
    %1177 = vmatpush1.msra.mxu0 0.0
    %1178 = vmatprep.subr.mxu0 0.0
    %1179 = vmatpush1.msra.mxu0 0.0
    %1180 = vmatprep.subr.mxu0 0.0
    %1181 = vmatpush1.msra.mxu0 0.0
    %1182 = vmatprep.subr.mxu0 0.0
    %1183 = vmatpush1.msra.mxu0 0.0
    %1184 = vmatprep.subr.mxu0 0.0
    %1185 = vmatpush1.msra.mxu0 0.0
    %1186 = vmatprep.subr.mxu0 0.0
    %1187 = vmatpush1.msra.mxu0 0.0
    %1188 = vmatprep.subr.mxu0 0.0
    %1189 = vmatpush1.msra.mxu0 0.0
    %1190 = vmatprep.subr.mxu0 0.0
    %1191 = vmatpush1.msra.mxu0 0.0
    %1192 = vmatprep.subr.mxu0 0.0
    %1193 = vmatpush1.msra.mxu0 0.0
    %1194 = vmatprep.subr.mxu0 0.0
    %1195 = vmatpush1.msra.mxu0 0.0
    %1196 = vmatprep.subr.mxu0 0.0
    %1197 = vmatpush1.msra.mxu0 0.0
    %1198 = vmatprep.subr.mxu0 0.0
    %1199 = vmatpush1.msra.mxu0 0.0
    %1200 = vmatprep.subr.mxu0 0.0
    %1201 = vmatpush1.msra.mxu0 0.0
    %1202 = vmatprep.mubr.f32.mxu0 0.0
    %1203 = vmatmul.mubr.f32.gmra.mrb[0].mxu0 %v1066
    %v1204 = vpop.f32.mrb[0].mxu0
    %v1205 = vadd.f32 %v740, %v1204
    %v1206 = vpop.f32.mrb[0].mxu0
    %v1207 = vadd.f32 %v744, %v1206
    %1208 = vdwg.mxu0
    %v1209 = vtanh.pop %v1134
    %v1210 = vtanh.pop %v1136
    %v1211 = vtanh.pop %v1205
    %v1212 = vtanh.pop %v1207
    %v1213 = vmul.f32 %v1209, 0.5
    %v1214 = vadd.f32 %v1213, 0.5
    %v1215 = vmul.f32 %v1210, 0.5
    %v1216 = vadd.f32 %v1215, 0.5
    %v1217 = vmul.f32 %v1212, 0.5
    %v1218 = vadd.f32 %v1217, 0.5
    %v1219 = vmul.f32 %v1216, %v1064
    %v1220 = vmul.f32 %v1214, %v1211
    %v1221 = vadd.f32 %v1219, %v1220
    %v1222 = vtanh.pop %v1221
    %v1223 = vmul.f32 %v1218, %v1222
    %1224 = vmatprep.subr.mxu0 %v40
    %1225 = vmatpush1.msra.mxu0 %v39
    %1226 = vmatprep.subr.mxu0 %v44
    %1227 = vmatpush1.msra.mxu0 %v43
    %1228 = vmatprep.subr.mxu0 %v48
    %1229 = vmatpush1.msra.mxu0 %v47
    %1230 = vmatprep.subr.mxu0 %v52
    %1231 = vmatpush1.msra.mxu0 %v51
    %1232 = vmatprep.subr.mxu0 %v56
    %1233 = vmatpush1.msra.mxu0 %v55
    %1234 = vmatprep.subr.mxu0 %v60
    %1235 = vmatpush1.msra.mxu0 %v59
    %1236 = vmatprep.subr.mxu0 %v64
    %1237 = vmatpush1.msra.mxu0 %v63
    %1238 = vmatprep.subr.mxu0 %v68
    %1239 = vmatpush1.msra.mxu0 %v67
    %1240 = vmatprep.subr.mxu0 %v72
    %1241 = vmatpush1.msra.mxu0 %v71
    %1242 = vmatprep.subr.mxu0 %v76
    %1243 = vmatpush1.msra.mxu0 %v75
    %1244 = vmatprep.subr.mxu0 %v80
    %1245 = vmatpush1.msra.mxu0 %v79
    %1246 = vmatprep.subr.mxu0 %v84
    %1247 = vmatpush1.msra.mxu0 %v83
    %1248 = vmatprep.subr.mxu0 %v88
    %1249 = vmatpush1.msra.mxu0 %v87
    %1250 = vmatprep.subr.mxu0 %v92
    %1251 = vmatpush1.msra.mxu0 %v91
    %1252 = vmatprep.subr.mxu0 %v96
    %1253 = vmatpush1.msra.mxu0 %v95
    %1254 = vmatprep.subr.mxu0 %v100
    %1255 = vmatpush1.msra.mxu0 %v99
    %1256 = vmatprep.subr.mxu0 0.0
    %1257 = vmatpush1.msra.mxu0 0.0
    %1258 = vmatprep.subr.mxu0 0.0
    %1259 = vmatpush1.msra.mxu0 0.0
    %1260 = vmatprep.subr.mxu0 0.0
    %1261 = vmatpush1.msra.mxu0 0.0
    %1262 = vmatprep.subr.mxu0 0.0
    %1263 = vmatpush1.msra.mxu0 0.0
    %1264 = vmatprep.subr.mxu0 0.0
    %1265 = vmatpush1.msra.mxu0 0.0
    %1266 = vmatprep.subr.mxu0 0.0
    %1267 = vmatpush1.msra.mxu0 0.0
    %1268 = vmatprep.subr.mxu0 0.0
    %1269 = vmatpush1.msra.mxu0 0.0
    %1270 = vmatprep.subr.mxu0 0.0
    %1271 = vmatpush1.msra.mxu0 0.0
    %1272 = vmatprep.subr.mxu0 0.0
    %1273 = vmatpush1.msra.mxu0 0.0
    %1274 = vmatprep.subr.mxu0 0.0
    %1275 = vmatpush1.msra.mxu0 0.0
    %1276 = vmatprep.subr.mxu0 0.0
    %1277 = vmatpush1.msra.mxu0 0.0
    %1278 = vmatprep.subr.mxu0 0.0
    %1279 = vmatpush1.msra.mxu0 0.0
    %1280 = vmatprep.subr.mxu0 0.0
    %1281 = vmatpush1.msra.mxu0 0.0
    %1282 = vmatprep.subr.mxu0 0.0
    %1283 = vmatpush1.msra.mxu0 0.0
    %1284 = vmatprep.subr.mxu0 0.0
    %1285 = vmatpush1.msra.mxu0 0.0
    %1286 = vmatprep.subr.mxu0 0.0
    %1287 = vmatpush1.msra.mxu0 0.0
    %1288 = vmatprep.mubr.f32.mxu0 0.0
    %1289 = vmatmul.mubr.f32.gmra.mrb[0].mxu0 %v1223
    %v1290 = vpop.f32.mrb[0].mxu0
    %v1291 = vadd.f32 0.0, %v1290
    %v1292 = vpop.f32.mrb[0].mxu0
    %v1293 = vadd.f32 0.0, %v1292
    %1294 = vdwg.mxu0
    %1295 = vmatprep.subr.mxu0 %v42
    %1296 = vmatpush1.msra.mxu0 %v41
    %1297 = vmatprep.subr.mxu0 %v46
    %1298 = vmatpush1.msra.mxu0 %v45
    %1299 = vmatprep.subr.mxu0 %v50
    %1300 = vmatpush1.msra.mxu0 %v49
    %1301 = vmatprep.subr.mxu0 %v54
    %1302 = vmatpush1.msra.mxu0 %v53
    %1303 = vmatprep.subr.mxu0 %v58
    %1304 = vmatpush1.msra.mxu0 %v57
    %1305 = vmatprep.subr.mxu0 %v62
    %1306 = vmatpush1.msra.mxu0 %v61
    %1307 = vmatprep.subr.mxu0 %v66
    %1308 = vmatpush1.msra.mxu0 %v65
    %1309 = vmatprep.subr.mxu0 %v70
    %1310 = vmatpush1.msra.mxu0 %v69
    %1311 = vmatprep.subr.mxu0 %v74
    %1312 = vmatpush1.msra.mxu0 %v73
    %1313 = vmatprep.subr.mxu0 %v78
    %1314 = vmatpush1.msra.mxu0 %v77
    %1315 = vmatprep.subr.mxu0 %v82
    %1316 = vmatpush1.msra.mxu0 %v81
    %1317 = vmatprep.subr.mxu0 %v86
    %1318 = vmatpush1.msra.mxu0 %v85
    %1319 = vmatprep.subr.mxu0 %v90
    %1320 = vmatpush1.msra.mxu0 %v89
    %1321 = vmatprep.subr.mxu0 %v94
    %1322 = vmatpush1.msra.mxu0 %v93
    %1323 = vmatprep.subr.mxu0 %v98
    %1324 = vmatpush1.msra.mxu0 %v97
    %1325 = vmatprep.subr.mxu0 %v102
    %1326 = vmatpush1.msra.mxu0 %v101
    %1327 = vmatprep.subr.mxu0 0.0
    %1328 = vmatpush1.msra.mxu0 0.0
    %1329 = vmatprep.subr.mxu0 0.0
    %1330 = vmatpush1.msra.mxu0 0.0
    %1331 = vmatprep.subr.mxu0 0.0
    %1332 = vmatpush1.msra.mxu0 0.0
    %1333 = vmatprep.subr.mxu0 0.0
    %1334 = vmatpush1.msra.mxu0 0.0
    %1335 = vmatprep.subr.mxu0 0.0
    %1336 = vmatpush1.msra.mxu0 0.0
    %1337 = vmatprep.subr.mxu0 0.0
    %1338 = vmatpush1.msra.mxu0 0.0
    %1339 = vmatprep.subr.mxu0 0.0
    %1340 = vmatpush1.msra.mxu0 0.0
    %1341 = vmatprep.subr.mxu0 0.0
    %1342 = vmatpush1.msra.mxu0 0.0
    %1343 = vmatprep.subr.mxu0 0.0
    %1344 = vmatpush1.msra.mxu0 0.0
    %1345 = vmatprep.subr.mxu0 0.0
    %1346 = vmatpush1.msra.mxu0 0.0
    %1347 = vmatprep.subr.mxu0 0.0
    %1348 = vmatpush1.msra.mxu0 0.0
    %1349 = vmatprep.subr.mxu0 0.0
    %1350 = vmatpush1.msra.mxu0 0.0
    %1351 = vmatprep.subr.mxu0 0.0
    %1352 = vmatpush1.msra.mxu0 0.0
    %1353 = vmatprep.subr.mxu0 0.0
    %1354 = vmatpush1.msra.mxu0 0.0
    %1355 = vmatprep.subr.mxu0 0.0
    %1356 = vmatpush1.msra.mxu0 0.0
    %1357 = vmatprep.subr.mxu0 0.0
    %1358 = vmatpush1.msra.mxu0 0.0
    %1359 = vmatprep.mubr.f32.mxu0 0.0
    %1360 = vmatmul.mubr.f32.gmra.mrb[0].mxu0 %v1223
    %v1361 = vpop.f32.mrb[0].mxu0
    %v1362 = vadd.f32 0.0, %v1361
    %v1363 = vpop.f32.mrb[0].mxu0
    %v1364 = vadd.f32 0.0, %v1363
    %1365 = vdwg.mxu0
    %v1366 = vadd.f32 %v503, %v1291
    %v1367 = vadd.f32 %v504, %v1293
    %v1368 = vadd.f32 %v505, %v1362
    %v1369 = vadd.f32 %v506, %v1364
    %v1370 = vtanh.pop %v1366
    %v1371 = vtanh.pop %v1367
    %v1372 = vtanh.pop %v1368
    %v1373 = vtanh.pop %v1369
    %v1374 = vmul.f32 %v1370, 0.5
    %v1375 = vadd.f32 %v1374, 0.5
    %v1376 = vmul.f32 %v1371, 0.5
    %v1377 = vadd.f32 %v1376, 0.5
    %v1378 = vmul.f32 %v1373, 0.5
    %v1379 = vadd.f32 %v1378, 0.5
    %v1380 = vmul.f32 %v1377, %v1221
    %v1381 = vmul.f32 %v1375, %v1372
    %v1382 = vadd.f32 %v1380, %v1381
    %v1383 = vtanh.pop %v1382
    %v1384 = vmul.f32 %v1379, %v1383
    %1385 = vmatprep.subr.mxu0 %v170
    %1386 = vmatpush1.msra.mxu0 %v169
    %1387 = vmatprep.subr.mxu0 %v174
    %1388 = vmatpush1.msra.mxu0 %v173
    %1389 = vmatprep.subr.mxu0 %v178
    %1390 = vmatpush1.msra.mxu0 %v177
    %1391 = vmatprep.subr.mxu0 %v182
    %1392 = vmatpush1.msra.mxu0 %v181
    %1393 = vmatprep.subr.mxu0 %v186
    %1394 = vmatpush1.msra.mxu0 %v185
    %1395 = vmatprep.subr.mxu0 %v190
    %1396 = vmatpush1.msra.mxu0 %v189
    %1397 = vmatprep.subr.mxu0 %v194
    %1398 = vmatpush1.msra.mxu0 %v193
    %1399 = vmatprep.subr.mxu0 %v198
    %1400 = vmatpush1.msra.mxu0 %v197
    %1401 = vmatprep.subr.mxu0 %v202
    %1402 = vmatpush1.msra.mxu0 %v201
    %1403 = vmatprep.subr.mxu0 %v206
    %1404 = vmatpush1.msra.mxu0 %v205
    %1405 = vmatprep.subr.mxu0 %v210
    %1406 = vmatpush1.msra.mxu0 %v209
    %1407 = vmatprep.subr.mxu0 %v214
    %1408 = vmatpush1.msra.mxu0 %v213
    %1409 = vmatprep.subr.mxu0 %v218
    %1410 = vmatpush1.msra.mxu0 %v217
    %1411 = vmatprep.subr.mxu0 %v222
    %1412 = vmatpush1.msra.mxu0 %v221
    %1413 = vmatprep.subr.mxu0 %v226
    %1414 = vmatpush1.msra.mxu0 %v225
    %1415 = vmatprep.subr.mxu0 %v230
    %1416 = vmatpush1.msra.mxu0 %v229
    %1417 = vmatprep.subr.mxu0 0.0
    %1418 = vmatpush1.msra.mxu0 0.0
    %1419 = vmatprep.subr.mxu0 0.0
    %1420 = vmatpush1.msra.mxu0 0.0
    %1421 = vmatprep.subr.mxu0 0.0
    %1422 = vmatpush1.msra.mxu0 0.0
    %1423 = vmatprep.subr.mxu0 0.0
    %1424 = vmatpush1.msra.mxu0 0.0
    %1425 = vmatprep.subr.mxu0 0.0
    %1426 = vmatpush1.msra.mxu0 0.0
    %1427 = vmatprep.subr.mxu0 0.0
    %1428 = vmatpush1.msra.mxu0 0.0
    %1429 = vmatprep.subr.mxu0 0.0
    %1430 = vmatpush1.msra.mxu0 0.0
    %1431 = vmatprep.subr.mxu0 0.0
    %1432 = vmatpush1.msra.mxu0 0.0
    %1433 = vmatprep.subr.mxu0 0.0
    %1434 = vmatpush1.msra.mxu0 0.0
    %1435 = vmatprep.subr.mxu0 0.0
    %1436 = vmatpush1.msra.mxu0 0.0
    %1437 = vmatprep.subr.mxu0 0.0
    %1438 = vmatpush1.msra.mxu0 0.0
    %1439 = vmatprep.subr.mxu0 0.0
    %1440 = vmatpush1.msra.mxu0 0.0
    %1441 = vmatprep.subr.mxu0 0.0
    %1442 = vmatpush1.msra.mxu0 0.0
    %1443 = vmatprep.subr.mxu0 0.0
    %1444 = vmatpush1.msra.mxu0 0.0
    %1445 = vmatprep.subr.mxu0 0.0
    %1446 = vmatpush1.msra.mxu0 0.0
    %1447 = vmatprep.subr.mxu0 0.0
    %1448 = vmatpush1.msra.mxu0 0.0
    %1449 = vmatprep.mubr.f32.mxu0 0.0
    %1450 = vmatmul.mubr.f32.gmra.mrb[0].mxu0 %v1384
    %v1451 = vpop.f32.mrb[0].mxu0
    %v1452 = vadd.f32 %v732, %v1451
    %v1453 = vpop.f32.mrb[0].mxu0
    %v1454 = vadd.f32 %v736, %v1453
    %1455 = vdwg.mxu0
    %1456 = vmatprep.subr.mxu0 %v172
    %1457 = vmatpush1.msra.mxu0 %v171
    %1458 = vmatprep.subr.mxu0 %v176
    %1459 = vmatpush1.msra.mxu0 %v175
    %1460 = vmatprep.subr.mxu0 %v180
    %1461 = vmatpush1.msra.mxu0 %v179
    %1462 = vmatprep.subr.mxu0 %v184
    %1463 = vmatpush1.msra.mxu0 %v183
    %1464 = vmatprep.subr.mxu0 %v188
    %1465 = vmatpush1.msra.mxu0 %v187
    %1466 = vmatprep.subr.mxu0 %v192
    %1467 = vmatpush1.msra.mxu0 %v191
    %1468 = vmatprep.subr.mxu0 %v196
    %1469 = vmatpush1.msra.mxu0 %v195
    %1470 = vmatprep.subr.mxu0 %v200
    %1471 = vmatpush1.msra.mxu0 %v199
    %1472 = vmatprep.subr.mxu0 %v204
    %1473 = vmatpush1.msra.mxu0 %v203
    %1474 = vmatprep.subr.mxu0 %v208
    %1475 = vmatpush1.msra.mxu0 %v207
    %1476 = vmatprep.subr.mxu0 %v212
    %1477 = vmatpush1.msra.mxu0 %v211
    %1478 = vmatprep.subr.mxu0 %v216
    %1479 = vmatpush1.msra.mxu0 %v215
    %1480 = vmatprep.subr.mxu0 %v220
    %1481 = vmatpush1.msra.mxu0 %v219
    %1482 = vmatprep.subr.mxu0 %v224
    %1483 = vmatpush1.msra.mxu0 %v223
    %1484 = vmatprep.subr.mxu0 %v228
    %1485 = vmatpush1.msra.mxu0 %v227
    %1486 = vmatprep.subr.mxu0 %v232
    %1487 = vmatpush1.msra.mxu0 %v231
    %1488 = vmatprep.subr.mxu0 0.0
    %1489 = vmatpush1.msra.mxu0 0.0
    %1490 = vmatprep.subr.mxu0 0.0
    %1491 = vmatpush1.msra.mxu0 0.0
    %1492 = vmatprep.subr.mxu0 0.0
    %1493 = vmatpush1.msra.mxu0 0.0
    %1494 = vmatprep.subr.mxu0 0.0
    %1495 = vmatpush1.msra.mxu0 0.0
    %1496 = vmatprep.subr.mxu0 0.0
    %1497 = vmatpush1.msra.mxu0 0.0
    %1498 = vmatprep.subr.mxu0 0.0
    %1499 = vmatpush1.msra.mxu0 0.0
    %1500 = vmatprep.subr.mxu0 0.0
    %1501 = vmatpush1.msra.mxu0 0.0
    %1502 = vmatprep.subr.mxu0 0.0
    %1503 = vmatpush1.msra.mxu0 0.0
    %1504 = vmatprep.subr.mxu0 0.0
    %1505 = vmatpush1.msra.mxu0 0.0
    %1506 = vmatprep.subr.mxu0 0.0
    %1507 = vmatpush1.msra.mxu0 0.0
    %1508 = vmatprep.subr.mxu0 0.0
    %1509 = vmatpush1.msra.mxu0 0.0
    %1510 = vmatprep.subr.mxu0 0.0
    %1511 = vmatpush1.msra.mxu0 0.0
    %1512 = vmatprep.subr.mxu0 0.0
    %1513 = vmatpush1.msra.mxu0 0.0
    %1514 = vmatprep.subr.mxu0 0.0
    %1515 = vmatpush1.msra.mxu0 0.0
    %1516 = vmatprep.subr.mxu0 0.0
    %1517 = vmatpush1.msra.mxu0 0.0
    %1518 = vmatprep.subr.mxu0 0.0
    %1519 = vmatpush1.msra.mxu0 0.0
    %1520 = vmatprep.mubr.f32.mxu0 0.0
    %1521 = vmatmul.mubr.f32.gmra.mrb[0].mxu0 %v1384
    %v1522 = vpop.f32.mrb[0].mxu0
    %v1523 = vadd.f32 %v740, %v1522
    %v1524 = vpop.f32.mrb[0].mxu0
    %v1525 = vadd.f32 %v744, %v1524
    %1526 = vdwg.mxu0
    %v1527 = vtanh.pop %v1452
    %v1528 = vtanh.pop %v1454
    %v1529 = vtanh.pop %v1523
    %v1530 = vtanh.pop %v1525
    %v1531 = vmul.f32 %v1527, 0.5
    %v1532 = vadd.f32 %v1531, 0.5
    %v1533 = vmul.f32 %v1528, 0.5
    %v1534 = vadd.f32 %v1533, 0.5
    %v1535 = vmul.f32 %v1530, 0.5
    %v1536 = vadd.f32 %v1535, 0.5
    %v1537 = vmul.f32 %v1534, %v1382
    %v1538 = vmul.f32 %v1532, %v1529
    %v1539 = vadd.f32 %v1537, %v1538
    %v1540 = vtanh.pop %v1539
    %v1541 = vmul.f32 %v1536, %v1540
    %1542 = vmatprep.subr.mxu0 %v40
    %1543 = vmatpush1.msra.mxu0 %v39
    %1544 = vmatprep.subr.mxu0 %v44
    %1545 = vmatpush1.msra.mxu0 %v43
    %1546 = vmatprep.subr.mxu0 %v48
    %1547 = vmatpush1.msra.mxu0 %v47
    %1548 = vmatprep.subr.mxu0 %v52
    %1549 = vmatpush1.msra.mxu0 %v51
    %1550 = vmatprep.subr.mxu0 %v56
    %1551 = vmatpush1.msra.mxu0 %v55
    %1552 = vmatprep.subr.mxu0 %v60
    %1553 = vmatpush1.msra.mxu0 %v59
    %1554 = vmatprep.subr.mxu0 %v64
    %1555 = vmatpush1.msra.mxu0 %v63
    %1556 = vmatprep.subr.mxu0 %v68
    %1557 = vmatpush1.msra.mxu0 %v67
    %1558 = vmatprep.subr.mxu0 %v72
    %1559 = vmatpush1.msra.mxu0 %v71
    %1560 = vmatprep.subr.mxu0 %v76
    %1561 = vmatpush1.msra.mxu0 %v75
    %1562 = vmatprep.subr.mxu0 %v80
    %1563 = vmatpush1.msra.mxu0 %v79
    %1564 = vmatprep.subr.mxu0 %v84
    %1565 = vmatpush1.msra.mxu0 %v83
    %1566 = vmatprep.subr.mxu0 %v88
    %1567 = vmatpush1.msra.mxu0 %v87
    %1568 = vmatprep.subr.mxu0 %v92
    %1569 = vmatpush1.msra.mxu0 %v91
    %1570 = vmatprep.subr.mxu0 %v96
    %1571 = vmatpush1.msra.mxu0 %v95
    %1572 = vmatprep.subr.mxu0 %v100
    %1573 = vmatpush1.msra.mxu0 %v99
    %1574 = vmatprep.subr.mxu0 0.0
    %1575 = vmatpush1.msra.mxu0 0.0
    %1576 = vmatprep.subr.mxu0 0.0
    %1577 = vmatpush1.msra.mxu0 0.0
    %1578 = vmatprep.subr.mxu0 0.0
    %1579 = vmatpush1.msra.mxu0 0.0
    %1580 = vmatprep.subr.mxu0 0.0
    %1581 = vmatpush1.msra.mxu0 0.0
    %1582 = vmatprep.subr.mxu0 0.0
    %1583 = vmatpush1.msra.mxu0 0.0
    %1584 = vmatprep.subr.mxu0 0.0
    %1585 = vmatpush1.msra.mxu0 0.0
    %1586 = vmatprep.subr.mxu0 0.0
    %1587 = vmatpush1.msra.mxu0 0.0
    %1588 = vmatprep.subr.mxu0 0.0
    %1589 = vmatpush1.msra.mxu0 0.0
    %1590 = vmatprep.subr.mxu0 0.0
    %1591 = vmatpush1.msra.mxu0 0.0
    %1592 = vmatprep.subr.mxu0 0.0
    %1593 = vmatpush1.msra.mxu0 0.0
    %1594 = vmatprep.subr.mxu0 0.0
    %1595 = vmatpush1.msra.mxu0 0.0
    %1596 = vmatprep.subr.mxu0 0.0
    %1597 = vmatpush1.msra.mxu0 0.0
    %1598 = vmatprep.subr.mxu0 0.0
    %1599 = vmatpush1.msra.mxu0 0.0
    %1600 = vmatprep.subr.mxu0 0.0
    %1601 = vmatpush1.msra.mxu0 0.0
    %1602 = vmatprep.subr.mxu0 0.0
    %1603 = vmatpush1.msra.mxu0 0.0
    %1604 = vmatprep.subr.mxu0 0.0
    %1605 = vmatpush1.msra.mxu0 0.0
    %1606 = vmatprep.mubr.f32.mxu0 0.0
    %1607 = vmatmul.mubr.f32.gmra.mrb[0].mxu0 %v1541
    %v1608 = vpop.f32.mrb[0].mxu0
    %v1609 = vadd.f32 0.0, %v1608
    %v1610 = vpop.f32.mrb[0].mxu0
    %v1611 = vadd.f32 0.0, %v1610
    %1612 = vdwg.mxu0
    %1613 = vmatprep.subr.mxu0 %v42
    %1614 = vmatpush1.msra.mxu0 %v41
    %1615 = vmatprep.subr.mxu0 %v46
    %1616 = vmatpush1.msra.mxu0 %v45
    %1617 = vmatprep.subr.mxu0 %v50
    %1618 = vmatpush1.msra.mxu0 %v49
    %1619 = vmatprep.subr.mxu0 %v54
    %1620 = vmatpush1.msra.mxu0 %v53
    %1621 = vmatprep.subr.mxu0 %v58
    %1622 = vmatpush1.msra.mxu0 %v57
    %1623 = vmatprep.subr.mxu0 %v62
    %1624 = vmatpush1.msra.mxu0 %v61
    %1625 = vmatprep.subr.mxu0 %v66
    %1626 = vmatpush1.msra.mxu0 %v65
    %1627 = vmatprep.subr.mxu0 %v70
    %1628 = vmatpush1.msra.mxu0 %v69
    %1629 = vmatprep.subr.mxu0 %v74
    %1630 = vmatpush1.msra.mxu0 %v73
    %1631 = vmatprep.subr.mxu0 %v78
    %1632 = vmatpush1.msra.mxu0 %v77
    %1633 = vmatprep.subr.mxu0 %v82
    %1634 = vmatpush1.msra.mxu0 %v81
    %1635 = vmatprep.subr.mxu0 %v86
    %1636 = vmatpush1.msra.mxu0 %v85
    %1637 = vmatprep.subr.mxu0 %v90
    %1638 = vmatpush1.msra.mxu0 %v89
    %1639 = vmatprep.subr.mxu0 %v94
    %1640 = vmatpush1.msra.mxu0 %v93
    %1641 = vmatprep.subr.mxu0 %v98
    %1642 = vmatpush1.msra.mxu0 %v97
    %1643 = vmatprep.subr.mxu0 %v102
    %1644 = vmatpush1.msra.mxu0 %v101
    %1645 = vmatprep.subr.mxu0 0.0
    %1646 = vmatpush1.msra.mxu0 0.0
    %1647 = vmatprep.subr.mxu0 0.0
    %1648 = vmatpush1.msra.mxu0 0.0
    %1649 = vmatprep.subr.mxu0 0.0
    %1650 = vmatpush1.msra.mxu0 0.0
    %1651 = vmatprep.subr.mxu0 0.0
    %1652 = vmatpush1.msra.mxu0 0.0
    %1653 = vmatprep.subr.mxu0 0.0
    %1654 = vmatpush1.msra.mxu0 0.0
    %1655 = vmatprep.subr.mxu0 0.0
    %1656 = vmatpush1.msra.mxu0 0.0
    %1657 = vmatprep.subr.mxu0 0.0
    %1658 = vmatpush1.msra.mxu0 0.0
    %1659 = vmatprep.subr.mxu0 0.0
    %1660 = vmatpush1.msra.mxu0 0.0
    %1661 = vmatprep.subr.mxu0 0.0
    %1662 = vmatpush1.msra.mxu0 0.0
    %1663 = vmatprep.subr.mxu0 0.0
    %1664 = vmatpush1.msra.mxu0 0.0
    %1665 = vmatprep.subr.mxu0 0.0
    %1666 = vmatpush1.msra.mxu0 0.0
    %1667 = vmatprep.subr.mxu0 0.0
    %1668 = vmatpush1.msra.mxu0 0.0
    %1669 = vmatprep.subr.mxu0 0.0
    %1670 = vmatpush1.msra.mxu0 0.0
    %1671 = vmatprep.subr.mxu0 0.0
    %1672 = vmatpush1.msra.mxu0 0.0
    %1673 = vmatprep.subr.mxu0 0.0
    %1674 = vmatpush1.msra.mxu0 0.0
    %1675 = vmatprep.subr.mxu0 0.0
    %1676 = vmatpush1.msra.mxu0 0.0
    %1677 = vmatprep.mubr.f32.mxu0 0.0
    %1678 = vmatmul.mubr.f32.gmra.mrb[0].mxu0 %v1541
    %v1679 = vpop.f32.mrb[0].mxu0
    %v1680 = vadd.f32 0.0, %v1679
    %v1681 = vpop.f32.mrb[0].mxu0
    %v1682 = vadd.f32 0.0, %v1681
    %1683 = vdwg.mxu0
    %v1684 = vadd.f32 %v515, %v1609
    %v1685 = vadd.f32 %v516, %v1611
    %v1686 = vadd.f32 %v517, %v1680
    %v1687 = vadd.f32 %v518, %v1682
    %v1688 = vtanh.pop %v1684
    %v1689 = vtanh.pop %v1685
    %v1690 = vtanh.pop %v1686
    %v1691 = vtanh.pop %v1687
    %v1692 = vmul.f32 %v1688, 0.5
    %v1693 = vadd.f32 %v1692, 0.5
    %v1694 = vmul.f32 %v1689, 0.5
    %v1695 = vadd.f32 %v1694, 0.5
    %v1696 = vmul.f32 %v1691, 0.5
    %v1697 = vadd.f32 %v1696, 0.5
    %v1698 = vmul.f32 %v1695, %v1539
    %v1699 = vmul.f32 %v1693, %v1690
    %v1700 = vadd.f32 %v1698, %v1699
    %v1701 = vtanh.pop %v1700
    %v1702 = vmul.f32 %v1697, %v1701
    %1703 = vmatprep.subr.mxu0 %v170
    %1704 = vmatpush1.msra.mxu0 %v169
    %1705 = vmatprep.subr.mxu0 %v174
    %1706 = vmatpush1.msra.mxu0 %v173
    %1707 = vmatprep.subr.mxu0 %v178
    %1708 = vmatpush1.msra.mxu0 %v177
    %1709 = vmatprep.subr.mxu0 %v182
    %1710 = vmatpush1.msra.mxu0 %v181
    %1711 = vmatprep.subr.mxu0 %v186
    %1712 = vmatpush1.msra.mxu0 %v185
    %1713 = vmatprep.subr.mxu0 %v190
    %1714 = vmatpush1.msra.mxu0 %v189
    %1715 = vmatprep.subr.mxu0 %v194
    %1716 = vmatpush1.msra.mxu0 %v193
    %1717 = vmatprep.subr.mxu0 %v198
    %1718 = vmatpush1.msra.mxu0 %v197
    %1719 = vmatprep.subr.mxu0 %v202
    %1720 = vmatpush1.msra.mxu0 %v201
    %1721 = vmatprep.subr.mxu0 %v206
    %1722 = vmatpush1.msra.mxu0 %v205
    %1723 = vmatprep.subr.mxu0 %v210
    %1724 = vmatpush1.msra.mxu0 %v209
    %1725 = vmatprep.subr.mxu0 %v214
    %1726 = vmatpush1.msra.mxu0 %v213
    %1727 = vmatprep.subr.mxu0 %v218
    %1728 = vmatpush1.msra.mxu0 %v217
    %1729 = vmatprep.subr.mxu0 %v222
    %1730 = vmatpush1.msra.mxu0 %v221
    %1731 = vmatprep.subr.mxu0 %v226
    %1732 = vmatpush1.msra.mxu0 %v225
    %1733 = vmatprep.subr.mxu0 %v230
    %1734 = vmatpush1.msra.mxu0 %v229
    %1735 = vmatprep.subr.mxu0 0.0
    %1736 = vmatpush1.msra.mxu0 0.0
    %1737 = vmatprep.subr.mxu0 0.0
    %1738 = vmatpush1.msra.mxu0 0.0
    %1739 = vmatprep.subr.mxu0 0.0
    %1740 = vmatpush1.msra.mxu0 0.0
    %1741 = vmatprep.subr.mxu0 0.0
    %1742 = vmatpush1.msra.mxu0 0.0
    %1743 = vmatprep.subr.mxu0 0.0
    %1744 = vmatpush1.msra.mxu0 0.0
    %1745 = vmatprep.subr.mxu0 0.0
    %1746 = vmatpush1.msra.mxu0 0.0
    %1747 = vmatprep.subr.mxu0 0.0
    %1748 = vmatpush1.msra.mxu0 0.0
    %1749 = vmatprep.subr.mxu0 0.0
    %1750 = vmatpush1.msra.mxu0 0.0
    %1751 = vmatprep.subr.mxu0 0.0
    %1752 = vmatpush1.msra.mxu0 0.0
    %1753 = vmatprep.subr.mxu0 0.0
    %1754 = vmatpush1.msra.mxu0 0.0
    %1755 = vmatprep.subr.mxu0 0.0
    %1756 = vmatpush1.msra.mxu0 0.0
    %1757 = vmatprep.subr.mxu0 0.0
    %1758 = vmatpush1.msra.mxu0 0.0
    %1759 = vmatprep.subr.mxu0 0.0
    %1760 = vmatpush1.msra.mxu0 0.0
    %1761 = vmatprep.subr.mxu0 0.0
    %1762 = vmatpush1.msra.mxu0 0.0
    %1763 = vmatprep.subr.mxu0 0.0
    %1764 = vmatpush1.msra.mxu0 0.0
    %1765 = vmatprep.subr.mxu0 0.0
    %1766 = vmatpush1.msra.mxu0 0.0
    %1767 = vmatprep.mubr.f32.mxu0 0.0
    %1768 = vmatmul.mubr.f32.gmra.mrb[0].mxu0 %v1702
    %v1769 = vpop.f32.mrb[0].mxu0
    %v1770 = vadd.f32 %v732, %v1769
    %v1771 = vpop.f32.mrb[0].mxu0
    %v1772 = vadd.f32 %v736, %v1771
    %1773 = vdwg.mxu0
    %1774 = vmatprep.subr.mxu0 %v172
    %1775 = vmatpush1.msra.mxu0 %v171
    %1776 = vmatprep.subr.mxu0 %v176
    %1777 = vmatpush1.msra.mxu0 %v175
    %1778 = vmatprep.subr.mxu0 %v180
    %1779 = vmatpush1.msra.mxu0 %v179
    %1780 = vmatprep.subr.mxu0 %v184
    %1781 = vmatpush1.msra.mxu0 %v183
    %1782 = vmatprep.subr.mxu0 %v188
    %1783 = vmatpush1.msra.mxu0 %v187
    %1784 = vmatprep.subr.mxu0 %v192
    %1785 = vmatpush1.msra.mxu0 %v191
    %1786 = vmatprep.subr.mxu0 %v196
    %1787 = vmatpush1.msra.mxu0 %v195
    %1788 = vmatprep.subr.mxu0 %v200
    %1789 = vmatpush1.msra.mxu0 %v199
    %1790 = vmatprep.subr.mxu0 %v204
    %1791 = vmatpush1.msra.mxu0 %v203
    %1792 = vmatprep.subr.mxu0 %v208
    %1793 = vmatpush1.msra.mxu0 %v207
    %1794 = vmatprep.subr.mxu0 %v212
    %1795 = vmatpush1.msra.mxu0 %v211
    %1796 = vmatprep.subr.mxu0 %v216
    %1797 = vmatpush1.msra.mxu0 %v215
    %1798 = vmatprep.subr.mxu0 %v220
    %1799 = vmatpush1.msra.mxu0 %v219
    %1800 = vmatprep.subr.mxu0 %v224
    %1801 = vmatpush1.msra.mxu0 %v223
    %1802 = vmatprep.subr.mxu0 %v228
    %1803 = vmatpush1.msra.mxu0 %v227
    %1804 = vmatprep.subr.mxu0 %v232
    %1805 = vmatpush1.msra.mxu0 %v231
    %1806 = vmatprep.subr.mxu0 0.0
    %1807 = vmatpush1.msra.mxu0 0.0
    %1808 = vmatprep.subr.mxu0 0.0
    %1809 = vmatpush1.msra.mxu0 0.0
    %1810 = vmatprep.subr.mxu0 0.0
    %1811 = vmatpush1.msra.mxu0 0.0
    %1812 = vmatprep.subr.mxu0 0.0
    %1813 = vmatpush1.msra.mxu0 0.0
    %1814 = vmatprep.subr.mxu0 0.0
    %1815 = vmatpush1.msra.mxu0 0.0
    %1816 = vmatprep.subr.mxu0 0.0
    %1817 = vmatpush1.msra.mxu0 0.0
    %1818 = vmatprep.subr.mxu0 0.0
    %1819 = vmatpush1.msra.mxu0 0.0
    %1820 = vmatprep.subr.mxu0 0.0
    %1821 = vmatpush1.msra.mxu0 0.0
    %1822 = vmatprep.subr.mxu0 0.0
    %1823 = vmatpush1.msra.mxu0 0.0
    %1824 = vmatprep.subr.mxu0 0.0
    %1825 = vmatpush1.msra.mxu0 0.0
    %1826 = vmatprep.subr.mxu0 0.0
    %1827 = vmatpush1.msra.mxu0 0.0
    %1828 = vmatprep.subr.mxu0 0.0
    %1829 = vmatpush1.msra.mxu0 0.0
    %1830 = vmatprep.subr.mxu0 0.0
    %1831 = vmatpush1.msra.mxu0 0.0
    %1832 = vmatprep.subr.mxu0 0.0
    %1833 = vmatpush1.msra.mxu0 0.0
    %1834 = vmatprep.subr.mxu0 0.0
    %1835 = vmatpush1.msra.mxu0 0.0
    %1836 = vmatprep.subr.mxu0 0.0
    %1837 = vmatpush1.msra.mxu0 0.0
    %1838 = vmatprep.mubr.f32.mxu0 0.0
    %1839 = vmatmul.mubr.f32.gmra.mrb[0].mxu0 %v1702
    %v1840 = vpop.f32.mrb[0].mxu0
    %v1841 = vadd.f32 %v740, %v1840
    %v1842 = vpop.f32.mrb[0].mxu0
    %v1843 = vadd.f32 %v744, %v1842
    %1844 = vdwg.mxu0
    %v1845 = vtanh.pop %v1770
    %v1846 = vtanh.pop %v1772
    %v1847 = vtanh.pop %v1841
    %v1848 = vtanh.pop %v1843
    %v1849 = vmul.f32 %v1845, 0.5
    %v1850 = vadd.f32 %v1849, 0.5
    %v1851 = vmul.f32 %v1846, 0.5
    %v1852 = vadd.f32 %v1851, 0.5
    %v1853 = vmul.f32 %v1848, 0.5
    %v1854 = vadd.f32 %v1853, 0.5
    %v1855 = vmul.f32 %v1852, %v1700
    %v1856 = vmul.f32 %v1850, %v1847
    %v1857 = vadd.f32 %v1855, %v1856
    %v1858 = vtanh.pop %v1857
    %v1859 = vmul.f32 %v1854, %v1858
    %1860 = vmatprep.subr.mxu0 %v40
    %1861 = vmatpush1.msra.mxu0 %v39
    %1862 = vmatprep.subr.mxu0 %v44
    %1863 = vmatpush1.msra.mxu0 %v43
    %1864 = vmatprep.subr.mxu0 %v48
    %1865 = vmatpush1.msra.mxu0 %v47
    %1866 = vmatprep.subr.mxu0 %v52
    %1867 = vmatpush1.msra.mxu0 %v51
    %1868 = vmatprep.subr.mxu0 %v56
    %1869 = vmatpush1.msra.mxu0 %v55
    %1870 = vmatprep.subr.mxu0 %v60
    %1871 = vmatpush1.msra.mxu0 %v59
    %1872 = vmatprep.subr.mxu0 %v64
    %1873 = vmatpush1.msra.mxu0 %v63
    %1874 = vmatprep.subr.mxu0 %v68
    %1875 = vmatpush1.msra.mxu0 %v67
    %1876 = vmatprep.subr.mxu0 %v72
    %1877 = vmatpush1.msra.mxu0 %v71
    %1878 = vmatprep.subr.mxu0 %v76
    %1879 = vmatpush1.msra.mxu0 %v75
    %1880 = vmatprep.subr.mxu0 %v80
    %1881 = vmatpush1.msra.mxu0 %v79
    %1882 = vmatprep.subr.mxu0 %v84
    %1883 = vmatpush1.msra.mxu0 %v83
    %1884 = vmatprep.subr.mxu0 %v88
    %1885 = vmatpush1.msra.mxu0 %v87
    %1886 = vmatprep.subr.mxu0 %v92
    %1887 = vmatpush1.msra.mxu0 %v91
    %1888 = vmatprep.subr.mxu0 %v96
    %1889 = vmatpush1.msra.mxu0 %v95
    %1890 = vmatprep.subr.mxu0 %v100
    %1891 = vmatpush1.msra.mxu0 %v99
    %1892 = vmatprep.subr.mxu0 0.0
    %1893 = vmatpush1.msra.mxu0 0.0
    %1894 = vmatprep.subr.mxu0 0.0
    %1895 = vmatpush1.msra.mxu0 0.0
    %1896 = vmatprep.subr.mxu0 0.0
    %1897 = vmatpush1.msra.mxu0 0.0
    %1898 = vmatprep.subr.mxu0 0.0
    %1899 = vmatpush1.msra.mxu0 0.0
    %1900 = vmatprep.subr.mxu0 0.0
    %1901 = vmatpush1.msra.mxu0 0.0
    %1902 = vmatprep.subr.mxu0 0.0
    %1903 = vmatpush1.msra.mxu0 0.0
    %1904 = vmatprep.subr.mxu0 0.0
    %1905 = vmatpush1.msra.mxu0 0.0
    %1906 = vmatprep.subr.mxu0 0.0
    %1907 = vmatpush1.msra.mxu0 0.0
    %1908 = vmatprep.subr.mxu0 0.0
    %1909 = vmatpush1.msra.mxu0 0.0
    %1910 = vmatprep.subr.mxu0 0.0
    %1911 = vmatpush1.msra.mxu0 0.0
    %1912 = vmatprep.subr.mxu0 0.0
    %1913 = vmatpush1.msra.mxu0 0.0
    %1914 = vmatprep.subr.mxu0 0.0
    %1915 = vmatpush1.msra.mxu0 0.0
    %1916 = vmatprep.subr.mxu0 0.0
    %1917 = vmatpush1.msra.mxu0 0.0
    %1918 = vmatprep.subr.mxu0 0.0
    %1919 = vmatpush1.msra.mxu0 0.0
    %1920 = vmatprep.subr.mxu0 0.0
    %1921 = vmatpush1.msra.mxu0 0.0
    %1922 = vmatprep.subr.mxu0 0.0
    %1923 = vmatpush1.msra.mxu0 0.0
    %1924 = vmatprep.mubr.f32.mxu0 0.0
    %1925 = vmatmul.mubr.f32.gmra.mrb[0].mxu0 %v1859
    %v1926 = vpop.f32.mrb[0].mxu0
    %v1927 = vadd.f32 0.0, %v1926
    %v1928 = vpop.f32.mrb[0].mxu0
    %v1929 = vadd.f32 0.0, %v1928
    %1930 = vdwg.mxu0
    %1931 = vmatprep.subr.mxu0 %v42
    %1932 = vmatpush1.msra.mxu0 %v41
    %1933 = vmatprep.subr.mxu0 %v46
    %1934 = vmatpush1.msra.mxu0 %v45
    %1935 = vmatprep.subr.mxu0 %v50
    %1936 = vmatpush1.msra.mxu0 %v49
    %1937 = vmatprep.subr.mxu0 %v54
    %1938 = vmatpush1.msra.mxu0 %v53
    %1939 = vmatprep.subr.mxu0 %v58
    %1940 = vmatpush1.msra.mxu0 %v57
    %1941 = vmatprep.subr.mxu0 %v62
    %1942 = vmatpush1.msra.mxu0 %v61
    %1943 = vmatprep.subr.mxu0 %v66
    %1944 = vmatpush1.msra.mxu0 %v65
    %1945 = vmatprep.subr.mxu0 %v70
    %1946 = vmatpush1.msra.mxu0 %v69
    %1947 = vmatprep.subr.mxu0 %v74
    %1948 = vmatpush1.msra.mxu0 %v73
    %1949 = vmatprep.subr.mxu0 %v78
    %1950 = vmatpush1.msra.mxu0 %v77
    %1951 = vmatprep.subr.mxu0 %v82
    %1952 = vmatpush1.msra.mxu0 %v81
    %1953 = vmatprep.subr.mxu0 %v86
    %1954 = vmatpush1.msra.mxu0 %v85
    %1955 = vmatprep.subr.mxu0 %v90
    %1956 = vmatpush1.msra.mxu0 %v89
    %1957 = vmatprep.subr.mxu0 %v94
    %1958 = vmatpush1.msra.mxu0 %v93
    %1959 = vmatprep.subr.mxu0 %v98
    %1960 = vmatpush1.msra.mxu0 %v97
    %1961 = vmatprep.subr.mxu0 %v102
    %1962 = vmatpush1.msra.mxu0 %v101
    %1963 = vmatprep.subr.mxu0 0.0
    %1964 = vmatpush1.msra.mxu0 0.0
    %1965 = vmatprep.subr.mxu0 0.0
    %1966 = vmatpush1.msra.mxu0 0.0
    %1967 = vmatprep.subr.mxu0 0.0
    %1968 = vmatpush1.msra.mxu0 0.0
    %1969 = vmatprep.subr.mxu0 0.0
    %1970 = vmatpush1.msra.mxu0 0.0
    %1971 = vmatprep.subr.mxu0 0.0
    %1972 = vmatpush1.msra.mxu0 0.0
    %1973 = vmatprep.subr.mxu0 0.0
    %1974 = vmatpush1.msra.mxu0 0.0
    %1975 = vmatprep.subr.mxu0 0.0
    %1976 = vmatpush1.msra.mxu0 0.0
    %1977 = vmatprep.subr.mxu0 0.0
    %1978 = vmatpush1.msra.mxu0 0.0
    %1979 = vmatprep.subr.mxu0 0.0
    %1980 = vmatpush1.msra.mxu0 0.0
    %1981 = vmatprep.subr.mxu0 0.0
    %1982 = vmatpush1.msra.mxu0 0.0
    %1983 = vmatprep.subr.mxu0 0.0
    %1984 = vmatpush1.msra.mxu0 0.0
    %1985 = vmatprep.subr.mxu0 0.0
    %1986 = vmatpush1.msra.mxu0 0.0
    %1987 = vmatprep.subr.mxu0 0.0
    %1988 = vmatpush1.msra.mxu0 0.0
    %1989 = vmatprep.subr.mxu0 0.0
    %1990 = vmatpush1.msra.mxu0 0.0
    %1991 = vmatprep.subr.mxu0 0.0
    %1992 = vmatpush1.msra.mxu0 0.0
    %1993 = vmatprep.subr.mxu0 0.0
    %1994 = vmatpush1.msra.mxu0 0.0
    %1995 = vmatprep.mubr.f32.mxu0 0.0
    %1996 = vmatmul.mubr.f32.gmra.mrb[0].mxu0 %v1859
    %v1997 = vpop.f32.mrb[0].mxu0
    %v1998 = vadd.f32 0.0, %v1997
    %v1999 = vpop.f32.mrb[0].mxu0
    %v2000 = vadd.f32 0.0, %v1999
    %2001 = vdwg.mxu0
    %v2002 = vadd.f32 %v527, %v1927
    %v2003 = vadd.f32 %v528, %v1929
    %v2004 = vadd.f32 %v529, %v1998
    %v2005 = vadd.f32 %v530, %v2000
    %v2006 = vtanh.pop %v2002
    %v2007 = vtanh.pop %v2003
    %v2008 = vtanh.pop %v2004
    %v2009 = vtanh.pop %v2005
    %v2010 = vmul.f32 %v2006, 0.5
    %v2011 = vadd.f32 %v2010, 0.5
    %v2012 = vmul.f32 %v2007, 0.5
    %v2013 = vadd.f32 %v2012, 0.5
    %v2014 = vmul.f32 %v2009, 0.5
    %v2015 = vadd.f32 %v2014, 0.5
    %v2016 = vmul.f32 %v2013, %v1857
    %v2017 = vmul.f32 %v2011, %v2008
    %v2018 = vadd.f32 %v2016, %v2017
    %v2019 = vtanh.pop %v2018
    %v2020 = vmul.f32 %v2015, %v2019
    %2021 = vmatprep.subr.mxu0 %v170
    %2022 = vmatpush1.msra.mxu0 %v169
    %2023 = vmatprep.subr.mxu0 %v174
    %2024 = vmatpush1.msra.mxu0 %v173
    %2025 = vmatprep.subr.mxu0 %v178
    %2026 = vmatpush1.msra.mxu0 %v177
    %2027 = vmatprep.subr.mxu0 %v182
    %2028 = vmatpush1.msra.mxu0 %v181
    %2029 = vmatprep.subr.mxu0 %v186
    %2030 = vmatpush1.msra.mxu0 %v185
    %2031 = vmatprep.subr.mxu0 %v190
    %2032 = vmatpush1.msra.mxu0 %v189
    %2033 = vmatprep.subr.mxu0 %v194
    %2034 = vmatpush1.msra.mxu0 %v193
    %2035 = vmatprep.subr.mxu0 %v198
    %2036 = vmatpush1.msra.mxu0 %v197
    %2037 = vmatprep.subr.mxu0 %v202
    %2038 = vmatpush1.msra.mxu0 %v201
    %2039 = vmatprep.subr.mxu0 %v206
    %2040 = vmatpush1.msra.mxu0 %v205
    %2041 = vmatprep.subr.mxu0 %v210
    %2042 = vmatpush1.msra.mxu0 %v209
    %2043 = vmatprep.subr.mxu0 %v214
    %2044 = vmatpush1.msra.mxu0 %v213
    %2045 = vmatprep.subr.mxu0 %v218
    %2046 = vmatpush1.msra.mxu0 %v217
    %2047 = vmatprep.subr.mxu0 %v222
    %2048 = vmatpush1.msra.mxu0 %v221
    %2049 = vmatprep.subr.mxu0 %v226
    %2050 = vmatpush1.msra.mxu0 %v225
    %2051 = vmatprep.subr.mxu0 %v230
    %2052 = vmatpush1.msra.mxu0 %v229
    %2053 = vmatprep.subr.mxu0 0.0
    %2054 = vmatpush1.msra.mxu0 0.0
    %2055 = vmatprep.subr.mxu0 0.0
    %2056 = vmatpush1.msra.mxu0 0.0
    %2057 = vmatprep.subr.mxu0 0.0
    %2058 = vmatpush1.msra.mxu0 0.0
    %2059 = vmatprep.subr.mxu0 0.0
    %2060 = vmatpush1.msra.mxu0 0.0
    %2061 = vmatprep.subr.mxu0 0.0
    %2062 = vmatpush1.msra.mxu0 0.0
    %2063 = vmatprep.subr.mxu0 0.0
    %2064 = vmatpush1.msra.mxu0 0.0
    %2065 = vmatprep.subr.mxu0 0.0
    %2066 = vmatpush1.msra.mxu0 0.0
    %2067 = vmatprep.subr.mxu0 0.0
    %2068 = vmatpush1.msra.mxu0 0.0
    %2069 = vmatprep.subr.mxu0 0.0
    %2070 = vmatpush1.msra.mxu0 0.0
    %2071 = vmatprep.subr.mxu0 0.0
    %2072 = vmatpush1.msra.mxu0 0.0
    %2073 = vmatprep.subr.mxu0 0.0
    %2074 = vmatpush1.msra.mxu0 0.0
    %2075 = vmatprep.subr.mxu0 0.0
    %2076 = vmatpush1.msra.mxu0 0.0
    %2077 = vmatprep.subr.mxu0 0.0
    %2078 = vmatpush1.msra.mxu0 0.0
    %2079 = vmatprep.subr.mxu0 0.0
    %2080 = vmatpush1.msra.mxu0 0.0
    %2081 = vmatprep.subr.mxu0 0.0
    %2082 = vmatpush1.msra.mxu0 0.0
    %2083 = vmatprep.subr.mxu0 0.0
    %2084 = vmatpush1.msra.mxu0 0.0
    %2085 = vmatprep.mubr.f32.mxu0 0.0
    %2086 = vmatmul.mubr.f32.gmra.mrb[0].mxu0 %v2020
    %v2087 = vpop.f32.mrb[0].mxu0
    %v2088 = vadd.f32 %v732, %v2087
    %v2089 = vpop.f32.mrb[0].mxu0
    %v2090 = vadd.f32 %v736, %v2089
    %2091 = vdwg.mxu0
    %2092 = vmatprep.subr.mxu0 %v172
    %2093 = vmatpush1.msra.mxu0 %v171
    %2094 = vmatprep.subr.mxu0 %v176
    %2095 = vmatpush1.msra.mxu0 %v175
    %2096 = vmatprep.subr.mxu0 %v180
    %2097 = vmatpush1.msra.mxu0 %v179
    %2098 = vmatprep.subr.mxu0 %v184
    %2099 = vmatpush1.msra.mxu0 %v183
    %2100 = vmatprep.subr.mxu0 %v188
    %2101 = vmatpush1.msra.mxu0 %v187
    %2102 = vmatprep.subr.mxu0 %v192
    %2103 = vmatpush1.msra.mxu0 %v191
    %2104 = vmatprep.subr.mxu0 %v196
    %2105 = vmatpush1.msra.mxu0 %v195
    %2106 = vmatprep.subr.mxu0 %v200
    %2107 = vmatpush1.msra.mxu0 %v199
    %2108 = vmatprep.subr.mxu0 %v204
    %2109 = vmatpush1.msra.mxu0 %v203
    %2110 = vmatprep.subr.mxu0 %v208
    %2111 = vmatpush1.msra.mxu0 %v207
    %2112 = vmatprep.subr.mxu0 %v212
    %2113 = vmatpush1.msra.mxu0 %v211
    %2114 = vmatprep.subr.mxu0 %v216
    %2115 = vmatpush1.msra.mxu0 %v215
    %2116 = vmatprep.subr.mxu0 %v220
    %2117 = vmatpush1.msra.mxu0 %v219
    %2118 = vmatprep.subr.mxu0 %v224
    %2119 = vmatpush1.msra.mxu0 %v223
    %2120 = vmatprep.subr.mxu0 %v228
    %2121 = vmatpush1.msra.mxu0 %v227
    %2122 = vmatprep.subr.mxu0 %v232
    %2123 = vmatpush1.msra.mxu0 %v231
    %2124 = vmatprep.subr.mxu0 0.0
    %2125 = vmatpush1.msra.mxu0 0.0
    %2126 = vmatprep.subr.mxu0 0.0
    %2127 = vmatpush1.msra.mxu0 0.0
    %2128 = vmatprep.subr.mxu0 0.0
    %2129 = vmatpush1.msra.mxu0 0.0
    %2130 = vmatprep.subr.mxu0 0.0
    %2131 = vmatpush1.msra.mxu0 0.0
    %2132 = vmatprep.subr.mxu0 0.0
    %2133 = vmatpush1.msra.mxu0 0.0
    %2134 = vmatprep.subr.mxu0 0.0
    %2135 = vmatpush1.msra.mxu0 0.0
    %2136 = vmatprep.subr.mxu0 0.0
    %2137 = vmatpush1.msra.mxu0 0.0
    %2138 = vmatprep.subr.mxu0 0.0
    %2139 = vmatpush1.msra.mxu0 0.0
    %2140 = vmatprep.subr.mxu0 0.0
    %2141 = vmatpush1.msra.mxu0 0.0
    %2142 = vmatprep.subr.mxu0 0.0
    %2143 = vmatpush1.msra.mxu0 0.0
    %2144 = vmatprep.subr.mxu0 0.0
    %2145 = vmatpush1.msra.mxu0 0.0
    %2146 = vmatprep.subr.mxu0 0.0
    %2147 = vmatpush1.msra.mxu0 0.0
    %2148 = vmatprep.subr.mxu0 0.0
    %2149 = vmatpush1.msra.mxu0 0.0
    %2150 = vmatprep.subr.mxu0 0.0
    %2151 = vmatpush1.msra.mxu0 0.0
    %2152 = vmatprep.subr.mxu0 0.0
    %2153 = vmatpush1.msra.mxu0 0.0
    %2154 = vmatprep.subr.mxu0 0.0
    %2155 = vmatpush1.msra.mxu0 0.0
    %2156 = vmatprep.mubr.f32.mxu0 0.0
    %2157 = vmatmul.mubr.f32.gmra.mrb[0].mxu0 %v2020
    %v2158 = vpop.f32.mrb[0].mxu0
    %v2159 = vadd.f32 %v740, %v2158
    %v2160 = vpop.f32.mrb[0].mxu0
    %v2161 = vadd.f32 %v744, %v2160
    %2162 = vdwg.mxu0
    %v2163 = vtanh.pop %v2088
    %v2164 = vtanh.pop %v2090
    %v2165 = vtanh.pop %v2159
    %v2166 = vtanh.pop %v2161
    %v2167 = vmul.f32 %v2163, 0.5
    %v2168 = vadd.f32 %v2167, 0.5
    %v2169 = vmul.f32 %v2164, 0.5
    %v2170 = vadd.f32 %v2169, 0.5
    %v2171 = vmul.f32 %v2166, 0.5
    %v2172 = vadd.f32 %v2171, 0.5
    %v2173 = vmul.f32 %v2170, %v2018
    %v2174 = vmul.f32 %v2168, %v2165
    %v2175 = vadd.f32 %v2173, %v2174
    %v2176 = vtanh.pop %v2175
    %v2177 = vmul.f32 %v2172, %v2176
    %2178 = vmatprep.subr.mxu0 %v40
    %2179 = vmatpush1.msra.mxu0 %v39
    %2180 = vmatprep.subr.mxu0 %v44
    %2181 = vmatpush1.msra.mxu0 %v43
    %2182 = vmatprep.subr.mxu0 %v48
    %2183 = vmatpush1.msra.mxu0 %v47
    %2184 = vmatprep.subr.mxu0 %v52
    %2185 = vmatpush1.msra.mxu0 %v51
    %2186 = vmatprep.subr.mxu0 %v56
    %2187 = vmatpush1.msra.mxu0 %v55
    %2188 = vmatprep.subr.mxu0 %v60
    %2189 = vmatpush1.msra.mxu0 %v59
    %2190 = vmatprep.subr.mxu0 %v64
    %2191 = vmatpush1.msra.mxu0 %v63
    %2192 = vmatprep.subr.mxu0 %v68
    %2193 = vmatpush1.msra.mxu0 %v67
    %2194 = vmatprep.subr.mxu0 %v72
    %2195 = vmatpush1.msra.mxu0 %v71
    %2196 = vmatprep.subr.mxu0 %v76
    %2197 = vmatpush1.msra.mxu0 %v75
    %2198 = vmatprep.subr.mxu0 %v80
    %2199 = vmatpush1.msra.mxu0 %v79
    %2200 = vmatprep.subr.mxu0 %v84
    %2201 = vmatpush1.msra.mxu0 %v83
    %2202 = vmatprep.subr.mxu0 %v88
    %2203 = vmatpush1.msra.mxu0 %v87
    %2204 = vmatprep.subr.mxu0 %v92
    %2205 = vmatpush1.msra.mxu0 %v91
    %2206 = vmatprep.subr.mxu0 %v96
    %2207 = vmatpush1.msra.mxu0 %v95
    %2208 = vmatprep.subr.mxu0 %v100
    %2209 = vmatpush1.msra.mxu0 %v99
    %2210 = vmatprep.subr.mxu0 0.0
    %2211 = vmatpush1.msra.mxu0 0.0
    %2212 = vmatprep.subr.mxu0 0.0
    %2213 = vmatpush1.msra.mxu0 0.0
    %2214 = vmatprep.subr.mxu0 0.0
    %2215 = vmatpush1.msra.mxu0 0.0
    %2216 = vmatprep.subr.mxu0 0.0
    %2217 = vmatpush1.msra.mxu0 0.0
    %2218 = vmatprep.subr.mxu0 0.0
    %2219 = vmatpush1.msra.mxu0 0.0
    %2220 = vmatprep.subr.mxu0 0.0
    %2221 = vmatpush1.msra.mxu0 0.0
    %2222 = vmatprep.subr.mxu0 0.0
    %2223 = vmatpush1.msra.mxu0 0.0
    %2224 = vmatprep.subr.mxu0 0.0
    %2225 = vmatpush1.msra.mxu0 0.0
    %2226 = vmatprep.subr.mxu0 0.0
    %2227 = vmatpush1.msra.mxu0 0.0
    %2228 = vmatprep.subr.mxu0 0.0
    %2229 = vmatpush1.msra.mxu0 0.0
    %2230 = vmatprep.subr.mxu0 0.0
    %2231 = vmatpush1.msra.mxu0 0.0
    %2232 = vmatprep.subr.mxu0 0.0
    %2233 = vmatpush1.msra.mxu0 0.0
    %2234 = vmatprep.subr.mxu0 0.0
    %2235 = vmatpush1.msra.mxu0 0.0
    %2236 = vmatprep.subr.mxu0 0.0
    %2237 = vmatpush1.msra.mxu0 0.0
    %2238 = vmatprep.subr.mxu0 0.0
    %2239 = vmatpush1.msra.mxu0 0.0
    %2240 = vmatprep.subr.mxu0 0.0
    %2241 = vmatpush1.msra.mxu0 0.0
    %2242 = vmatprep.mubr.f32.mxu0 0.0
    %2243 = vmatmul.mubr.f32.gmra.mrb[0].mxu0 %v2177
    %v2244 = vpop.f32.mrb[0].mxu0
    %v2245 = vadd.f32 0.0, %v2244
    %v2246 = vpop.f32.mrb[0].mxu0
    %v2247 = vadd.f32 0.0, %v2246
    %2248 = vdwg.mxu0
    %2249 = vmatprep.subr.mxu0 %v42
    %2250 = vmatpush1.msra.mxu0 %v41
    %2251 = vmatprep.subr.mxu0 %v46
    %2252 = vmatpush1.msra.mxu0 %v45
    %2253 = vmatprep.subr.mxu0 %v50
    %2254 = vmatpush1.msra.mxu0 %v49
    %2255 = vmatprep.subr.mxu0 %v54
    %2256 = vmatpush1.msra.mxu0 %v53
    %2257 = vmatprep.subr.mxu0 %v58
    %2258 = vmatpush1.msra.mxu0 %v57
    %2259 = vmatprep.subr.mxu0 %v62
    %2260 = vmatpush1.msra.mxu0 %v61
    %2261 = vmatprep.subr.mxu0 %v66
    %2262 = vmatpush1.msra.mxu0 %v65
    %2263 = vmatprep.subr.mxu0 %v70
    %2264 = vmatpush1.msra.mxu0 %v69
    %2265 = vmatprep.subr.mxu0 %v74
    %2266 = vmatpush1.msra.mxu0 %v73
    %2267 = vmatprep.subr.mxu0 %v78
    %2268 = vmatpush1.msra.mxu0 %v77
    %2269 = vmatprep.subr.mxu0 %v82
    %2270 = vmatpush1.msra.mxu0 %v81
    %2271 = vmatprep.subr.mxu0 %v86
    %2272 = vmatpush1.msra.mxu0 %v85
    %2273 = vmatprep.subr.mxu0 %v90
    %2274 = vmatpush1.msra.mxu0 %v89
    %2275 = vmatprep.subr.mxu0 %v94
    %2276 = vmatpush1.msra.mxu0 %v93
    %2277 = vmatprep.subr.mxu0 %v98
    %2278 = vmatpush1.msra.mxu0 %v97
    %2279 = vmatprep.subr.mxu0 %v102
    %2280 = vmatpush1.msra.mxu0 %v101
    %2281 = vmatprep.subr.mxu0 0.0
    %2282 = vmatpush1.msra.mxu0 0.0
    %2283 = vmatprep.subr.mxu0 0.0
    %2284 = vmatpush1.msra.mxu0 0.0
    %2285 = vmatprep.subr.mxu0 0.0
    %2286 = vmatpush1.msra.mxu0 0.0
    %2287 = vmatprep.subr.mxu0 0.0
    %2288 = vmatpush1.msra.mxu0 0.0
    %2289 = vmatprep.subr.mxu0 0.0
    %2290 = vmatpush1.msra.mxu0 0.0
    %2291 = vmatprep.subr.mxu0 0.0
    %2292 = vmatpush1.msra.mxu0 0.0
    %2293 = vmatprep.subr.mxu0 0.0
    %2294 = vmatpush1.msra.mxu0 0.0
    %2295 = vmatprep.subr.mxu0 0.0
    %2296 = vmatpush1.msra.mxu0 0.0
    %2297 = vmatprep.subr.mxu0 0.0
    %2298 = vmatpush1.msra.mxu0 0.0
    %2299 = vmatprep.subr.mxu0 0.0
    %2300 = vmatpush1.msra.mxu0 0.0
    %2301 = vmatprep.subr.mxu0 0.0
    %2302 = vmatpush1.msra.mxu0 0.0
    %2303 = vmatprep.subr.mxu0 0.0
    %2304 = vmatpush1.msra.mxu0 0.0
    %2305 = vmatprep.subr.mxu0 0.0
    %2306 = vmatpush1.msra.mxu0 0.0
    %2307 = vmatprep.subr.mxu0 0.0
    %2308 = vmatpush1.msra.mxu0 0.0
    %2309 = vmatprep.subr.mxu0 0.0
    %2310 = vmatpush1.msra.mxu0 0.0
    %2311 = vmatprep.subr.mxu0 0.0
    %2312 = vmatpush1.msra.mxu0 0.0
    %2313 = vmatprep.mubr.f32.mxu0 0.0
    %2314 = vmatmul.mubr.f32.gmra.mrb[0].mxu0 %v2177
    %v2315 = vpop.f32.mrb[0].mxu0
    %v2316 = vadd.f32 0.0, %v2315
    %v2317 = vpop.f32.mrb[0].mxu0
    %v2318 = vadd.f32 0.0, %v2317
    %2319 = vdwg.mxu0
    %v2320 = vadd.f32 %v539, %v2245
    %v2321 = vadd.f32 %v540, %v2247
    %v2322 = vadd.f32 %v541, %v2316
    %v2323 = vadd.f32 %v542, %v2318
    %v2324 = vtanh.pop %v2320
    %v2325 = vtanh.pop %v2321
    %v2326 = vtanh.pop %v2322
    %v2327 = vtanh.pop %v2323
    %v2328 = vmul.f32 %v2324, 0.5
    %v2329 = vadd.f32 %v2328, 0.5
    %v2330 = vmul.f32 %v2325, 0.5
    %v2331 = vadd.f32 %v2330, 0.5
    %v2332 = vmul.f32 %v2327, 0.5
    %v2333 = vadd.f32 %v2332, 0.5
    %v2334 = vmul.f32 %v2331, %v2175
    %v2335 = vmul.f32 %v2329, %v2326
    %v2336 = vadd.f32 %v2334, %v2335
    %v2337 = vtanh.pop %v2336
    %v2338 = vmul.f32 %v2333, %v2337
    %2339 = vmatprep.subr.mxu0 %v170
    %2340 = vmatpush1.msra.mxu0 %v169
    %2341 = vmatprep.subr.mxu0 %v174
    %2342 = vmatpush1.msra.mxu0 %v173
    %2343 = vmatprep.subr.mxu0 %v178
    %2344 = vmatpush1.msra.mxu0 %v177
    %2345 = vmatprep.subr.mxu0 %v182
    %2346 = vmatpush1.msra.mxu0 %v181
    %2347 = vmatprep.subr.mxu0 %v186
    %2348 = vmatpush1.msra.mxu0 %v185
    %2349 = vmatprep.subr.mxu0 %v190
    %2350 = vmatpush1.msra.mxu0 %v189
    %2351 = vmatprep.subr.mxu0 %v194
    %2352 = vmatpush1.msra.mxu0 %v193
    %2353 = vmatprep.subr.mxu0 %v198
    %2354 = vmatpush1.msra.mxu0 %v197
    %2355 = vmatprep.subr.mxu0 %v202
    %2356 = vmatpush1.msra.mxu0 %v201
    %2357 = vmatprep.subr.mxu0 %v206
    %2358 = vmatpush1.msra.mxu0 %v205
    %2359 = vmatprep.subr.mxu0 %v210
    %2360 = vmatpush1.msra.mxu0 %v209
    %2361 = vmatprep.subr.mxu0 %v214
    %2362 = vmatpush1.msra.mxu0 %v213
    %2363 = vmatprep.subr.mxu0 %v218
    %2364 = vmatpush1.msra.mxu0 %v217
    %2365 = vmatprep.subr.mxu0 %v222
    %2366 = vmatpush1.msra.mxu0 %v221
    %2367 = vmatprep.subr.mxu0 %v226
    %2368 = vmatpush1.msra.mxu0 %v225
    %2369 = vmatprep.subr.mxu0 %v230
    %2370 = vmatpush1.msra.mxu0 %v229
    %2371 = vmatprep.subr.mxu0 0.0
    %2372 = vmatpush1.msra.mxu0 0.0
    %2373 = vmatprep.subr.mxu0 0.0
    %2374 = vmatpush1.msra.mxu0 0.0
    %2375 = vmatprep.subr.mxu0 0.0
    %2376 = vmatpush1.msra.mxu0 0.0
    %2377 = vmatprep.subr.mxu0 0.0
    %2378 = vmatpush1.msra.mxu0 0.0
    %2379 = vmatprep.subr.mxu0 0.0
    %2380 = vmatpush1.msra.mxu0 0.0
    %2381 = vmatprep.subr.mxu0 0.0
    %2382 = vmatpush1.msra.mxu0 0.0
    %2383 = vmatprep.subr.mxu0 0.0
    %2384 = vmatpush1.msra.mxu0 0.0
    %2385 = vmatprep.subr.mxu0 0.0
    %2386 = vmatpush1.msra.mxu0 0.0
    %2387 = vmatprep.subr.mxu0 0.0
    %2388 = vmatpush1.msra.mxu0 0.0
    %2389 = vmatprep.subr.mxu0 0.0
    %2390 = vmatpush1.msra.mxu0 0.0
    %2391 = vmatprep.subr.mxu0 0.0
    %2392 = vmatpush1.msra.mxu0 0.0
    %2393 = vmatprep.subr.mxu0 0.0
    %2394 = vmatpush1.msra.mxu0 0.0
    %2395 = vmatprep.subr.mxu0 0.0
    %2396 = vmatpush1.msra.mxu0 0.0
    %2397 = vmatprep.subr.mxu0 0.0
    %2398 = vmatpush1.msra.mxu0 0.0
    %2399 = vmatprep.subr.mxu0 0.0
    %2400 = vmatpush1.msra.mxu0 0.0
    %2401 = vmatprep.subr.mxu0 0.0
    %2402 = vmatpush1.msra.mxu0 0.0
    %2403 = vmatprep.mubr.f32.mxu0 0.0
    %2404 = vmatmul.mubr.f32.gmra.mrb[0].mxu0 %v2338
    %v2405 = vpop.f32.mrb[0].mxu0
    %v2406 = vadd.f32 %v732, %v2405
    %v2407 = vpop.f32.mrb[0].mxu0
    %v2408 = vadd.f32 %v736, %v2407
    %2409 = vdwg.mxu0
    %2410 = vmatprep.subr.mxu0 %v172
    %2411 = vmatpush1.msra.mxu0 %v171
    %2412 = vmatprep.subr.mxu0 %v176
    %2413 = vmatpush1.msra.mxu0 %v175
    %2414 = vmatprep.subr.mxu0 %v180
    %2415 = vmatpush1.msra.mxu0 %v179
    %2416 = vmatprep.subr.mxu0 %v184
    %2417 = vmatpush1.msra.mxu0 %v183
    %2418 = vmatprep.subr.mxu0 %v188
    %2419 = vmatpush1.msra.mxu0 %v187
    %2420 = vmatprep.subr.mxu0 %v192
    %2421 = vmatpush1.msra.mxu0 %v191
    %2422 = vmatprep.subr.mxu0 %v196
    %2423 = vmatpush1.msra.mxu0 %v195
    %2424 = vmatprep.subr.mxu0 %v200
    %2425 = vmatpush1.msra.mxu0 %v199
    %2426 = vmatprep.subr.mxu0 %v204
    %2427 = vmatpush1.msra.mxu0 %v203
    %2428 = vmatprep.subr.mxu0 %v208
    %2429 = vmatpush1.msra.mxu0 %v207
    %2430 = vmatprep.subr.mxu0 %v212
    %2431 = vmatpush1.msra.mxu0 %v211
    %2432 = vmatprep.subr.mxu0 %v216
    %2433 = vmatpush1.msra.mxu0 %v215
    %2434 = vmatprep.subr.mxu0 %v220
    %2435 = vmatpush1.msra.mxu0 %v219
    %2436 = vmatprep.subr.mxu0 %v224
    %2437 = vmatpush1.msra.mxu0 %v223
    %2438 = vmatprep.subr.mxu0 %v228
    %2439 = vmatpush1.msra.mxu0 %v227
    %2440 = vmatprep.subr.mxu0 %v232
    %2441 = vmatpush1.msra.mxu0 %v231
    %2442 = vmatprep.subr.mxu0 0.0
    %2443 = vmatpush1.msra.mxu0 0.0
    %2444 = vmatprep.subr.mxu0 0.0
    %2445 = vmatpush1.msra.mxu0 0.0
    %2446 = vmatprep.subr.mxu0 0.0
    %2447 = vmatpush1.msra.mxu0 0.0
    %2448 = vmatprep.subr.mxu0 0.0
    %2449 = vmatpush1.msra.mxu0 0.0
    %2450 = vmatprep.subr.mxu0 0.0
    %2451 = vmatpush1.msra.mxu0 0.0
    %2452 = vmatprep.subr.mxu0 0.0
    %2453 = vmatpush1.msra.mxu0 0.0
    %2454 = vmatprep.subr.mxu0 0.0
    %2455 = vmatpush1.msra.mxu0 0.0
    %2456 = vmatprep.subr.mxu0 0.0
    %2457 = vmatpush1.msra.mxu0 0.0
    %2458 = vmatprep.subr.mxu0 0.0
    %2459 = vmatpush1.msra.mxu0 0.0
    %2460 = vmatprep.subr.mxu0 0.0
    %2461 = vmatpush1.msra.mxu0 0.0
    %2462 = vmatprep.subr.mxu0 0.0
    %2463 = vmatpush1.msra.mxu0 0.0
    %2464 = vmatprep.subr.mxu0 0.0
    %2465 = vmatpush1.msra.mxu0 0.0
    %2466 = vmatprep.subr.mxu0 0.0
    %2467 = vmatpush1.msra.mxu0 0.0
    %2468 = vmatprep.subr.mxu0 0.0
    %2469 = vmatpush1.msra.mxu0 0.0
    %2470 = vmatprep.subr.mxu0 0.0
    %2471 = vmatpush1.msra.mxu0 0.0
    %2472 = vmatprep.subr.mxu0 0.0
    %2473 = vmatpush1.msra.mxu0 0.0
    %2474 = vmatprep.mubr.f32.mxu0 0.0
    %2475 = vmatmul.mubr.f32.gmra.mrb[0].mxu0 %v2338
    %v2476 = vpop.f32.mrb[0].mxu0
    %v2477 = vadd.f32 %v740, %v2476
    %v2478 = vpop.f32.mrb[0].mxu0
    %v2479 = vadd.f32 %v744, %v2478
    %2480 = vdwg.mxu0
    %v2481 = vtanh.pop %v2406
    %v2482 = vtanh.pop %v2408
    %v2483 = vtanh.pop %v2477
    %v2484 = vtanh.pop %v2479
    %v2485 = vmul.f32 %v2481, 0.5
    %v2486 = vadd.f32 %v2485, 0.5
    %v2487 = vmul.f32 %v2482, 0.5
    %v2488 = vadd.f32 %v2487, 0.5
    %v2489 = vmul.f32 %v2484, 0.5
    %v2490 = vadd.f32 %v2489, 0.5
    %v2491 = vmul.f32 %v2488, %v2336
    %v2492 = vmul.f32 %v2486, %v2483
    %v2493 = vadd.f32 %v2491, %v2492
    %v2494 = vtanh.pop %v2493
    %v2495 = vmul.f32 %v2490, %v2494
    %2496 = vmatprep.subr.mxu0 %v40
    %2497 = vmatpush1.msra.mxu0 %v39
    %2498 = vmatprep.subr.mxu0 %v44
    %2499 = vmatpush1.msra.mxu0 %v43
    %2500 = vmatprep.subr.mxu0 %v48
    %2501 = vmatpush1.msra.mxu0 %v47
    %2502 = vmatprep.subr.mxu0 %v52
    %2503 = vmatpush1.msra.mxu0 %v51
    %2504 = vmatprep.subr.mxu0 %v56
    %2505 = vmatpush1.msra.mxu0 %v55
    %2506 = vmatprep.subr.mxu0 %v60
    %2507 = vmatpush1.msra.mxu0 %v59
    %2508 = vmatprep.subr.mxu0 %v64
    %2509 = vmatpush1.msra.mxu0 %v63
    %2510 = vmatprep.subr.mxu0 %v68
    %2511 = vmatpush1.msra.mxu0 %v67
    %2512 = vmatprep.subr.mxu0 %v72
    %2513 = vmatpush1.msra.mxu0 %v71
    %2514 = vmatprep.subr.mxu0 %v76
    %2515 = vmatpush1.msra.mxu0 %v75
    %2516 = vmatprep.subr.mxu0 %v80
    %2517 = vmatpush1.msra.mxu0 %v79
    %2518 = vmatprep.subr.mxu0 %v84
    %2519 = vmatpush1.msra.mxu0 %v83
    %2520 = vmatprep.subr.mxu0 %v88
    %2521 = vmatpush1.msra.mxu0 %v87
    %2522 = vmatprep.subr.mxu0 %v92
    %2523 = vmatpush1.msra.mxu0 %v91
    %2524 = vmatprep.subr.mxu0 %v96
    %2525 = vmatpush1.msra.mxu0 %v95
    %2526 = vmatprep.subr.mxu0 %v100
    %2527 = vmatpush1.msra.mxu0 %v99
    %2528 = vmatprep.subr.mxu0 0.0
    %2529 = vmatpush1.msra.mxu0 0.0
    %2530 = vmatprep.subr.mxu0 0.0
    %2531 = vmatpush1.msra.mxu0 0.0
    %2532 = vmatprep.subr.mxu0 0.0
    %2533 = vmatpush1.msra.mxu0 0.0
    %2534 = vmatprep.subr.mxu0 0.0
    %2535 = vmatpush1.msra.mxu0 0.0
    %2536 = vmatprep.subr.mxu0 0.0
    %2537 = vmatpush1.msra.mxu0 0.0
    %2538 = vmatprep.subr.mxu0 0.0
    %2539 = vmatpush1.msra.mxu0 0.0
    %2540 = vmatprep.subr.mxu0 0.0
    %2541 = vmatpush1.msra.mxu0 0.0
    %2542 = vmatprep.subr.mxu0 0.0
    %2543 = vmatpush1.msra.mxu0 0.0
    %2544 = vmatprep.subr.mxu0 0.0
    %2545 = vmatpush1.msra.mxu0 0.0
    %2546 = vmatprep.subr.mxu0 0.0
    %2547 = vmatpush1.msra.mxu0 0.0
    %2548 = vmatprep.subr.mxu0 0.0
    %2549 = vmatpush1.msra.mxu0 0.0
    %2550 = vmatprep.subr.mxu0 0.0
    %2551 = vmatpush1.msra.mxu0 0.0
    %2552 = vmatprep.subr.mxu0 0.0
    %2553 = vmatpush1.msra.mxu0 0.0
    %2554 = vmatprep.subr.mxu0 0.0
    %2555 = vmatpush1.msra.mxu0 0.0
    %2556 = vmatprep.subr.mxu0 0.0
    %2557 = vmatpush1.msra.mxu0 0.0
    %2558 = vmatprep.subr.mxu0 0.0
    %2559 = vmatpush1.msra.mxu0 0.0
    %2560 = vmatprep.mubr.f32.mxu0 0.0
    %2561 = vmatmul.mubr.f32.gmra.mrb[0].mxu0 %v2495
    %v2562 = vpop.f32.mrb[0].mxu0
    %v2563 = vadd.f32 0.0, %v2562
    %v2564 = vpop.f32.mrb[0].mxu0
    %v2565 = vadd.f32 0.0, %v2564
    %2566 = vdwg.mxu0
    %2567 = vmatprep.subr.mxu0 %v42
    %2568 = vmatpush1.msra.mxu0 %v41
    %2569 = vmatprep.subr.mxu0 %v46
    %2570 = vmatpush1.msra.mxu0 %v45
    %2571 = vmatprep.subr.mxu0 %v50
    %2572 = vmatpush1.msra.mxu0 %v49
    %2573 = vmatprep.subr.mxu0 %v54
    %2574 = vmatpush1.msra.mxu0 %v53
    %2575 = vmatprep.subr.mxu0 %v58
    %2576 = vmatpush1.msra.mxu0 %v57
    %2577 = vmatprep.subr.mxu0 %v62
    %2578 = vmatpush1.msra.mxu0 %v61
    %2579 = vmatprep.subr.mxu0 %v66
    %2580 = vmatpush1.msra.mxu0 %v65
    %2581 = vmatprep.subr.mxu0 %v70
    %2582 = vmatpush1.msra.mxu0 %v69
    %2583 = vmatprep.subr.mxu0 %v74
    %2584 = vmatpush1.msra.mxu0 %v73
    %2585 = vmatprep.subr.mxu0 %v78
    %2586 = vmatpush1.msra.mxu0 %v77
    %2587 = vmatprep.subr.mxu0 %v82
    %2588 = vmatpush1.msra.mxu0 %v81
    %2589 = vmatprep.subr.mxu0 %v86
    %2590 = vmatpush1.msra.mxu0 %v85
    %2591 = vmatprep.subr.mxu0 %v90
    %2592 = vmatpush1.msra.mxu0 %v89
    %2593 = vmatprep.subr.mxu0 %v94
    %2594 = vmatpush1.msra.mxu0 %v93
    %2595 = vmatprep.subr.mxu0 %v98
    %2596 = vmatpush1.msra.mxu0 %v97
    %2597 = vmatprep.subr.mxu0 %v102
    %2598 = vmatpush1.msra.mxu0 %v101
    %2599 = vmatprep.subr.mxu0 0.0
    %2600 = vmatpush1.msra.mxu0 0.0
    %2601 = vmatprep.subr.mxu0 0.0
    %2602 = vmatpush1.msra.mxu0 0.0
    %2603 = vmatprep.subr.mxu0 0.0
    %2604 = vmatpush1.msra.mxu0 0.0
    %2605 = vmatprep.subr.mxu0 0.0
    %2606 = vmatpush1.msra.mxu0 0.0
    %2607 = vmatprep.subr.mxu0 0.0
    %2608 = vmatpush1.msra.mxu0 0.0
    %2609 = vmatprep.subr.mxu0 0.0
    %2610 = vmatpush1.msra.mxu0 0.0
    %2611 = vmatprep.subr.mxu0 0.0
    %2612 = vmatpush1.msra.mxu0 0.0
    %2613 = vmatprep.subr.mxu0 0.0
    %2614 = vmatpush1.msra.mxu0 0.0
    %2615 = vmatprep.subr.mxu0 0.0
    %2616 = vmatpush1.msra.mxu0 0.0
    %2617 = vmatprep.subr.mxu0 0.0
    %2618 = vmatpush1.msra.mxu0 0.0
    %2619 = vmatprep.subr.mxu0 0.0
    %2620 = vmatpush1.msra.mxu0 0.0
    %2621 = vmatprep.subr.mxu0 0.0
    %2622 = vmatpush1.msra.mxu0 0.0
    %2623 = vmatprep.subr.mxu0 0.0
    %2624 = vmatpush1.msra.mxu0 0.0
    %2625 = vmatprep.subr.mxu0 0.0
    %2626 = vmatpush1.msra.mxu0 0.0
    %2627 = vmatprep.subr.mxu0 0.0
    %2628 = vmatpush1.msra.mxu0 0.0
    %2629 = vmatprep.subr.mxu0 0.0
    %2630 = vmatpush1.msra.mxu0 0.0
    %2631 = vmatprep.mubr.f32.mxu0 0.0
    %2632 = vmatmul.mubr.f32.gmra.mrb[0].mxu0 %v2495
    %v2633 = vpop.f32.mrb[0].mxu0
    %v2634 = vadd.f32 0.0, %v2633
    %v2635 = vpop.f32.mrb[0].mxu0
    %v2636 = vadd.f32 0.0, %v2635
    %2637 = vdwg.mxu0
    %v2638 = vadd.f32 %v551, %v2563
    %v2639 = vadd.f32 %v552, %v2565
    %v2640 = vadd.f32 %v553, %v2634
    %v2641 = vadd.f32 %v554, %v2636
    %v2642 = vtanh.pop %v2638
    %v2643 = vtanh.pop %v2639
    %v2644 = vtanh.pop %v2640
    %v2645 = vtanh.pop %v2641
    %v2646 = vmul.f32 %v2642, 0.5
    %v2647 = vadd.f32 %v2646, 0.5
    %v2648 = vmul.f32 %v2643, 0.5
    %v2649 = vadd.f32 %v2648, 0.5
    %v2650 = vmul.f32 %v2645, 0.5
    %v2651 = vadd.f32 %v2650, 0.5
    %v2652 = vmul.f32 %v2649, %v2493
    %v2653 = vmul.f32 %v2647, %v2644
    %v2654 = vadd.f32 %v2652, %v2653
    %v2655 = vtanh.pop %v2654
    %v2656 = vmul.f32 %v2651, %v2655
    %2657 = vmatprep.subr.mxu0 %v170
    %2658 = vmatpush1.msra.mxu0 %v169
    %2659 = vmatprep.subr.mxu0 %v174
    %2660 = vmatpush1.msra.mxu0 %v173
    %2661 = vmatprep.subr.mxu0 %v178
    %2662 = vmatpush1.msra.mxu0 %v177
    %2663 = vmatprep.subr.mxu0 %v182
    %2664 = vmatpush1.msra.mxu0 %v181
    %2665 = vmatprep.subr.mxu0 %v186
    %2666 = vmatpush1.msra.mxu0 %v185
    %2667 = vmatprep.subr.mxu0 %v190
    %2668 = vmatpush1.msra.mxu0 %v189
    %2669 = vmatprep.subr.mxu0 %v194
    %2670 = vmatpush1.msra.mxu0 %v193
    %2671 = vmatprep.subr.mxu0 %v198
    %2672 = vmatpush1.msra.mxu0 %v197
    %2673 = vmatprep.subr.mxu0 %v202
    %2674 = vmatpush1.msra.mxu0 %v201
    %2675 = vmatprep.subr.mxu0 %v206
    %2676 = vmatpush1.msra.mxu0 %v205
    %2677 = vmatprep.subr.mxu0 %v210
    %2678 = vmatpush1.msra.mxu0 %v209
    %2679 = vmatprep.subr.mxu0 %v214
    %2680 = vmatpush1.msra.mxu0 %v213
    %2681 = vmatprep.subr.mxu0 %v218
    %2682 = vmatpush1.msra.mxu0 %v217
    %2683 = vmatprep.subr.mxu0 %v222
    %2684 = vmatpush1.msra.mxu0 %v221
    %2685 = vmatprep.subr.mxu0 %v226
    %2686 = vmatpush1.msra.mxu0 %v225
    %2687 = vmatprep.subr.mxu0 %v230
    %2688 = vmatpush1.msra.mxu0 %v229
    %2689 = vmatprep.subr.mxu0 0.0
    %2690 = vmatpush1.msra.mxu0 0.0
    %2691 = vmatprep.subr.mxu0 0.0
    %2692 = vmatpush1.msra.mxu0 0.0
    %2693 = vmatprep.subr.mxu0 0.0
    %2694 = vmatpush1.msra.mxu0 0.0
    %2695 = vmatprep.subr.mxu0 0.0
    %2696 = vmatpush1.msra.mxu0 0.0
    %2697 = vmatprep.subr.mxu0 0.0
    %2698 = vmatpush1.msra.mxu0 0.0
    %2699 = vmatprep.subr.mxu0 0.0
    %2700 = vmatpush1.msra.mxu0 0.0
    %2701 = vmatprep.subr.mxu0 0.0
    %2702 = vmatpush1.msra.mxu0 0.0
    %2703 = vmatprep.subr.mxu0 0.0
    %2704 = vmatpush1.msra.mxu0 0.0
    %2705 = vmatprep.subr.mxu0 0.0
    %2706 = vmatpush1.msra.mxu0 0.0
    %2707 = vmatprep.subr.mxu0 0.0
    %2708 = vmatpush1.msra.mxu0 0.0
    %2709 = vmatprep.subr.mxu0 0.0
    %2710 = vmatpush1.msra.mxu0 0.0
    %2711 = vmatprep.subr.mxu0 0.0
    %2712 = vmatpush1.msra.mxu0 0.0
    %2713 = vmatprep.subr.mxu0 0.0
    %2714 = vmatpush1.msra.mxu0 0.0
    %2715 = vmatprep.subr.mxu0 0.0
    %2716 = vmatpush1.msra.mxu0 0.0
    %2717 = vmatprep.subr.mxu0 0.0
    %2718 = vmatpush1.msra.mxu0 0.0
    %2719 = vmatprep.subr.mxu0 0.0
    %2720 = vmatpush1.msra.mxu0 0.0
    %2721 = vmatprep.mubr.f32.mxu0 0.0
    %2722 = vmatmul.mubr.f32.gmra.mrb[0].mxu0 %v2656
    %v2723 = vpop.f32.mrb[0].mxu0
    %v2724 = vadd.f32 %v732, %v2723
    %v2725 = vpop.f32.mrb[0].mxu0
    %v2726 = vadd.f32 %v736, %v2725
    %2727 = vdwg.mxu0
    %2728 = vmatprep.subr.mxu0 %v172
    %2729 = vmatpush1.msra.mxu0 %v171
    %2730 = vmatprep.subr.mxu0 %v176
    %2731 = vmatpush1.msra.mxu0 %v175
    %2732 = vmatprep.subr.mxu0 %v180
    %2733 = vmatpush1.msra.mxu0 %v179
    %2734 = vmatprep.subr.mxu0 %v184
    %2735 = vmatpush1.msra.mxu0 %v183
    %2736 = vmatprep.subr.mxu0 %v188
    %2737 = vmatpush1.msra.mxu0 %v187
    %2738 = vmatprep.subr.mxu0 %v192
    %2739 = vmatpush1.msra.mxu0 %v191
    %2740 = vmatprep.subr.mxu0 %v196
    %2741 = vmatpush1.msra.mxu0 %v195
    %2742 = vmatprep.subr.mxu0 %v200
    %2743 = vmatpush1.msra.mxu0 %v199
    %2744 = vmatprep.subr.mxu0 %v204
    %2745 = vmatpush1.msra.mxu0 %v203
    %2746 = vmatprep.subr.mxu0 %v208
    %2747 = vmatpush1.msra.mxu0 %v207
    %2748 = vmatprep.subr.mxu0 %v212
    %2749 = vmatpush1.msra.mxu0 %v211
    %2750 = vmatprep.subr.mxu0 %v216
    %2751 = vmatpush1.msra.mxu0 %v215
    %2752 = vmatprep.subr.mxu0 %v220
    %2753 = vmatpush1.msra.mxu0 %v219
    %2754 = vmatprep.subr.mxu0 %v224
    %2755 = vmatpush1.msra.mxu0 %v223
    %2756 = vmatprep.subr.mxu0 %v228
    %2757 = vmatpush1.msra.mxu0 %v227
    %2758 = vmatprep.subr.mxu0 %v232
    %2759 = vmatpush1.msra.mxu0 %v231
    %2760 = vmatprep.subr.mxu0 0.0
    %2761 = vmatpush1.msra.mxu0 0.0
    %2762 = vmatprep.subr.mxu0 0.0
    %2763 = vmatpush1.msra.mxu0 0.0
    %2764 = vmatprep.subr.mxu0 0.0
    %2765 = vmatpush1.msra.mxu0 0.0
    %2766 = vmatprep.subr.mxu0 0.0
    %2767 = vmatpush1.msra.mxu0 0.0
    %2768 = vmatprep.subr.mxu0 0.0
    %2769 = vmatpush1.msra.mxu0 0.0
    %2770 = vmatprep.subr.mxu0 0.0
    %2771 = vmatpush1.msra.mxu0 0.0
    %2772 = vmatprep.subr.mxu0 0.0
    %2773 = vmatpush1.msra.mxu0 0.0
    %2774 = vmatprep.subr.mxu0 0.0
    %2775 = vmatpush1.msra.mxu0 0.0
    %2776 = vmatprep.subr.mxu0 0.0
    %2777 = vmatpush1.msra.mxu0 0.0
    %2778 = vmatprep.subr.mxu0 0.0
    %2779 = vmatpush1.msra.mxu0 0.0
    %2780 = vmatprep.subr.mxu0 0.0
    %2781 = vmatpush1.msra.mxu0 0.0
    %2782 = vmatprep.subr.mxu0 0.0
    %2783 = vmatpush1.msra.mxu0 0.0
    %2784 = vmatprep.subr.mxu0 0.0
    %2785 = vmatpush1.msra.mxu0 0.0
    %2786 = vmatprep.subr.mxu0 0.0
    %2787 = vmatpush1.msra.mxu0 0.0
    %2788 = vmatprep.subr.mxu0 0.0
    %2789 = vmatpush1.msra.mxu0 0.0
    %2790 = vmatprep.subr.mxu0 0.0
    %2791 = vmatpush1.msra.mxu0 0.0
    %2792 = vmatprep.mubr.f32.mxu0 0.0
    %2793 = vmatmul.mubr.f32.gmra.mrb[0].mxu0 %v2656
    %v2794 = vpop.f32.mrb[0].mxu0
    %v2795 = vadd.f32 %v740, %v2794
    %v2796 = vpop.f32.mrb[0].mxu0
    %v2797 = vadd.f32 %v744, %v2796
    %2798 = vdwg.mxu0
    %v2799 = vtanh.pop %v2724
    %v2800 = vtanh.pop %v2726
    %v2801 = vtanh.pop %v2795
    %v2802 = vtanh.pop %v2797
    %v2803 = vmul.f32 %v2799, 0.5
    %v2804 = vadd.f32 %v2803, 0.5
    %v2805 = vmul.f32 %v2800, 0.5
    %v2806 = vadd.f32 %v2805, 0.5
    %v2807 = vmul.f32 %v2802, 0.5
    %v2808 = vadd.f32 %v2807, 0.5
    %v2809 = vmul.f32 %v2806, %v2654
    %v2810 = vmul.f32 %v2804, %v2801
    %v2811 = vadd.f32 %v2809, %v2810
    %v2812 = vtanh.pop %v2811
    %v2813 = vmul.f32 %v2808, %v2812
    %2814 = vmatprep.subr.mxu0 %v40
    %2815 = vmatpush1.msra.mxu0 %v39
    %2816 = vmatprep.subr.mxu0 %v44
    %2817 = vmatpush1.msra.mxu0 %v43
    %2818 = vmatprep.subr.mxu0 %v48
    %2819 = vmatpush1.msra.mxu0 %v47
    %2820 = vmatprep.subr.mxu0 %v52
    %2821 = vmatpush1.msra.mxu0 %v51
    %2822 = vmatprep.subr.mxu0 %v56
    %2823 = vmatpush1.msra.mxu0 %v55
    %2824 = vmatprep.subr.mxu0 %v60
    %2825 = vmatpush1.msra.mxu0 %v59
    %2826 = vmatprep.subr.mxu0 %v64
    %2827 = vmatpush1.msra.mxu0 %v63
    %2828 = vmatprep.subr.mxu0 %v68
    %2829 = vmatpush1.msra.mxu0 %v67
    %2830 = vmatprep.subr.mxu0 %v72
    %2831 = vmatpush1.msra.mxu0 %v71
    %2832 = vmatprep.subr.mxu0 %v76
    %2833 = vmatpush1.msra.mxu0 %v75
    %2834 = vmatprep.subr.mxu0 %v80
    %2835 = vmatpush1.msra.mxu0 %v79
    %2836 = vmatprep.subr.mxu0 %v84
    %2837 = vmatpush1.msra.mxu0 %v83
    %2838 = vmatprep.subr.mxu0 %v88
    %2839 = vmatpush1.msra.mxu0 %v87
    %2840 = vmatprep.subr.mxu0 %v92
    %2841 = vmatpush1.msra.mxu0 %v91
    %2842 = vmatprep.subr.mxu0 %v96
    %2843 = vmatpush1.msra.mxu0 %v95
    %2844 = vmatprep.subr.mxu0 %v100
    %2845 = vmatpush1.msra.mxu0 %v99
    %2846 = vmatprep.subr.mxu0 0.0
    %2847 = vmatpush1.msra.mxu0 0.0
    %2848 = vmatprep.subr.mxu0 0.0
    %2849 = vmatpush1.msra.mxu0 0.0
    %2850 = vmatprep.subr.mxu0 0.0
    %2851 = vmatpush1.msra.mxu0 0.0
    %2852 = vmatprep.subr.mxu0 0.0
    %2853 = vmatpush1.msra.mxu0 0.0
    %2854 = vmatprep.subr.mxu0 0.0
    %2855 = vmatpush1.msra.mxu0 0.0
    %2856 = vmatprep.subr.mxu0 0.0
    %2857 = vmatpush1.msra.mxu0 0.0
    %2858 = vmatprep.subr.mxu0 0.0
    %2859 = vmatpush1.msra.mxu0 0.0
    %2860 = vmatprep.subr.mxu0 0.0
    %2861 = vmatpush1.msra.mxu0 0.0
    %2862 = vmatprep.subr.mxu0 0.0
    %2863 = vmatpush1.msra.mxu0 0.0
    %2864 = vmatprep.subr.mxu0 0.0
    %2865 = vmatpush1.msra.mxu0 0.0
    %2866 = vmatprep.subr.mxu0 0.0
    %2867 = vmatpush1.msra.mxu0 0.0
    %2868 = vmatprep.subr.mxu0 0.0
    %2869 = vmatpush1.msra.mxu0 0.0
    %2870 = vmatprep.subr.mxu0 0.0
    %2871 = vmatpush1.msra.mxu0 0.0
    %2872 = vmatprep.subr.mxu0 0.0
    %2873 = vmatpush1.msra.mxu0 0.0
    %2874 = vmatprep.subr.mxu0 0.0
    %2875 = vmatpush1.msra.mxu0 0.0
    %2876 = vmatprep.subr.mxu0 0.0
    %2877 = vmatpush1.msra.mxu0 0.0
    %2878 = vmatprep.mubr.f32.mxu0 0.0
    %2879 = vmatmul.mubr.f32.gmra.mrb[0].mxu0 %v2813
    %v2880 = vpop.f32.mrb[0].mxu0
    %v2881 = vadd.f32 0.0, %v2880
    %v2882 = vpop.f32.mrb[0].mxu0
    %v2883 = vadd.f32 0.0, %v2882
    %2884 = vdwg.mxu0
    %2885 = vmatprep.subr.mxu0 %v42
    %2886 = vmatpush1.msra.mxu0 %v41
    %2887 = vmatprep.subr.mxu0 %v46
    %2888 = vmatpush1.msra.mxu0 %v45
    %2889 = vmatprep.subr.mxu0 %v50
    %2890 = vmatpush1.msra.mxu0 %v49
    %2891 = vmatprep.subr.mxu0 %v54
    %2892 = vmatpush1.msra.mxu0 %v53
    %2893 = vmatprep.subr.mxu0 %v58
    %2894 = vmatpush1.msra.mxu0 %v57
    %2895 = vmatprep.subr.mxu0 %v62
    %2896 = vmatpush1.msra.mxu0 %v61
    %2897 = vmatprep.subr.mxu0 %v66
    %2898 = vmatpush1.msra.mxu0 %v65
    %2899 = vmatprep.subr.mxu0 %v70
    %2900 = vmatpush1.msra.mxu0 %v69
    %2901 = vmatprep.subr.mxu0 %v74
    %2902 = vmatpush1.msra.mxu0 %v73
    %2903 = vmatprep.subr.mxu0 %v78
    %2904 = vmatpush1.msra.mxu0 %v77
    %2905 = vmatprep.subr.mxu0 %v82
    %2906 = vmatpush1.msra.mxu0 %v81
    %2907 = vmatprep.subr.mxu0 %v86
    %2908 = vmatpush1.msra.mxu0 %v85
    %2909 = vmatprep.subr.mxu0 %v90
    %2910 = vmatpush1.msra.mxu0 %v89
    %2911 = vmatprep.subr.mxu0 %v94
    %2912 = vmatpush1.msra.mxu0 %v93
    %2913 = vmatprep.subr.mxu0 %v98
    %2914 = vmatpush1.msra.mxu0 %v97
    %2915 = vmatprep.subr.mxu0 %v102
    %2916 = vmatpush1.msra.mxu0 %v101
    %2917 = vmatprep.subr.mxu0 0.0
    %2918 = vmatpush1.msra.mxu0 0.0
    %2919 = vmatprep.subr.mxu0 0.0
    %2920 = vmatpush1.msra.mxu0 0.0
    %2921 = vmatprep.subr.mxu0 0.0
    %2922 = vmatpush1.msra.mxu0 0.0
    %2923 = vmatprep.subr.mxu0 0.0
    %2924 = vmatpush1.msra.mxu0 0.0
    %2925 = vmatprep.subr.mxu0 0.0
    %2926 = vmatpush1.msra.mxu0 0.0
    %2927 = vmatprep.subr.mxu0 0.0
    %2928 = vmatpush1.msra.mxu0 0.0
    %2929 = vmatprep.subr.mxu0 0.0
    %2930 = vmatpush1.msra.mxu0 0.0
    %2931 = vmatprep.subr.mxu0 0.0
    %2932 = vmatpush1.msra.mxu0 0.0
    %2933 = vmatprep.subr.mxu0 0.0
    %2934 = vmatpush1.msra.mxu0 0.0
    %2935 = vmatprep.subr.mxu0 0.0
    %2936 = vmatpush1.msra.mxu0 0.0
    %2937 = vmatprep.subr.mxu0 0.0
    %2938 = vmatpush1.msra.mxu0 0.0
    %2939 = vmatprep.subr.mxu0 0.0
    %2940 = vmatpush1.msra.mxu0 0.0
    %2941 = vmatprep.subr.mxu0 0.0
    %2942 = vmatpush1.msra.mxu0 0.0
    %2943 = vmatprep.subr.mxu0 0.0
    %2944 = vmatpush1.msra.mxu0 0.0
    %2945 = vmatprep.subr.mxu0 0.0
    %2946 = vmatpush1.msra.mxu0 0.0
    %2947 = vmatprep.subr.mxu0 0.0
    %2948 = vmatpush1.msra.mxu0 0.0
    %2949 = vmatprep.mubr.f32.mxu0 0.0
    %2950 = vmatmul.mubr.f32.gmra.mrb[0].mxu0 %v2813
    %v2951 = vpop.f32.mrb[0].mxu0
    %v2952 = vadd.f32 0.0, %v2951
    %v2953 = vpop.f32.mrb[0].mxu0
    %v2954 = vadd.f32 0.0, %v2953
    %2955 = vdwg.mxu0
    %v2956 = vadd.f32 %v563, %v2881
    %v2957 = vadd.f32 %v564, %v2883
    %v2958 = vadd.f32 %v565, %v2952
    %v2959 = vadd.f32 %v566, %v2954
    %v2960 = vtanh.pop %v2956
    %v2961 = vtanh.pop %v2957
    %v2962 = vtanh.pop %v2958
    %v2963 = vtanh.pop %v2959
    %v2964 = vmul.f32 %v2960, 0.5
    %v2965 = vadd.f32 %v2964, 0.5
    %v2966 = vmul.f32 %v2961, 0.5
    %v2967 = vadd.f32 %v2966, 0.5
    %v2968 = vmul.f32 %v2963, 0.5
    %v2969 = vadd.f32 %v2968, 0.5
    %v2970 = vmul.f32 %v2967, %v2811
    %v2971 = vmul.f32 %v2965, %v2962
    %v2972 = vadd.f32 %v2970, %v2971
    %v2973 = vtanh.pop %v2972
    %v2974 = vmul.f32 %v2969, %v2973
    %2975 = vmatprep.subr.mxu0 %v170
    %2976 = vmatpush1.msra.mxu0 %v169
    %2977 = vmatprep.subr.mxu0 %v174
    %2978 = vmatpush1.msra.mxu0 %v173
    %2979 = vmatprep.subr.mxu0 %v178
    %2980 = vmatpush1.msra.mxu0 %v177
    %2981 = vmatprep.subr.mxu0 %v182
    %2982 = vmatpush1.msra.mxu0 %v181
    %2983 = vmatprep.subr.mxu0 %v186
    %2984 = vmatpush1.msra.mxu0 %v185
    %2985 = vmatprep.subr.mxu0 %v190
    %2986 = vmatpush1.msra.mxu0 %v189
    %2987 = vmatprep.subr.mxu0 %v194
    %2988 = vmatpush1.msra.mxu0 %v193
    %2989 = vmatprep.subr.mxu0 %v198
    %2990 = vmatpush1.msra.mxu0 %v197
    %2991 = vmatprep.subr.mxu0 %v202
    %2992 = vmatpush1.msra.mxu0 %v201
    %2993 = vmatprep.subr.mxu0 %v206
    %2994 = vmatpush1.msra.mxu0 %v205
    %2995 = vmatprep.subr.mxu0 %v210
    %2996 = vmatpush1.msra.mxu0 %v209
    %2997 = vmatprep.subr.mxu0 %v214
    %2998 = vmatpush1.msra.mxu0 %v213
    %2999 = vmatprep.subr.mxu0 %v218
    %3000 = vmatpush1.msra.mxu0 %v217
    %3001 = vmatprep.subr.mxu0 %v222
    %3002 = vmatpush1.msra.mxu0 %v221
    %3003 = vmatprep.subr.mxu0 %v226
    %3004 = vmatpush1.msra.mxu0 %v225
    %3005 = vmatprep.subr.mxu0 %v230
    %3006 = vmatpush1.msra.mxu0 %v229
    %3007 = vmatprep.subr.mxu0 0.0
    %3008 = vmatpush1.msra.mxu0 0.0
    %3009 = vmatprep.subr.mxu0 0.0
    %3010 = vmatpush1.msra.mxu0 0.0
    %3011 = vmatprep.subr.mxu0 0.0
    %3012 = vmatpush1.msra.mxu0 0.0
    %3013 = vmatprep.subr.mxu0 0.0
    %3014 = vmatpush1.msra.mxu0 0.0
    %3015 = vmatprep.subr.mxu0 0.0
    %3016 = vmatpush1.msra.mxu0 0.0
    %3017 = vmatprep.subr.mxu0 0.0
    %3018 = vmatpush1.msra.mxu0 0.0
    %3019 = vmatprep.subr.mxu0 0.0
    %3020 = vmatpush1.msra.mxu0 0.0
    %3021 = vmatprep.subr.mxu0 0.0
    %3022 = vmatpush1.msra.mxu0 0.0
    %3023 = vmatprep.subr.mxu0 0.0
    %3024 = vmatpush1.msra.mxu0 0.0
    %3025 = vmatprep.subr.mxu0 0.0
    %3026 = vmatpush1.msra.mxu0 0.0
    %3027 = vmatprep.subr.mxu0 0.0
    %3028 = vmatpush1.msra.mxu0 0.0
    %3029 = vmatprep.subr.mxu0 0.0
    %3030 = vmatpush1.msra.mxu0 0.0
    %3031 = vmatprep.subr.mxu0 0.0
    %3032 = vmatpush1.msra.mxu0 0.0
    %3033 = vmatprep.subr.mxu0 0.0
    %3034 = vmatpush1.msra.mxu0 0.0
    %3035 = vmatprep.subr.mxu0 0.0
    %3036 = vmatpush1.msra.mxu0 0.0
    %3037 = vmatprep.subr.mxu0 0.0
    %3038 = vmatpush1.msra.mxu0 0.0
    %3039 = vmatprep.mubr.f32.mxu0 0.0
    %3040 = vmatmul.mubr.f32.gmra.mrb[0].mxu0 %v2974
    %v3041 = vpop.f32.mrb[0].mxu0
    %v3042 = vadd.f32 %v732, %v3041
    %v3043 = vpop.f32.mrb[0].mxu0
    %v3044 = vadd.f32 %v736, %v3043
    %3045 = vdwg.mxu0
    %3046 = vmatprep.subr.mxu0 %v172
    %3047 = vmatpush1.msra.mxu0 %v171
    %3048 = vmatprep.subr.mxu0 %v176
    %3049 = vmatpush1.msra.mxu0 %v175
    %3050 = vmatprep.subr.mxu0 %v180
    %3051 = vmatpush1.msra.mxu0 %v179
    %3052 = vmatprep.subr.mxu0 %v184
    %3053 = vmatpush1.msra.mxu0 %v183
    %3054 = vmatprep.subr.mxu0 %v188
    %3055 = vmatpush1.msra.mxu0 %v187
    %3056 = vmatprep.subr.mxu0 %v192
    %3057 = vmatpush1.msra.mxu0 %v191
    %3058 = vmatprep.subr.mxu0 %v196
    %3059 = vmatpush1.msra.mxu0 %v195
    %3060 = vmatprep.subr.mxu0 %v200
    %3061 = vmatpush1.msra.mxu0 %v199
    %3062 = vmatprep.subr.mxu0 %v204
    %3063 = vmatpush1.msra.mxu0 %v203
    %3064 = vmatprep.subr.mxu0 %v208
    %3065 = vmatpush1.msra.mxu0 %v207
    %3066 = vmatprep.subr.mxu0 %v212
    %3067 = vmatpush1.msra.mxu0 %v211
    %3068 = vmatprep.subr.mxu0 %v216
    %3069 = vmatpush1.msra.mxu0 %v215
    %3070 = vmatprep.subr.mxu0 %v220
    %3071 = vmatpush1.msra.mxu0 %v219
    %3072 = vmatprep.subr.mxu0 %v224
    %3073 = vmatpush1.msra.mxu0 %v223
    %3074 = vmatprep.subr.mxu0 %v228
    %3075 = vmatpush1.msra.mxu0 %v227
    %3076 = vmatprep.subr.mxu0 %v232
    %3077 = vmatpush1.msra.mxu0 %v231
    %3078 = vmatprep.subr.mxu0 0.0
    %3079 = vmatpush1.msra.mxu0 0.0
    %3080 = vmatprep.subr.mxu0 0.0
    %3081 = vmatpush1.msra.mxu0 0.0
    %3082 = vmatprep.subr.mxu0 0.0
    %3083 = vmatpush1.msra.mxu0 0.0
    %3084 = vmatprep.subr.mxu0 0.0
    %3085 = vmatpush1.msra.mxu0 0.0
    %3086 = vmatprep.subr.mxu0 0.0
    %3087 = vmatpush1.msra.mxu0 0.0
    %3088 = vmatprep.subr.mxu0 0.0
    %3089 = vmatpush1.msra.mxu0 0.0
    %3090 = vmatprep.subr.mxu0 0.0
    %3091 = vmatpush1.msra.mxu0 0.0
    %3092 = vmatprep.subr.mxu0 0.0
    %3093 = vmatpush1.msra.mxu0 0.0
    %3094 = vmatprep.subr.mxu0 0.0
    %3095 = vmatpush1.msra.mxu0 0.0
    %3096 = vmatprep.subr.mxu0 0.0
    %3097 = vmatpush1.msra.mxu0 0.0
    %3098 = vmatprep.subr.mxu0 0.0
    %3099 = vmatpush1.msra.mxu0 0.0
    %3100 = vmatprep.subr.mxu0 0.0
    %3101 = vmatpush1.msra.mxu0 0.0
    %3102 = vmatprep.subr.mxu0 0.0
    %3103 = vmatpush1.msra.mxu0 0.0
    %3104 = vmatprep.subr.mxu0 0.0
    %3105 = vmatpush1.msra.mxu0 0.0
    %3106 = vmatprep.subr.mxu0 0.0
    %3107 = vmatpush1.msra.mxu0 0.0
    %3108 = vmatprep.subr.mxu0 0.0
    %3109 = vmatpush1.msra.mxu0 0.0
    %3110 = vmatprep.mubr.f32.mxu0 0.0
    %3111 = vmatmul.mubr.f32.gmra.mrb[0].mxu0 %v2974
    %v3112 = vpop.f32.mrb[0].mxu0
    %v3113 = vadd.f32 %v740, %v3112
    %v3114 = vpop.f32.mrb[0].mxu0
    %v3115 = vadd.f32 %v744, %v3114
    %3116 = vdwg.mxu0
    %v3117 = vtanh.pop %v3042
    %v3118 = vtanh.pop %v3044
    %v3119 = vtanh.pop %v3113
    %v3120 = vtanh.pop %v3115
    %v3121 = vmul.f32 %v3117, 0.5
    %v3122 = vadd.f32 %v3121, 0.5
    %v3123 = vmul.f32 %v3118, 0.5
    %v3124 = vadd.f32 %v3123, 0.5
    %v3125 = vmul.f32 %v3120, 0.5
    %v3126 = vadd.f32 %v3125, 0.5
    %v3127 = vmul.f32 %v3124, %v2972
    %v3128 = vmul.f32 %v3122, %v3119
    %v3129 = vadd.f32 %v3127, %v3128
    %v3130 = vtanh.pop %v3129
    %v3131 = vmul.f32 %v3126, %v3130
    %v3133 = vlaneseq
    %v3134 = vshrl.u32 %v3133, 7
    %v3135 = vsub.s32 0, %v3134
    %v3136 = vrot.slane %v168, %v3135
    %v3137 = vlaneseq
    %v3138 = vshrl.u32 %v3137, 7
    %v3139 = vsub.s32 1, %v3138
    %v3140 = vrot.slane %v168, %v3139
    %v3141 = vlaneseq
    %v3142 = vshrl.u32 %v3141, 7
    %v3143 = vsub.s32 2, %v3142
    %v3144 = vrot.slane %v168, %v3143
    %v3145 = vlaneseq
    %v3146 = vshrl.u32 %v3145, 7
    %v3147 = vsub.s32 3, %v3146
    %v3148 = vrot.slane %v168, %v3147
    %3153 = vmatprep.subr.mxu0 %v105
    %3154 = vmatpush1.msra.mxu0 %v104
    %3155 = vmatprep.subr.mxu0 %v109
    %3156 = vmatpush1.msra.mxu0 %v108
    %3157 = vmatprep.subr.mxu0 %v113
    %3158 = vmatpush1.msra.mxu0 %v112
    %3159 = vmatprep.subr.mxu0 %v117
    %3160 = vmatpush1.msra.mxu0 %v116
    %3161 = vmatprep.subr.mxu0 %v121
    %3162 = vmatpush1.msra.mxu0 %v120
    %3163 = vmatprep.subr.mxu0 %v125
    %3164 = vmatpush1.msra.mxu0 %v124
    %3165 = vmatprep.subr.mxu0 %v129
    %3166 = vmatpush1.msra.mxu0 %v128
    %3167 = vmatprep.subr.mxu0 %v133
    %3168 = vmatpush1.msra.mxu0 %v132
    %3169 = vmatprep.subr.mxu0 %v137
    %3170 = vmatpush1.msra.mxu0 %v136
    %3171 = vmatprep.subr.mxu0 %v141
    %3172 = vmatpush1.msra.mxu0 %v140
    %3173 = vmatprep.subr.mxu0 %v145
    %3174 = vmatpush1.msra.mxu0 %v144
    %3175 = vmatprep.subr.mxu0 %v149
    %3176 = vmatpush1.msra.mxu0 %v148
    %3177 = vmatprep.subr.mxu0 %v153
    %3178 = vmatpush1.msra.mxu0 %v152
    %3179 = vmatprep.subr.mxu0 %v157
    %3180 = vmatpush1.msra.mxu0 %v156
    %3181 = vmatprep.subr.mxu0 %v161
    %3182 = vmatpush1.msra.mxu0 %v160
    %3183 = vmatprep.subr.mxu0 %v165
    %3184 = vmatpush1.msra.mxu0 %v164
    %3185 = vmatprep.subr.mxu0 0.0
    %3186 = vmatpush1.msra.mxu0 0.0
    %3187 = vmatprep.subr.mxu0 0.0
    %3188 = vmatpush1.msra.mxu0 0.0
    %3189 = vmatprep.subr.mxu0 0.0
    %3190 = vmatpush1.msra.mxu0 0.0
    %3191 = vmatprep.subr.mxu0 0.0
    %3192 = vmatpush1.msra.mxu0 0.0
    %3193 = vmatprep.subr.mxu0 0.0
    %3194 = vmatpush1.msra.mxu0 0.0
    %3195 = vmatprep.subr.mxu0 0.0
    %3196 = vmatpush1.msra.mxu0 0.0
    %3197 = vmatprep.subr.mxu0 0.0
    %3198 = vmatpush1.msra.mxu0 0.0
    %3199 = vmatprep.subr.mxu0 0.0
    %3200 = vmatpush1.msra.mxu0 0.0
    %3201 = vmatprep.subr.mxu0 0.0
    %3202 = vmatpush1.msra.mxu0 0.0
    %3203 = vmatprep.subr.mxu0 0.0
    %3204 = vmatpush1.msra.mxu0 0.0
    %3205 = vmatprep.subr.mxu0 0.0
    %3206 = vmatpush1.msra.mxu0 0.0
    %3207 = vmatprep.subr.mxu0 0.0
    %3208 = vmatpush1.msra.mxu0 0.0
    %3209 = vmatprep.subr.mxu0 0.0
    %3210 = vmatpush1.msra.mxu0 0.0
    %3211 = vmatprep.subr.mxu0 0.0
    %3212 = vmatpush1.msra.mxu0 0.0
    %3213 = vmatprep.subr.mxu0 0.0
    %3214 = vmatpush1.msra.mxu0 0.0
    %3215 = vmatprep.subr.mxu0 0.0
    %3216 = vmatpush1.msra.mxu0 0.0
    %3217 = vmatprep.mubr.f32.mxu0 0.0
    %3218 = vmatmul.mubr.f32.gmra.mrb[0].mxu0 %v3131
    %v3219 = vpop.f32.mrb[0].mxu0
    %v3220 = vadd.f32 %v3136, %v3219
    %v3221 = vpop.f32.mrb[0].mxu0
    %v3222 = vadd.f32 %v3140, %v3221
    %3223 = vdwg.mxu0
    %3224 = vmatprep.subr.mxu0 %v107
    %3225 = vmatpush1.msra.mxu0 %v106
    %3226 = vmatprep.subr.mxu0 %v111
    %3227 = vmatpush1.msra.mxu0 %v110
    %3228 = vmatprep.subr.mxu0 %v115
    %3229 = vmatpush1.msra.mxu0 %v114
    %3230 = vmatprep.subr.mxu0 %v119
    %3231 = vmatpush1.msra.mxu0 %v118
    %3232 = vmatprep.subr.mxu0 %v123
    %3233 = vmatpush1.msra.mxu0 %v122
    %3234 = vmatprep.subr.mxu0 %v127
    %3235 = vmatpush1.msra.mxu0 %v126
    %3236 = vmatprep.subr.mxu0 %v131
    %3237 = vmatpush1.msra.mxu0 %v130
    %3238 = vmatprep.subr.mxu0 %v135
    %3239 = vmatpush1.msra.mxu0 %v134
    %3240 = vmatprep.subr.mxu0 %v139
    %3241 = vmatpush1.msra.mxu0 %v138
    %3242 = vmatprep.subr.mxu0 %v143
    %3243 = vmatpush1.msra.mxu0 %v142
    %3244 = vmatprep.subr.mxu0 %v147
    %3245 = vmatpush1.msra.mxu0 %v146
    %3246 = vmatprep.subr.mxu0 %v151
    %3247 = vmatpush1.msra.mxu0 %v150
    %3248 = vmatprep.subr.mxu0 %v155
    %3249 = vmatpush1.msra.mxu0 %v154
    %3250 = vmatprep.subr.mxu0 %v159
    %3251 = vmatpush1.msra.mxu0 %v158
    %3252 = vmatprep.subr.mxu0 %v163
    %3253 = vmatpush1.msra.mxu0 %v162
    %3254 = vmatprep.subr.mxu0 %v167
    %3255 = vmatpush1.msra.mxu0 %v166
    %3256 = vmatprep.subr.mxu0 0.0
    %3257 = vmatpush1.msra.mxu0 0.0
    %3258 = vmatprep.subr.mxu0 0.0
    %3259 = vmatpush1.msra.mxu0 0.0
    %3260 = vmatprep.subr.mxu0 0.0
    %3261 = vmatpush1.msra.mxu0 0.0
    %3262 = vmatprep.subr.mxu0 0.0
    %3263 = vmatpush1.msra.mxu0 0.0
    %3264 = vmatprep.subr.mxu0 0.0
    %3265 = vmatpush1.msra.mxu0 0.0
    %3266 = vmatprep.subr.mxu0 0.0
    %3267 = vmatpush1.msra.mxu0 0.0
    %3268 = vmatprep.subr.mxu0 0.0
    %3269 = vmatpush1.msra.mxu0 0.0
    %3270 = vmatprep.subr.mxu0 0.0
    %3271 = vmatpush1.msra.mxu0 0.0
    %3272 = vmatprep.subr.mxu0 0.0
    %3273 = vmatpush1.msra.mxu0 0.0
    %3274 = vmatprep.subr.mxu0 0.0
    %3275 = vmatpush1.msra.mxu0 0.0
    %3276 = vmatprep.subr.mxu0 0.0
    %3277 = vmatpush1.msra.mxu0 0.0
    %3278 = vmatprep.subr.mxu0 0.0
    %3279 = vmatpush1.msra.mxu0 0.0
    %3280 = vmatprep.subr.mxu0 0.0
    %3281 = vmatpush1.msra.mxu0 0.0
    %3282 = vmatprep.subr.mxu0 0.0
    %3283 = vmatpush1.msra.mxu0 0.0
    %3284 = vmatprep.subr.mxu0 0.0
    %3285 = vmatpush1.msra.mxu0 0.0
    %3286 = vmatprep.subr.mxu0 0.0
    %3287 = vmatpush1.msra.mxu0 0.0
    %3288 = vmatprep.mubr.f32.mxu0 0.0
    %3289 = vmatmul.mubr.f32.gmra.mrb[0].mxu0 %v3131
    %v3290 = vpop.f32.mrb[0].mxu0
    %v3291 = vadd.f32 %v3144, %v3290
    %v3292 = vpop.f32.mrb[0].mxu0
    %v3293 = vadd.f32 %v3148, %v3292
    %3294 = vdwg.mxu0
    %v3295 = vtanh.pop %v3220
    %v3296 = vtanh.pop %v3222
    %v3297 = vtanh.pop %v3291
    %v3298 = vtanh.pop %v3293
    %v3299 = vmul.f32 %v3295, 0.5
    %v3300 = vadd.f32 %v3299, 0.5
    %v3301 = vmul.f32 %v3296, 0.5
    %v3302 = vadd.f32 %v3301, 0.5
    %v3303 = vmul.f32 %v3298, 0.5
    %v3304 = vadd.f32 %v3303, 0.5
    %v3305 = vmul.f32 %v3302, %v3129
    %v3306 = vmul.f32 %v3300, %v3297
    %v3307 = vadd.f32 %v3305, %v3306
    %v3308 = vtanh.pop %v3307
    %v3309 = vmul.f32 %v3304, %v3308
    %3310 = vmatprep.subr.mxu0 %v170
    %3311 = vmatpush1.msra.mxu0 %v169
    %3312 = vmatprep.subr.mxu0 %v174
    %3313 = vmatpush1.msra.mxu0 %v173
    %3314 = vmatprep.subr.mxu0 %v178
    %3315 = vmatpush1.msra.mxu0 %v177
    %3316 = vmatprep.subr.mxu0 %v182
    %3317 = vmatpush1.msra.mxu0 %v181
    %3318 = vmatprep.subr.mxu0 %v186
    %3319 = vmatpush1.msra.mxu0 %v185
    %3320 = vmatprep.subr.mxu0 %v190
    %3321 = vmatpush1.msra.mxu0 %v189
    %3322 = vmatprep.subr.mxu0 %v194
    %3323 = vmatpush1.msra.mxu0 %v193
    %3324 = vmatprep.subr.mxu0 %v198
    %3325 = vmatpush1.msra.mxu0 %v197
    %3326 = vmatprep.subr.mxu0 %v202
    %3327 = vmatpush1.msra.mxu0 %v201
    %3328 = vmatprep.subr.mxu0 %v206
    %3329 = vmatpush1.msra.mxu0 %v205
    %3330 = vmatprep.subr.mxu0 %v210
    %3331 = vmatpush1.msra.mxu0 %v209
    %3332 = vmatprep.subr.mxu0 %v214
    %3333 = vmatpush1.msra.mxu0 %v213
    %3334 = vmatprep.subr.mxu0 %v218
    %3335 = vmatpush1.msra.mxu0 %v217
    %3336 = vmatprep.subr.mxu0 %v222
    %3337 = vmatpush1.msra.mxu0 %v221
    %3338 = vmatprep.subr.mxu0 %v226
    %3339 = vmatpush1.msra.mxu0 %v225
    %3340 = vmatprep.subr.mxu0 %v230
    %3341 = vmatpush1.msra.mxu0 %v229
    %3342 = vmatprep.subr.mxu0 0.0
    %3343 = vmatpush1.msra.mxu0 0.0
    %3344 = vmatprep.subr.mxu0 0.0
    %3345 = vmatpush1.msra.mxu0 0.0
    %3346 = vmatprep.subr.mxu0 0.0
    %3347 = vmatpush1.msra.mxu0 0.0
    %3348 = vmatprep.subr.mxu0 0.0
    %3349 = vmatpush1.msra.mxu0 0.0
    %3350 = vmatprep.subr.mxu0 0.0
    %3351 = vmatpush1.msra.mxu0 0.0
    %3352 = vmatprep.subr.mxu0 0.0
    %3353 = vmatpush1.msra.mxu0 0.0
    %3354 = vmatprep.subr.mxu0 0.0
    %3355 = vmatpush1.msra.mxu0 0.0
    %3356 = vmatprep.subr.mxu0 0.0
    %3357 = vmatpush1.msra.mxu0 0.0
    %3358 = vmatprep.subr.mxu0 0.0
    %3359 = vmatpush1.msra.mxu0 0.0
    %3360 = vmatprep.subr.mxu0 0.0
    %3361 = vmatpush1.msra.mxu0 0.0
    %3362 = vmatprep.subr.mxu0 0.0
    %3363 = vmatpush1.msra.mxu0 0.0
    %3364 = vmatprep.subr.mxu0 0.0
    %3365 = vmatpush1.msra.mxu0 0.0
    %3366 = vmatprep.subr.mxu0 0.0
    %3367 = vmatpush1.msra.mxu0 0.0
    %3368 = vmatprep.subr.mxu0 0.0
    %3369 = vmatpush1.msra.mxu0 0.0
    %3370 = vmatprep.subr.mxu0 0.0
    %3371 = vmatpush1.msra.mxu0 0.0
    %3372 = vmatprep.subr.mxu0 0.0
    %3373 = vmatpush1.msra.mxu0 0.0
    %3374 = vmatprep.mubr.f32.mxu0 0.0
    %3375 = vmatmul.mubr.f32.gmra.mrb[0].mxu0 %v3309
    %v3376 = vpop.f32.mrb[0].mxu0
    %v3377 = vadd.f32 %v732, %v3376
    %v3378 = vpop.f32.mrb[0].mxu0
    %v3379 = vadd.f32 %v736, %v3378
    %3380 = vdwg.mxu0
    %3381 = vmatprep.subr.mxu0 %v172
    %3382 = vmatpush1.msra.mxu0 %v171
    %3383 = vmatprep.subr.mxu0 %v176
    %3384 = vmatpush1.msra.mxu0 %v175
    %3385 = vmatprep.subr.mxu0 %v180
    %3386 = vmatpush1.msra.mxu0 %v179
    %3387 = vmatprep.subr.mxu0 %v184
    %3388 = vmatpush1.msra.mxu0 %v183
    %3389 = vmatprep.subr.mxu0 %v188
    %3390 = vmatpush1.msra.mxu0 %v187
    %3391 = vmatprep.subr.mxu0 %v192
    %3392 = vmatpush1.msra.mxu0 %v191
    %3393 = vmatprep.subr.mxu0 %v196
    %3394 = vmatpush1.msra.mxu0 %v195
    %3395 = vmatprep.subr.mxu0 %v200
    %3396 = vmatpush1.msra.mxu0 %v199
    %3397 = vmatprep.subr.mxu0 %v204
    %3398 = vmatpush1.msra.mxu0 %v203
    %3399 = vmatprep.subr.mxu0 %v208
    %3400 = vmatpush1.msra.mxu0 %v207
    %3401 = vmatprep.subr.mxu0 %v212
    %3402 = vmatpush1.msra.mxu0 %v211
    %3403 = vmatprep.subr.mxu0 %v216
    %3404 = vmatpush1.msra.mxu0 %v215
    %3405 = vmatprep.subr.mxu0 %v220
    %3406 = vmatpush1.msra.mxu0 %v219
    %3407 = vmatprep.subr.mxu0 %v224
    %3408 = vmatpush1.msra.mxu0 %v223
    %3409 = vmatprep.subr.mxu0 %v228
    %3410 = vmatpush1.msra.mxu0 %v227
    %3411 = vmatprep.subr.mxu0 %v232
    %3412 = vmatpush1.msra.mxu0 %v231
    %3413 = vmatprep.subr.mxu0 0.0
    %3414 = vmatpush1.msra.mxu0 0.0
    %3415 = vmatprep.subr.mxu0 0.0
    %3416 = vmatpush1.msra.mxu0 0.0
    %3417 = vmatprep.subr.mxu0 0.0
    %3418 = vmatpush1.msra.mxu0 0.0
    %3419 = vmatprep.subr.mxu0 0.0
    %3420 = vmatpush1.msra.mxu0 0.0
    %3421 = vmatprep.subr.mxu0 0.0
    %3422 = vmatpush1.msra.mxu0 0.0
    %3423 = vmatprep.subr.mxu0 0.0
    %3424 = vmatpush1.msra.mxu0 0.0
    %3425 = vmatprep.subr.mxu0 0.0
    %3426 = vmatpush1.msra.mxu0 0.0
    %3427 = vmatprep.subr.mxu0 0.0
    %3428 = vmatpush1.msra.mxu0 0.0
    %3429 = vmatprep.subr.mxu0 0.0
    %3430 = vmatpush1.msra.mxu0 0.0
    %3431 = vmatprep.subr.mxu0 0.0
    %3432 = vmatpush1.msra.mxu0 0.0
    %3433 = vmatprep.subr.mxu0 0.0
    %3434 = vmatpush1.msra.mxu0 0.0
    %3435 = vmatprep.subr.mxu0 0.0
    %3436 = vmatpush1.msra.mxu0 0.0
    %3437 = vmatprep.subr.mxu0 0.0
    %3438 = vmatpush1.msra.mxu0 0.0
    %3439 = vmatprep.subr.mxu0 0.0
    %3440 = vmatpush1.msra.mxu0 0.0
    %3441 = vmatprep.subr.mxu0 0.0
    %3442 = vmatpush1.msra.mxu0 0.0
    %3443 = vmatprep.subr.mxu0 0.0
    %3444 = vmatpush1.msra.mxu0 0.0
    %3445 = vmatprep.mubr.f32.mxu0 0.0
    %3446 = vmatmul.mubr.f32.gmra.mrb[0].mxu0 %v3309
    %v3447 = vpop.f32.mrb[0].mxu0
    %v3448 = vadd.f32 %v740, %v3447
    %v3449 = vpop.f32.mrb[0].mxu0
    %v3450 = vadd.f32 %v744, %v3449
    %3451 = vdwg.mxu0
    %v3452 = vtanh.pop %v3377
    %v3453 = vtanh.pop %v3379
    %v3454 = vtanh.pop %v3448
    %v3455 = vtanh.pop %v3450
    %v3456 = vmul.f32 %v3452, 0.5
    %v3457 = vadd.f32 %v3456, 0.5
    %v3458 = vmul.f32 %v3453, 0.5
    %v3459 = vadd.f32 %v3458, 0.5
    %v3460 = vmul.f32 %v3455, 0.5
    %v3461 = vadd.f32 %v3460, 0.5
    %v3462 = vmul.f32 %v3459, %v3307
    %v3463 = vmul.f32 %v3457, %v3454
    %v3464 = vadd.f32 %v3462, %v3463
    %v3465 = vtanh.pop %v3464
    %v3466 = vmul.f32 %v3461, %v3465
    %3467 = vmatprep.subr.mxu0 %v105
    %3468 = vmatpush1.msra.mxu0 %v104
    %3469 = vmatprep.subr.mxu0 %v109
    %3470 = vmatpush1.msra.mxu0 %v108
    %3471 = vmatprep.subr.mxu0 %v113
    %3472 = vmatpush1.msra.mxu0 %v112
    %3473 = vmatprep.subr.mxu0 %v117
    %3474 = vmatpush1.msra.mxu0 %v116
    %3475 = vmatprep.subr.mxu0 %v121
    %3476 = vmatpush1.msra.mxu0 %v120
    %3477 = vmatprep.subr.mxu0 %v125
    %3478 = vmatpush1.msra.mxu0 %v124
    %3479 = vmatprep.subr.mxu0 %v129
    %3480 = vmatpush1.msra.mxu0 %v128
    %3481 = vmatprep.subr.mxu0 %v133
    %3482 = vmatpush1.msra.mxu0 %v132
    %3483 = vmatprep.subr.mxu0 %v137
    %3484 = vmatpush1.msra.mxu0 %v136
    %3485 = vmatprep.subr.mxu0 %v141
    %3486 = vmatpush1.msra.mxu0 %v140
    %3487 = vmatprep.subr.mxu0 %v145
    %3488 = vmatpush1.msra.mxu0 %v144
    %3489 = vmatprep.subr.mxu0 %v149
    %3490 = vmatpush1.msra.mxu0 %v148
    %3491 = vmatprep.subr.mxu0 %v153
    %3492 = vmatpush1.msra.mxu0 %v152
    %3493 = vmatprep.subr.mxu0 %v157
    %3494 = vmatpush1.msra.mxu0 %v156
    %3495 = vmatprep.subr.mxu0 %v161
    %3496 = vmatpush1.msra.mxu0 %v160
    %3497 = vmatprep.subr.mxu0 %v165
    %3498 = vmatpush1.msra.mxu0 %v164
    %3499 = vmatprep.subr.mxu0 0.0
    %3500 = vmatpush1.msra.mxu0 0.0
    %3501 = vmatprep.subr.mxu0 0.0
    %3502 = vmatpush1.msra.mxu0 0.0
    %3503 = vmatprep.subr.mxu0 0.0
    %3504 = vmatpush1.msra.mxu0 0.0
    %3505 = vmatprep.subr.mxu0 0.0
    %3506 = vmatpush1.msra.mxu0 0.0
    %3507 = vmatprep.subr.mxu0 0.0
    %3508 = vmatpush1.msra.mxu0 0.0
    %3509 = vmatprep.subr.mxu0 0.0
    %3510 = vmatpush1.msra.mxu0 0.0
    %3511 = vmatprep.subr.mxu0 0.0
    %3512 = vmatpush1.msra.mxu0 0.0
    %3513 = vmatprep.subr.mxu0 0.0
    %3514 = vmatpush1.msra.mxu0 0.0
    %3515 = vmatprep.subr.mxu0 0.0
    %3516 = vmatpush1.msra.mxu0 0.0
    %3517 = vmatprep.subr.mxu0 0.0
    %3518 = vmatpush1.msra.mxu0 0.0
    %3519 = vmatprep.subr.mxu0 0.0
    %3520 = vmatpush1.msra.mxu0 0.0
    %3521 = vmatprep.subr.mxu0 0.0
    %3522 = vmatpush1.msra.mxu0 0.0
    %3523 = vmatprep.subr.mxu0 0.0
    %3524 = vmatpush1.msra.mxu0 0.0
    %3525 = vmatprep.subr.mxu0 0.0
    %3526 = vmatpush1.msra.mxu0 0.0
    %3527 = vmatprep.subr.mxu0 0.0
    %3528 = vmatpush1.msra.mxu0 0.0
    %3529 = vmatprep.subr.mxu0 0.0
    %3530 = vmatpush1.msra.mxu0 0.0
    %3531 = vmatprep.mubr.f32.mxu0 0.0
    %3532 = vmatmul.mubr.f32.gmra.mrb[0].mxu0 %v3466
    %v3533 = vpop.f32.mrb[0].mxu0
    %v3534 = vadd.f32 %v3136, %v3533
    %v3535 = vpop.f32.mrb[0].mxu0
    %v3536 = vadd.f32 %v3140, %v3535
    %3537 = vdwg.mxu0
    %3538 = vmatprep.subr.mxu0 %v107
    %3539 = vmatpush1.msra.mxu0 %v106
    %3540 = vmatprep.subr.mxu0 %v111
    %3541 = vmatpush1.msra.mxu0 %v110
    %3542 = vmatprep.subr.mxu0 %v115
    %3543 = vmatpush1.msra.mxu0 %v114
    %3544 = vmatprep.subr.mxu0 %v119
    %3545 = vmatpush1.msra.mxu0 %v118
    %3546 = vmatprep.subr.mxu0 %v123
    %3547 = vmatpush1.msra.mxu0 %v122
    %3548 = vmatprep.subr.mxu0 %v127
    %3549 = vmatpush1.msra.mxu0 %v126
    %3550 = vmatprep.subr.mxu0 %v131
    %3551 = vmatpush1.msra.mxu0 %v130
    %3552 = vmatprep.subr.mxu0 %v135
    %3553 = vmatpush1.msra.mxu0 %v134
    %3554 = vmatprep.subr.mxu0 %v139
    %3555 = vmatpush1.msra.mxu0 %v138
    %3556 = vmatprep.subr.mxu0 %v143
    %3557 = vmatpush1.msra.mxu0 %v142
    %3558 = vmatprep.subr.mxu0 %v147
    %3559 = vmatpush1.msra.mxu0 %v146
    %3560 = vmatprep.subr.mxu0 %v151
    %3561 = vmatpush1.msra.mxu0 %v150
    %3562 = vmatprep.subr.mxu0 %v155
    %3563 = vmatpush1.msra.mxu0 %v154
    %3564 = vmatprep.subr.mxu0 %v159
    %3565 = vmatpush1.msra.mxu0 %v158
    %3566 = vmatprep.subr.mxu0 %v163
    %3567 = vmatpush1.msra.mxu0 %v162
    %3568 = vmatprep.subr.mxu0 %v167
    %3569 = vmatpush1.msra.mxu0 %v166
    %3570 = vmatprep.subr.mxu0 0.0
    %3571 = vmatpush1.msra.mxu0 0.0
    %3572 = vmatprep.subr.mxu0 0.0
    %3573 = vmatpush1.msra.mxu0 0.0
    %3574 = vmatprep.subr.mxu0 0.0
    %3575 = vmatpush1.msra.mxu0 0.0
    %3576 = vmatprep.subr.mxu0 0.0
    %3577 = vmatpush1.msra.mxu0 0.0
    %3578 = vmatprep.subr.mxu0 0.0
    %3579 = vmatpush1.msra.mxu0 0.0
    %3580 = vmatprep.subr.mxu0 0.0
    %3581 = vmatpush1.msra.mxu0 0.0
    %3582 = vmatprep.subr.mxu0 0.0
    %3583 = vmatpush1.msra.mxu0 0.0
    %3584 = vmatprep.subr.mxu0 0.0
    %3585 = vmatpush1.msra.mxu0 0.0
    %3586 = vmatprep.subr.mxu0 0.0
    %3587 = vmatpush1.msra.mxu0 0.0
    %3588 = vmatprep.subr.mxu0 0.0
    %3589 = vmatpush1.msra.mxu0 0.0
    %3590 = vmatprep.subr.mxu0 0.0
    %3591 = vmatpush1.msra.mxu0 0.0
    %3592 = vmatprep.subr.mxu0 0.0
    %3593 = vmatpush1.msra.mxu0 0.0
    %3594 = vmatprep.subr.mxu0 0.0
    %3595 = vmatpush1.msra.mxu0 0.0
    %3596 = vmatprep.subr.mxu0 0.0
    %3597 = vmatpush1.msra.mxu0 0.0
    %3598 = vmatprep.subr.mxu0 0.0
    %3599 = vmatpush1.msra.mxu0 0.0
    %3600 = vmatprep.subr.mxu0 0.0
    %3601 = vmatpush1.msra.mxu0 0.0
    %3602 = vmatprep.mubr.f32.mxu0 0.0
    %3603 = vmatmul.mubr.f32.gmra.mrb[0].mxu0 %v3466
    %v3604 = vpop.f32.mrb[0].mxu0
    %v3605 = vadd.f32 %v3144, %v3604
    %v3606 = vpop.f32.mrb[0].mxu0
    %v3607 = vadd.f32 %v3148, %v3606
    %3608 = vdwg.mxu0
    %v3609 = vtanh.pop %v3534
    %v3610 = vtanh.pop %v3536
    %v3611 = vtanh.pop %v3605
    %v3612 = vtanh.pop %v3607
    %v3613 = vmul.f32 %v3609, 0.5
    %v3614 = vadd.f32 %v3613, 0.5
    %v3615 = vmul.f32 %v3610, 0.5
    %v3616 = vadd.f32 %v3615, 0.5
    %v3617 = vmul.f32 %v3612, 0.5
    %v3618 = vadd.f32 %v3617, 0.5
    %v3619 = vmul.f32 %v3616, %v3464
    %v3620 = vmul.f32 %v3614, %v3611
    %v3621 = vadd.f32 %v3619, %v3620
    %v3622 = vtanh.pop %v3621
    %v3623 = vmul.f32 %v3618, %v3622
    %3624 = vmatprep.subr.mxu0 %v170
    %3625 = vmatpush1.msra.mxu0 %v169
    %3626 = vmatprep.subr.mxu0 %v174
    %3627 = vmatpush1.msra.mxu0 %v173
    %3628 = vmatprep.subr.mxu0 %v178
    %3629 = vmatpush1.msra.mxu0 %v177
    %3630 = vmatprep.subr.mxu0 %v182
    %3631 = vmatpush1.msra.mxu0 %v181
    %3632 = vmatprep.subr.mxu0 %v186
    %3633 = vmatpush1.msra.mxu0 %v185
    %3634 = vmatprep.subr.mxu0 %v190
    %3635 = vmatpush1.msra.mxu0 %v189
    %3636 = vmatprep.subr.mxu0 %v194
    %3637 = vmatpush1.msra.mxu0 %v193
    %3638 = vmatprep.subr.mxu0 %v198
    %3639 = vmatpush1.msra.mxu0 %v197
    %3640 = vmatprep.subr.mxu0 %v202
    %3641 = vmatpush1.msra.mxu0 %v201
    %3642 = vmatprep.subr.mxu0 %v206
    %3643 = vmatpush1.msra.mxu0 %v205
    %3644 = vmatprep.subr.mxu0 %v210
    %3645 = vmatpush1.msra.mxu0 %v209
    %3646 = vmatprep.subr.mxu0 %v214
    %3647 = vmatpush1.msra.mxu0 %v213
    %3648 = vmatprep.subr.mxu0 %v218
    %3649 = vmatpush1.msra.mxu0 %v217
    %3650 = vmatprep.subr.mxu0 %v222
    %3651 = vmatpush1.msra.mxu0 %v221
    %3652 = vmatprep.subr.mxu0 %v226
    %3653 = vmatpush1.msra.mxu0 %v225
    %3654 = vmatprep.subr.mxu0 %v230
    %3655 = vmatpush1.msra.mxu0 %v229
    %3656 = vmatprep.subr.mxu0 0.0
    %3657 = vmatpush1.msra.mxu0 0.0
    %3658 = vmatprep.subr.mxu0 0.0
    %3659 = vmatpush1.msra.mxu0 0.0
    %3660 = vmatprep.subr.mxu0 0.0
    %3661 = vmatpush1.msra.mxu0 0.0
    %3662 = vmatprep.subr.mxu0 0.0
    %3663 = vmatpush1.msra.mxu0 0.0
    %3664 = vmatprep.subr.mxu0 0.0
    %3665 = vmatpush1.msra.mxu0 0.0
    %3666 = vmatprep.subr.mxu0 0.0
    %3667 = vmatpush1.msra.mxu0 0.0
    %3668 = vmatprep.subr.mxu0 0.0
    %3669 = vmatpush1.msra.mxu0 0.0
    %3670 = vmatprep.subr.mxu0 0.0
    %3671 = vmatpush1.msra.mxu0 0.0
    %3672 = vmatprep.subr.mxu0 0.0
    %3673 = vmatpush1.msra.mxu0 0.0
    %3674 = vmatprep.subr.mxu0 0.0
    %3675 = vmatpush1.msra.mxu0 0.0
    %3676 = vmatprep.subr.mxu0 0.0
    %3677 = vmatpush1.msra.mxu0 0.0
    %3678 = vmatprep.subr.mxu0 0.0
    %3679 = vmatpush1.msra.mxu0 0.0
    %3680 = vmatprep.subr.mxu0 0.0
    %3681 = vmatpush1.msra.mxu0 0.0
    %3682 = vmatprep.subr.mxu0 0.0
    %3683 = vmatpush1.msra.mxu0 0.0
    %3684 = vmatprep.subr.mxu0 0.0
    %3685 = vmatpush1.msra.mxu0 0.0
    %3686 = vmatprep.subr.mxu0 0.0
    %3687 = vmatpush1.msra.mxu0 0.0
    %3688 = vmatprep.mubr.f32.mxu0 0.0
    %3689 = vmatmul.mubr.f32.gmra.mrb[0].mxu0 %v3623
    %v3690 = vpop.f32.mrb[0].mxu0
    %v3691 = vadd.f32 %v732, %v3690
    %v3692 = vpop.f32.mrb[0].mxu0
    %v3693 = vadd.f32 %v736, %v3692
    %3694 = vdwg.mxu0
    %3695 = vmatprep.subr.mxu0 %v172
    %3696 = vmatpush1.msra.mxu0 %v171
    %3697 = vmatprep.subr.mxu0 %v176
    %3698 = vmatpush1.msra.mxu0 %v175
    %3699 = vmatprep.subr.mxu0 %v180
    %3700 = vmatpush1.msra.mxu0 %v179
    %3701 = vmatprep.subr.mxu0 %v184
    %3702 = vmatpush1.msra.mxu0 %v183
    %3703 = vmatprep.subr.mxu0 %v188
    %3704 = vmatpush1.msra.mxu0 %v187
    %3705 = vmatprep.subr.mxu0 %v192
    %3706 = vmatpush1.msra.mxu0 %v191
    %3707 = vmatprep.subr.mxu0 %v196
    %3708 = vmatpush1.msra.mxu0 %v195
    %3709 = vmatprep.subr.mxu0 %v200
    %3710 = vmatpush1.msra.mxu0 %v199
    %3711 = vmatprep.subr.mxu0 %v204
    %3712 = vmatpush1.msra.mxu0 %v203
    %3713 = vmatprep.subr.mxu0 %v208
    %3714 = vmatpush1.msra.mxu0 %v207
    %3715 = vmatprep.subr.mxu0 %v212
    %3716 = vmatpush1.msra.mxu0 %v211
    %3717 = vmatprep.subr.mxu0 %v216
    %3718 = vmatpush1.msra.mxu0 %v215
    %3719 = vmatprep.subr.mxu0 %v220
    %3720 = vmatpush1.msra.mxu0 %v219
    %3721 = vmatprep.subr.mxu0 %v224
    %3722 = vmatpush1.msra.mxu0 %v223
    %3723 = vmatprep.subr.mxu0 %v228
    %3724 = vmatpush1.msra.mxu0 %v227
    %3725 = vmatprep.subr.mxu0 %v232
    %3726 = vmatpush1.msra.mxu0 %v231
    %3727 = vmatprep.subr.mxu0 0.0
    %3728 = vmatpush1.msra.mxu0 0.0
    %3729 = vmatprep.subr.mxu0 0.0
    %3730 = vmatpush1.msra.mxu0 0.0
    %3731 = vmatprep.subr.mxu0 0.0
    %3732 = vmatpush1.msra.mxu0 0.0
    %3733 = vmatprep.subr.mxu0 0.0
    %3734 = vmatpush1.msra.mxu0 0.0
    %3735 = vmatprep.subr.mxu0 0.0
    %3736 = vmatpush1.msra.mxu0 0.0
    %3737 = vmatprep.subr.mxu0 0.0
    %3738 = vmatpush1.msra.mxu0 0.0
    %3739 = vmatprep.subr.mxu0 0.0
    %3740 = vmatpush1.msra.mxu0 0.0
    %3741 = vmatprep.subr.mxu0 0.0
    %3742 = vmatpush1.msra.mxu0 0.0
    %3743 = vmatprep.subr.mxu0 0.0
    %3744 = vmatpush1.msra.mxu0 0.0
    %3745 = vmatprep.subr.mxu0 0.0
    %3746 = vmatpush1.msra.mxu0 0.0
    %3747 = vmatprep.subr.mxu0 0.0
    %3748 = vmatpush1.msra.mxu0 0.0
    %3749 = vmatprep.subr.mxu0 0.0
    %3750 = vmatpush1.msra.mxu0 0.0
    %3751 = vmatprep.subr.mxu0 0.0
    %3752 = vmatpush1.msra.mxu0 0.0
    %3753 = vmatprep.subr.mxu0 0.0
    %3754 = vmatpush1.msra.mxu0 0.0
    %3755 = vmatprep.subr.mxu0 0.0
    %3756 = vmatpush1.msra.mxu0 0.0
    %3757 = vmatprep.subr.mxu0 0.0
    %3758 = vmatpush1.msra.mxu0 0.0
    %3759 = vmatprep.mubr.f32.mxu0 0.0
    %3760 = vmatmul.mubr.f32.gmra.mrb[0].mxu0 %v3623
    %v3761 = vpop.f32.mrb[0].mxu0
    %v3762 = vadd.f32 %v740, %v3761
    %v3763 = vpop.f32.mrb[0].mxu0
    %v3764 = vadd.f32 %v744, %v3763
    %3765 = vdwg.mxu0
    %v3766 = vtanh.pop %v3691
    %v3767 = vtanh.pop %v3693
    %v3768 = vtanh.pop %v3762
    %v3769 = vtanh.pop %v3764
    %v3770 = vmul.f32 %v3766, 0.5
    %v3771 = vadd.f32 %v3770, 0.5
    %v3772 = vmul.f32 %v3767, 0.5
    %v3773 = vadd.f32 %v3772, 0.5
    %v3774 = vmul.f32 %v3769, 0.5
    %v3775 = vadd.f32 %v3774, 0.5
    %v3776 = vmul.f32 %v3773, %v3621
    %v3777 = vmul.f32 %v3771, %v3768
    %v3778 = vadd.f32 %v3776, %v3777
    %v3779 = vtanh.pop %v3778
    %v3780 = vmul.f32 %v3775, %v3779
    %3781 = vmatprep.subr.mxu0 %v105
    %3782 = vmatpush1.msra.mxu0 %v104
    %3783 = vmatprep.subr.mxu0 %v109
    %3784 = vmatpush1.msra.mxu0 %v108
    %3785 = vmatprep.subr.mxu0 %v113
    %3786 = vmatpush1.msra.mxu0 %v112
    %3787 = vmatprep.subr.mxu0 %v117
    %3788 = vmatpush1.msra.mxu0 %v116
    %3789 = vmatprep.subr.mxu0 %v121
    %3790 = vmatpush1.msra.mxu0 %v120
    %3791 = vmatprep.subr.mxu0 %v125
    %3792 = vmatpush1.msra.mxu0 %v124
    %3793 = vmatprep.subr.mxu0 %v129
    %3794 = vmatpush1.msra.mxu0 %v128
    %3795 = vmatprep.subr.mxu0 %v133
    %3796 = vmatpush1.msra.mxu0 %v132
    %3797 = vmatprep.subr.mxu0 %v137
    %3798 = vmatpush1.msra.mxu0 %v136
    %3799 = vmatprep.subr.mxu0 %v141
    %3800 = vmatpush1.msra.mxu0 %v140
    %3801 = vmatprep.subr.mxu0 %v145
    %3802 = vmatpush1.msra.mxu0 %v144
    %3803 = vmatprep.subr.mxu0 %v149
    %3804 = vmatpush1.msra.mxu0 %v148
    %3805 = vmatprep.subr.mxu0 %v153
    %3806 = vmatpush1.msra.mxu0 %v152
    %3807 = vmatprep.subr.mxu0 %v157
    %3808 = vmatpush1.msra.mxu0 %v156
    %3809 = vmatprep.subr.mxu0 %v161
    %3810 = vmatpush1.msra.mxu0 %v160
    %3811 = vmatprep.subr.mxu0 %v165
    %3812 = vmatpush1.msra.mxu0 %v164
    %3813 = vmatprep.subr.mxu0 0.0
    %3814 = vmatpush1.msra.mxu0 0.0
    %3815 = vmatprep.subr.mxu0 0.0
    %3816 = vmatpush1.msra.mxu0 0.0
    %3817 = vmatprep.subr.mxu0 0.0
    %3818 = vmatpush1.msra.mxu0 0.0
    %3819 = vmatprep.subr.mxu0 0.0
    %3820 = vmatpush1.msra.mxu0 0.0
    %3821 = vmatprep.subr.mxu0 0.0
    %3822 = vmatpush1.msra.mxu0 0.0
    %3823 = vmatprep.subr.mxu0 0.0
    %3824 = vmatpush1.msra.mxu0 0.0
    %3825 = vmatprep.subr.mxu0 0.0
    %3826 = vmatpush1.msra.mxu0 0.0
    %3827 = vmatprep.subr.mxu0 0.0
    %3828 = vmatpush1.msra.mxu0 0.0
    %3829 = vmatprep.subr.mxu0 0.0
    %3830 = vmatpush1.msra.mxu0 0.0
    %3831 = vmatprep.subr.mxu0 0.0
    %3832 = vmatpush1.msra.mxu0 0.0
    %3833 = vmatprep.subr.mxu0 0.0
    %3834 = vmatpush1.msra.mxu0 0.0
    %3835 = vmatprep.subr.mxu0 0.0
    %3836 = vmatpush1.msra.mxu0 0.0
    %3837 = vmatprep.subr.mxu0 0.0
    %3838 = vmatpush1.msra.mxu0 0.0
    %3839 = vmatprep.subr.mxu0 0.0
    %3840 = vmatpush1.msra.mxu0 0.0
    %3841 = vmatprep.subr.mxu0 0.0
    %3842 = vmatpush1.msra.mxu0 0.0
    %3843 = vmatprep.subr.mxu0 0.0
    %3844 = vmatpush1.msra.mxu0 0.0
    %3845 = vmatprep.mubr.f32.mxu0 0.0
    %3846 = vmatmul.mubr.f32.gmra.mrb[0].mxu0 %v3780
    %v3847 = vpop.f32.mrb[0].mxu0
    %v3848 = vadd.f32 %v3136, %v3847
    %v3849 = vpop.f32.mrb[0].mxu0
    %v3850 = vadd.f32 %v3140, %v3849
    %3851 = vdwg.mxu0
    %3852 = vmatprep.subr.mxu0 %v107
    %3853 = vmatpush1.msra.mxu0 %v106
    %3854 = vmatprep.subr.mxu0 %v111
    %3855 = vmatpush1.msra.mxu0 %v110
    %3856 = vmatprep.subr.mxu0 %v115
    %3857 = vmatpush1.msra.mxu0 %v114
    %3858 = vmatprep.subr.mxu0 %v119
    %3859 = vmatpush1.msra.mxu0 %v118
    %3860 = vmatprep.subr.mxu0 %v123
    %3861 = vmatpush1.msra.mxu0 %v122
    %3862 = vmatprep.subr.mxu0 %v127
    %3863 = vmatpush1.msra.mxu0 %v126
    %3864 = vmatprep.subr.mxu0 %v131
    %3865 = vmatpush1.msra.mxu0 %v130
    %3866 = vmatprep.subr.mxu0 %v135
    %3867 = vmatpush1.msra.mxu0 %v134
    %3868 = vmatprep.subr.mxu0 %v139
    %3869 = vmatpush1.msra.mxu0 %v138
    %3870 = vmatprep.subr.mxu0 %v143
    %3871 = vmatpush1.msra.mxu0 %v142
    %3872 = vmatprep.subr.mxu0 %v147
    %3873 = vmatpush1.msra.mxu0 %v146
    %3874 = vmatprep.subr.mxu0 %v151
    %3875 = vmatpush1.msra.mxu0 %v150
    %3876 = vmatprep.subr.mxu0 %v155
    %3877 = vmatpush1.msra.mxu0 %v154
    %3878 = vmatprep.subr.mxu0 %v159
    %3879 = vmatpush1.msra.mxu0 %v158
    %3880 = vmatprep.subr.mxu0 %v163
    %3881 = vmatpush1.msra.mxu0 %v162
    %3882 = vmatprep.subr.mxu0 %v167
    %3883 = vmatpush1.msra.mxu0 %v166
    %3884 = vmatprep.subr.mxu0 0.0
    %3885 = vmatpush1.msra.mxu0 0.0
    %3886 = vmatprep.subr.mxu0 0.0
    %3887 = vmatpush1.msra.mxu0 0.0
    %3888 = vmatprep.subr.mxu0 0.0
    %3889 = vmatpush1.msra.mxu0 0.0
    %3890 = vmatprep.subr.mxu0 0.0
    %3891 = vmatpush1.msra.mxu0 0.0
    %3892 = vmatprep.subr.mxu0 0.0
    %3893 = vmatpush1.msra.mxu0 0.0
    %3894 = vmatprep.subr.mxu0 0.0
    %3895 = vmatpush1.msra.mxu0 0.0
    %3896 = vmatprep.subr.mxu0 0.0
    %3897 = vmatpush1.msra.mxu0 0.0
    %3898 = vmatprep.subr.mxu0 0.0
    %3899 = vmatpush1.msra.mxu0 0.0
    %3900 = vmatprep.subr.mxu0 0.0
    %3901 = vmatpush1.msra.mxu0 0.0
    %3902 = vmatprep.subr.mxu0 0.0
    %3903 = vmatpush1.msra.mxu0 0.0
    %3904 = vmatprep.subr.mxu0 0.0
    %3905 = vmatpush1.msra.mxu0 0.0
    %3906 = vmatprep.subr.mxu0 0.0
    %3907 = vmatpush1.msra.mxu0 0.0
    %3908 = vmatprep.subr.mxu0 0.0
    %3909 = vmatpush1.msra.mxu0 0.0
    %3910 = vmatprep.subr.mxu0 0.0
    %3911 = vmatpush1.msra.mxu0 0.0
    %3912 = vmatprep.subr.mxu0 0.0
    %3913 = vmatpush1.msra.mxu0 0.0
    %3914 = vmatprep.subr.mxu0 0.0
    %3915 = vmatpush1.msra.mxu0 0.0
    %3916 = vmatprep.mubr.f32.mxu0 0.0
    %3917 = vmatmul.mubr.f32.gmra.mrb[0].mxu0 %v3780
    %v3918 = vpop.f32.mrb[0].mxu0
    %v3919 = vadd.f32 %v3144, %v3918
    %v3920 = vpop.f32.mrb[0].mxu0
    %v3921 = vadd.f32 %v3148, %v3920
    %3922 = vdwg.mxu0
    %v3923 = vtanh.pop %v3848
    %v3924 = vtanh.pop %v3850
    %v3925 = vtanh.pop %v3919
    %v3926 = vtanh.pop %v3921
    %v3927 = vmul.f32 %v3923, 0.5
    %v3928 = vadd.f32 %v3927, 0.5
    %v3929 = vmul.f32 %v3924, 0.5
    %v3930 = vadd.f32 %v3929, 0.5
    %v3931 = vmul.f32 %v3926, 0.5
    %v3932 = vadd.f32 %v3931, 0.5
    %v3933 = vmul.f32 %v3930, %v3778
    %v3934 = vmul.f32 %v3928, %v3925
    %v3935 = vadd.f32 %v3933, %v3934
    %v3936 = vtanh.pop %v3935
    %v3937 = vmul.f32 %v3932, %v3936
    %3938 = vmatprep.subr.mxu0 %v170
    %3939 = vmatpush1.msra.mxu0 %v169
    %3940 = vmatprep.subr.mxu0 %v174
    %3941 = vmatpush1.msra.mxu0 %v173
    %3942 = vmatprep.subr.mxu0 %v178
    %3943 = vmatpush1.msra.mxu0 %v177
    %3944 = vmatprep.subr.mxu0 %v182
    %3945 = vmatpush1.msra.mxu0 %v181
    %3946 = vmatprep.subr.mxu0 %v186
    %3947 = vmatpush1.msra.mxu0 %v185
    %3948 = vmatprep.subr.mxu0 %v190
    %3949 = vmatpush1.msra.mxu0 %v189
    %3950 = vmatprep.subr.mxu0 %v194
    %3951 = vmatpush1.msra.mxu0 %v193
    %3952 = vmatprep.subr.mxu0 %v198
    %3953 = vmatpush1.msra.mxu0 %v197
    %3954 = vmatprep.subr.mxu0 %v202
    %3955 = vmatpush1.msra.mxu0 %v201
    %3956 = vmatprep.subr.mxu0 %v206
    %3957 = vmatpush1.msra.mxu0 %v205
    %3958 = vmatprep.subr.mxu0 %v210
    %3959 = vmatpush1.msra.mxu0 %v209
    %3960 = vmatprep.subr.mxu0 %v214
    %3961 = vmatpush1.msra.mxu0 %v213
    %3962 = vmatprep.subr.mxu0 %v218
    %3963 = vmatpush1.msra.mxu0 %v217
    %3964 = vmatprep.subr.mxu0 %v222
    %3965 = vmatpush1.msra.mxu0 %v221
    %3966 = vmatprep.subr.mxu0 %v226
    %3967 = vmatpush1.msra.mxu0 %v225
    %3968 = vmatprep.subr.mxu0 %v230
    %3969 = vmatpush1.msra.mxu0 %v229
    %3970 = vmatprep.subr.mxu0 0.0
    %3971 = vmatpush1.msra.mxu0 0.0
    %3972 = vmatprep.subr.mxu0 0.0
    %3973 = vmatpush1.msra.mxu0 0.0
    %3974 = vmatprep.subr.mxu0 0.0
    %3975 = vmatpush1.msra.mxu0 0.0
    %3976 = vmatprep.subr.mxu0 0.0
    %3977 = vmatpush1.msra.mxu0 0.0
    %3978 = vmatprep.subr.mxu0 0.0
    %3979 = vmatpush1.msra.mxu0 0.0
    %3980 = vmatprep.subr.mxu0 0.0
    %3981 = vmatpush1.msra.mxu0 0.0
    %3982 = vmatprep.subr.mxu0 0.0
    %3983 = vmatpush1.msra.mxu0 0.0
    %3984 = vmatprep.subr.mxu0 0.0
    %3985 = vmatpush1.msra.mxu0 0.0
    %3986 = vmatprep.subr.mxu0 0.0
    %3987 = vmatpush1.msra.mxu0 0.0
    %3988 = vmatprep.subr.mxu0 0.0
    %3989 = vmatpush1.msra.mxu0 0.0
    %3990 = vmatprep.subr.mxu0 0.0
    %3991 = vmatpush1.msra.mxu0 0.0
    %3992 = vmatprep.subr.mxu0 0.0
    %3993 = vmatpush1.msra.mxu0 0.0
    %3994 = vmatprep.subr.mxu0 0.0
    %3995 = vmatpush1.msra.mxu0 0.0
    %3996 = vmatprep.subr.mxu0 0.0
    %3997 = vmatpush1.msra.mxu0 0.0
    %3998 = vmatprep.subr.mxu0 0.0
    %3999 = vmatpush1.msra.mxu0 0.0
    %4000 = vmatprep.subr.mxu0 0.0
    %4001 = vmatpush1.msra.mxu0 0.0
    %4002 = vmatprep.mubr.f32.mxu0 0.0
    %4003 = vmatmul.mubr.f32.gmra.mrb[0].mxu0 %v3937
    %v4004 = vpop.f32.mrb[0].mxu0
    %v4005 = vadd.f32 %v732, %v4004
    %v4006 = vpop.f32.mrb[0].mxu0
    %v4007 = vadd.f32 %v736, %v4006
    %4008 = vdwg.mxu0
    %4009 = vmatprep.subr.mxu0 %v172
    %4010 = vmatpush1.msra.mxu0 %v171
    %4011 = vmatprep.subr.mxu0 %v176
    %4012 = vmatpush1.msra.mxu0 %v175
    %4013 = vmatprep.subr.mxu0 %v180
    %4014 = vmatpush1.msra.mxu0 %v179
    %4015 = vmatprep.subr.mxu0 %v184
    %4016 = vmatpush1.msra.mxu0 %v183
    %4017 = vmatprep.subr.mxu0 %v188
    %4018 = vmatpush1.msra.mxu0 %v187
    %4019 = vmatprep.subr.mxu0 %v192
    %4020 = vmatpush1.msra.mxu0 %v191
    %4021 = vmatprep.subr.mxu0 %v196
    %4022 = vmatpush1.msra.mxu0 %v195
    %4023 = vmatprep.subr.mxu0 %v200
    %4024 = vmatpush1.msra.mxu0 %v199
    %4025 = vmatprep.subr.mxu0 %v204
    %4026 = vmatpush1.msra.mxu0 %v203
    %4027 = vmatprep.subr.mxu0 %v208
    %4028 = vmatpush1.msra.mxu0 %v207
    %4029 = vmatprep.subr.mxu0 %v212
    %4030 = vmatpush1.msra.mxu0 %v211
    %4031 = vmatprep.subr.mxu0 %v216
    %4032 = vmatpush1.msra.mxu0 %v215
    %4033 = vmatprep.subr.mxu0 %v220
    %4034 = vmatpush1.msra.mxu0 %v219
    %4035 = vmatprep.subr.mxu0 %v224
    %4036 = vmatpush1.msra.mxu0 %v223
    %4037 = vmatprep.subr.mxu0 %v228
    %4038 = vmatpush1.msra.mxu0 %v227
    %4039 = vmatprep.subr.mxu0 %v232
    %4040 = vmatpush1.msra.mxu0 %v231
    %4041 = vmatprep.subr.mxu0 0.0
    %4042 = vmatpush1.msra.mxu0 0.0
    %4043 = vmatprep.subr.mxu0 0.0
    %4044 = vmatpush1.msra.mxu0 0.0
    %4045 = vmatprep.subr.mxu0 0.0
    %4046 = vmatpush1.msra.mxu0 0.0
    %4047 = vmatprep.subr.mxu0 0.0
    %4048 = vmatpush1.msra.mxu0 0.0
    %4049 = vmatprep.subr.mxu0 0.0
    %4050 = vmatpush1.msra.mxu0 0.0
    %4051 = vmatprep.subr.mxu0 0.0
    %4052 = vmatpush1.msra.mxu0 0.0
    %4053 = vmatprep.subr.mxu0 0.0
    %4054 = vmatpush1.msra.mxu0 0.0
    %4055 = vmatprep.subr.mxu0 0.0
    %4056 = vmatpush1.msra.mxu0 0.0
    %4057 = vmatprep.subr.mxu0 0.0
    %4058 = vmatpush1.msra.mxu0 0.0
    %4059 = vmatprep.subr.mxu0 0.0
    %4060 = vmatpush1.msra.mxu0 0.0
    %4061 = vmatprep.subr.mxu0 0.0
    %4062 = vmatpush1.msra.mxu0 0.0
    %4063 = vmatprep.subr.mxu0 0.0
    %4064 = vmatpush1.msra.mxu0 0.0
    %4065 = vmatprep.subr.mxu0 0.0
    %4066 = vmatpush1.msra.mxu0 0.0
    %4067 = vmatprep.subr.mxu0 0.0
    %4068 = vmatpush1.msra.mxu0 0.0
    %4069 = vmatprep.subr.mxu0 0.0
    %4070 = vmatpush1.msra.mxu0 0.0
    %4071 = vmatprep.subr.mxu0 0.0
    %4072 = vmatpush1.msra.mxu0 0.0
    %4073 = vmatprep.mubr.f32.mxu0 0.0
    %4074 = vmatmul.mubr.f32.gmra.mrb[0].mxu0 %v3937
    %v4075 = vpop.f32.mrb[0].mxu0
    %v4076 = vadd.f32 %v740, %v4075
    %v4077 = vpop.f32.mrb[0].mxu0
    %v4078 = vadd.f32 %v744, %v4077
    %4079 = vdwg.mxu0
    %v4080 = vtanh.pop %v4005
    %v4081 = vtanh.pop %v4007
    %v4082 = vtanh.pop %v4076
    %v4083 = vtanh.pop %v4078
    %v4084 = vmul.f32 %v4080, 0.5
    %v4085 = vadd.f32 %v4084, 0.5
    %v4086 = vmul.f32 %v4081, 0.5
    %v4087 = vadd.f32 %v4086, 0.5
    %v4088 = vmul.f32 %v4083, 0.5
    %v4089 = vadd.f32 %v4088, 0.5
    %v4090 = vmul.f32 %v4087, %v3935
    %v4091 = vmul.f32 %v4085, %v4082
    %v4092 = vadd.f32 %v4090, %v4091
    %v4093 = vtanh.pop %v4092
    %v4094 = vmul.f32 %v4089, %v4093
    %4095 = vmatprep.subr.mxu0 %v105
    %4096 = vmatpush1.msra.mxu0 %v104
    %4097 = vmatprep.subr.mxu0 %v109
    %4098 = vmatpush1.msra.mxu0 %v108
    %4099 = vmatprep.subr.mxu0 %v113
    %4100 = vmatpush1.msra.mxu0 %v112
    %4101 = vmatprep.subr.mxu0 %v117
    %4102 = vmatpush1.msra.mxu0 %v116
    %4103 = vmatprep.subr.mxu0 %v121
    %4104 = vmatpush1.msra.mxu0 %v120
    %4105 = vmatprep.subr.mxu0 %v125
    %4106 = vmatpush1.msra.mxu0 %v124
    %4107 = vmatprep.subr.mxu0 %v129
    %4108 = vmatpush1.msra.mxu0 %v128
    %4109 = vmatprep.subr.mxu0 %v133
    %4110 = vmatpush1.msra.mxu0 %v132
    %4111 = vmatprep.subr.mxu0 %v137
    %4112 = vmatpush1.msra.mxu0 %v136
    %4113 = vmatprep.subr.mxu0 %v141
    %4114 = vmatpush1.msra.mxu0 %v140
    %4115 = vmatprep.subr.mxu0 %v145
    %4116 = vmatpush1.msra.mxu0 %v144
    %4117 = vmatprep.subr.mxu0 %v149
    %4118 = vmatpush1.msra.mxu0 %v148
    %4119 = vmatprep.subr.mxu0 %v153
    %4120 = vmatpush1.msra.mxu0 %v152
    %4121 = vmatprep.subr.mxu0 %v157
    %4122 = vmatpush1.msra.mxu0 %v156
    %4123 = vmatprep.subr.mxu0 %v161
    %4124 = vmatpush1.msra.mxu0 %v160
    %4125 = vmatprep.subr.mxu0 %v165
    %4126 = vmatpush1.msra.mxu0 %v164
    %4127 = vmatprep.subr.mxu0 0.0
    %4128 = vmatpush1.msra.mxu0 0.0
    %4129 = vmatprep.subr.mxu0 0.0
    %4130 = vmatpush1.msra.mxu0 0.0
    %4131 = vmatprep.subr.mxu0 0.0
    %4132 = vmatpush1.msra.mxu0 0.0
    %4133 = vmatprep.subr.mxu0 0.0
    %4134 = vmatpush1.msra.mxu0 0.0
    %4135 = vmatprep.subr.mxu0 0.0
    %4136 = vmatpush1.msra.mxu0 0.0
    %4137 = vmatprep.subr.mxu0 0.0
    %4138 = vmatpush1.msra.mxu0 0.0
    %4139 = vmatprep.subr.mxu0 0.0
    %4140 = vmatpush1.msra.mxu0 0.0
    %4141 = vmatprep.subr.mxu0 0.0
    %4142 = vmatpush1.msra.mxu0 0.0
    %4143 = vmatprep.subr.mxu0 0.0
    %4144 = vmatpush1.msra.mxu0 0.0
    %4145 = vmatprep.subr.mxu0 0.0
    %4146 = vmatpush1.msra.mxu0 0.0
    %4147 = vmatprep.subr.mxu0 0.0
    %4148 = vmatpush1.msra.mxu0 0.0
    %4149 = vmatprep.subr.mxu0 0.0
    %4150 = vmatpush1.msra.mxu0 0.0
    %4151 = vmatprep.subr.mxu0 0.0
    %4152 = vmatpush1.msra.mxu0 0.0
    %4153 = vmatprep.subr.mxu0 0.0
    %4154 = vmatpush1.msra.mxu0 0.0
    %4155 = vmatprep.subr.mxu0 0.0
    %4156 = vmatpush1.msra.mxu0 0.0
    %4157 = vmatprep.subr.mxu0 0.0
    %4158 = vmatpush1.msra.mxu0 0.0
    %4159 = vmatprep.mubr.f32.mxu0 0.0
    %4160 = vmatmul.mubr.f32.gmra.mrb[0].mxu0 %v4094
    %v4161 = vpop.f32.mrb[0].mxu0
    %v4162 = vadd.f32 %v3136, %v4161
    %v4163 = vpop.f32.mrb[0].mxu0
    %v4164 = vadd.f32 %v3140, %v4163
    %4165 = vdwg.mxu0
    %4166 = vmatprep.subr.mxu0 %v107
    %4167 = vmatpush1.msra.mxu0 %v106
    %4168 = vmatprep.subr.mxu0 %v111
    %4169 = vmatpush1.msra.mxu0 %v110
    %4170 = vmatprep.subr.mxu0 %v115
    %4171 = vmatpush1.msra.mxu0 %v114
    %4172 = vmatprep.subr.mxu0 %v119
    %4173 = vmatpush1.msra.mxu0 %v118
    %4174 = vmatprep.subr.mxu0 %v123
    %4175 = vmatpush1.msra.mxu0 %v122
    %4176 = vmatprep.subr.mxu0 %v127
    %4177 = vmatpush1.msra.mxu0 %v126
    %4178 = vmatprep.subr.mxu0 %v131
    %4179 = vmatpush1.msra.mxu0 %v130
    %4180 = vmatprep.subr.mxu0 %v135
    %4181 = vmatpush1.msra.mxu0 %v134
    %4182 = vmatprep.subr.mxu0 %v139
    %4183 = vmatpush1.msra.mxu0 %v138
    %4184 = vmatprep.subr.mxu0 %v143
    %4185 = vmatpush1.msra.mxu0 %v142
    %4186 = vmatprep.subr.mxu0 %v147
    %4187 = vmatpush1.msra.mxu0 %v146
    %4188 = vmatprep.subr.mxu0 %v151
    %4189 = vmatpush1.msra.mxu0 %v150
    %4190 = vmatprep.subr.mxu0 %v155
    %4191 = vmatpush1.msra.mxu0 %v154
    %4192 = vmatprep.subr.mxu0 %v159
    %4193 = vmatpush1.msra.mxu0 %v158
    %4194 = vmatprep.subr.mxu0 %v163
    %4195 = vmatpush1.msra.mxu0 %v162
    %4196 = vmatprep.subr.mxu0 %v167
    %4197 = vmatpush1.msra.mxu0 %v166
    %4198 = vmatprep.subr.mxu0 0.0
    %4199 = vmatpush1.msra.mxu0 0.0
    %4200 = vmatprep.subr.mxu0 0.0
    %4201 = vmatpush1.msra.mxu0 0.0
    %4202 = vmatprep.subr.mxu0 0.0
    %4203 = vmatpush1.msra.mxu0 0.0
    %4204 = vmatprep.subr.mxu0 0.0
    %4205 = vmatpush1.msra.mxu0 0.0
    %4206 = vmatprep.subr.mxu0 0.0
    %4207 = vmatpush1.msra.mxu0 0.0
    %4208 = vmatprep.subr.mxu0 0.0
    %4209 = vmatpush1.msra.mxu0 0.0
    %4210 = vmatprep.subr.mxu0 0.0
    %4211 = vmatpush1.msra.mxu0 0.0
    %4212 = vmatprep.subr.mxu0 0.0
    %4213 = vmatpush1.msra.mxu0 0.0
    %4214 = vmatprep.subr.mxu0 0.0
    %4215 = vmatpush1.msra.mxu0 0.0
    %4216 = vmatprep.subr.mxu0 0.0
    %4217 = vmatpush1.msra.mxu0 0.0
    %4218 = vmatprep.subr.mxu0 0.0
    %4219 = vmatpush1.msra.mxu0 0.0
    %4220 = vmatprep.subr.mxu0 0.0
    %4221 = vmatpush1.msra.mxu0 0.0
    %4222 = vmatprep.subr.mxu0 0.0
    %4223 = vmatpush1.msra.mxu0 0.0
    %4224 = vmatprep.subr.mxu0 0.0
    %4225 = vmatpush1.msra.mxu0 0.0
    %4226 = vmatprep.subr.mxu0 0.0
    %4227 = vmatpush1.msra.mxu0 0.0
    %4228 = vmatprep.subr.mxu0 0.0
    %4229 = vmatpush1.msra.mxu0 0.0
    %4230 = vmatprep.mubr.f32.mxu0 0.0
    %4231 = vmatmul.mubr.f32.gmra.mrb[0].mxu0 %v4094
    %v4232 = vpop.f32.mrb[0].mxu0
    %v4233 = vadd.f32 %v3144, %v4232
    %v4234 = vpop.f32.mrb[0].mxu0
    %v4235 = vadd.f32 %v3148, %v4234
    %4236 = vdwg.mxu0
    %v4237 = vtanh.pop %v4162
    %v4238 = vtanh.pop %v4164
    %v4239 = vtanh.pop %v4233
    %v4240 = vtanh.pop %v4235
    %v4241 = vmul.f32 %v4237, 0.5
    %v4242 = vadd.f32 %v4241, 0.5
    %v4243 = vmul.f32 %v4238, 0.5
    %v4244 = vadd.f32 %v4243, 0.5
    %v4245 = vmul.f32 %v4240, 0.5
    %v4246 = vadd.f32 %v4245, 0.5
    %v4247 = vmul.f32 %v4244, %v4092
    %v4248 = vmul.f32 %v4242, %v4239
    %v4249 = vadd.f32 %v4247, %v4248
    %v4250 = vtanh.pop %v4249
    %v4251 = vmul.f32 %v4246, %v4250
    %4252 = vmatprep.subr.mxu0 %v170
    %4253 = vmatpush1.msra.mxu0 %v169
    %4254 = vmatprep.subr.mxu0 %v174
    %4255 = vmatpush1.msra.mxu0 %v173
    %4256 = vmatprep.subr.mxu0 %v178
    %4257 = vmatpush1.msra.mxu0 %v177
    %4258 = vmatprep.subr.mxu0 %v182
    %4259 = vmatpush1.msra.mxu0 %v181
    %4260 = vmatprep.subr.mxu0 %v186
    %4261 = vmatpush1.msra.mxu0 %v185
    %4262 = vmatprep.subr.mxu0 %v190
    %4263 = vmatpush1.msra.mxu0 %v189
    %4264 = vmatprep.subr.mxu0 %v194
    %4265 = vmatpush1.msra.mxu0 %v193
    %4266 = vmatprep.subr.mxu0 %v198
    %4267 = vmatpush1.msra.mxu0 %v197
    %4268 = vmatprep.subr.mxu0 %v202
    %4269 = vmatpush1.msra.mxu0 %v201
    %4270 = vmatprep.subr.mxu0 %v206
    %4271 = vmatpush1.msra.mxu0 %v205
    %4272 = vmatprep.subr.mxu0 %v210
    %4273 = vmatpush1.msra.mxu0 %v209
    %4274 = vmatprep.subr.mxu0 %v214
    %4275 = vmatpush1.msra.mxu0 %v213
    %4276 = vmatprep.subr.mxu0 %v218
    %4277 = vmatpush1.msra.mxu0 %v217
    %4278 = vmatprep.subr.mxu0 %v222
    %4279 = vmatpush1.msra.mxu0 %v221
    %4280 = vmatprep.subr.mxu0 %v226
    %4281 = vmatpush1.msra.mxu0 %v225
    %4282 = vmatprep.subr.mxu0 %v230
    %4283 = vmatpush1.msra.mxu0 %v229
    %4284 = vmatprep.subr.mxu0 0.0
    %4285 = vmatpush1.msra.mxu0 0.0
    %4286 = vmatprep.subr.mxu0 0.0
    %4287 = vmatpush1.msra.mxu0 0.0
    %4288 = vmatprep.subr.mxu0 0.0
    %4289 = vmatpush1.msra.mxu0 0.0
    %4290 = vmatprep.subr.mxu0 0.0
    %4291 = vmatpush1.msra.mxu0 0.0
    %4292 = vmatprep.subr.mxu0 0.0
    %4293 = vmatpush1.msra.mxu0 0.0
    %4294 = vmatprep.subr.mxu0 0.0
    %4295 = vmatpush1.msra.mxu0 0.0
    %4296 = vmatprep.subr.mxu0 0.0
    %4297 = vmatpush1.msra.mxu0 0.0
    %4298 = vmatprep.subr.mxu0 0.0
    %4299 = vmatpush1.msra.mxu0 0.0
    %4300 = vmatprep.subr.mxu0 0.0
    %4301 = vmatpush1.msra.mxu0 0.0
    %4302 = vmatprep.subr.mxu0 0.0
    %4303 = vmatpush1.msra.mxu0 0.0
    %4304 = vmatprep.subr.mxu0 0.0
    %4305 = vmatpush1.msra.mxu0 0.0
    %4306 = vmatprep.subr.mxu0 0.0
    %4307 = vmatpush1.msra.mxu0 0.0
    %4308 = vmatprep.subr.mxu0 0.0
    %4309 = vmatpush1.msra.mxu0 0.0
    %4310 = vmatprep.subr.mxu0 0.0
    %4311 = vmatpush1.msra.mxu0 0.0
    %4312 = vmatprep.subr.mxu0 0.0
    %4313 = vmatpush1.msra.mxu0 0.0
    %4314 = vmatprep.subr.mxu0 0.0
    %4315 = vmatpush1.msra.mxu0 0.0
    %4316 = vmatprep.mubr.f32.mxu0 0.0
    %4317 = vmatmul.mubr.f32.gmra.mrb[0].mxu0 %v4251
    %v4318 = vpop.f32.mrb[0].mxu0
    %v4319 = vadd.f32 %v732, %v4318
    %v4320 = vpop.f32.mrb[0].mxu0
    %v4321 = vadd.f32 %v736, %v4320
    %4322 = vdwg.mxu0
    %4323 = vmatprep.subr.mxu0 %v172
    %4324 = vmatpush1.msra.mxu0 %v171
    %4325 = vmatprep.subr.mxu0 %v176
    %4326 = vmatpush1.msra.mxu0 %v175
    %4327 = vmatprep.subr.mxu0 %v180
    %4328 = vmatpush1.msra.mxu0 %v179
    %4329 = vmatprep.subr.mxu0 %v184
    %4330 = vmatpush1.msra.mxu0 %v183
    %4331 = vmatprep.subr.mxu0 %v188
    %4332 = vmatpush1.msra.mxu0 %v187
    %4333 = vmatprep.subr.mxu0 %v192
    %4334 = vmatpush1.msra.mxu0 %v191
    %4335 = vmatprep.subr.mxu0 %v196
    %4336 = vmatpush1.msra.mxu0 %v195
    %4337 = vmatprep.subr.mxu0 %v200
    %4338 = vmatpush1.msra.mxu0 %v199
    %4339 = vmatprep.subr.mxu0 %v204
    %4340 = vmatpush1.msra.mxu0 %v203
    %4341 = vmatprep.subr.mxu0 %v208
    %4342 = vmatpush1.msra.mxu0 %v207
    %4343 = vmatprep.subr.mxu0 %v212
    %4344 = vmatpush1.msra.mxu0 %v211
    %4345 = vmatprep.subr.mxu0 %v216
    %4346 = vmatpush1.msra.mxu0 %v215
    %4347 = vmatprep.subr.mxu0 %v220
    %4348 = vmatpush1.msra.mxu0 %v219
    %4349 = vmatprep.subr.mxu0 %v224
    %4350 = vmatpush1.msra.mxu0 %v223
    %4351 = vmatprep.subr.mxu0 %v228
    %4352 = vmatpush1.msra.mxu0 %v227
    %4353 = vmatprep.subr.mxu0 %v232
    %4354 = vmatpush1.msra.mxu0 %v231
    %4355 = vmatprep.subr.mxu0 0.0
    %4356 = vmatpush1.msra.mxu0 0.0
    %4357 = vmatprep.subr.mxu0 0.0
    %4358 = vmatpush1.msra.mxu0 0.0
    %4359 = vmatprep.subr.mxu0 0.0
    %4360 = vmatpush1.msra.mxu0 0.0
    %4361 = vmatprep.subr.mxu0 0.0
    %4362 = vmatpush1.msra.mxu0 0.0
    %4363 = vmatprep.subr.mxu0 0.0
    %4364 = vmatpush1.msra.mxu0 0.0
    %4365 = vmatprep.subr.mxu0 0.0
    %4366 = vmatpush1.msra.mxu0 0.0
    %4367 = vmatprep.subr.mxu0 0.0
    %4368 = vmatpush1.msra.mxu0 0.0
    %4369 = vmatprep.subr.mxu0 0.0
    %4370 = vmatpush1.msra.mxu0 0.0
    %4371 = vmatprep.subr.mxu0 0.0
    %4372 = vmatpush1.msra.mxu0 0.0
    %4373 = vmatprep.subr.mxu0 0.0
    %4374 = vmatpush1.msra.mxu0 0.0
    %4375 = vmatprep.subr.mxu0 0.0
    %4376 = vmatpush1.msra.mxu0 0.0
    %4377 = vmatprep.subr.mxu0 0.0
    %4378 = vmatpush1.msra.mxu0 0.0
    %4379 = vmatprep.subr.mxu0 0.0
    %4380 = vmatpush1.msra.mxu0 0.0
    %4381 = vmatprep.subr.mxu0 0.0
    %4382 = vmatpush1.msra.mxu0 0.0
    %4383 = vmatprep.subr.mxu0 0.0
    %4384 = vmatpush1.msra.mxu0 0.0
    %4385 = vmatprep.subr.mxu0 0.0
    %4386 = vmatpush1.msra.mxu0 0.0
    %4387 = vmatprep.mubr.f32.mxu0 0.0
    %4388 = vmatmul.mubr.f32.gmra.mrb[0].mxu0 %v4251
    %v4389 = vpop.f32.mrb[0].mxu0
    %v4390 = vadd.f32 %v740, %v4389
    %v4391 = vpop.f32.mrb[0].mxu0
    %v4392 = vadd.f32 %v744, %v4391
    %4393 = vdwg.mxu0
    %v4394 = vtanh.pop %v4319
    %v4395 = vtanh.pop %v4321
    %v4396 = vtanh.pop %v4390
    %v4397 = vtanh.pop %v4392
    %v4398 = vmul.f32 %v4394, 0.5
    %v4399 = vadd.f32 %v4398, 0.5
    %v4400 = vmul.f32 %v4395, 0.5
    %v4401 = vadd.f32 %v4400, 0.5
    %v4402 = vmul.f32 %v4397, 0.5
    %v4403 = vadd.f32 %v4402, 0.5
    %v4404 = vmul.f32 %v4401, %v4249
    %v4405 = vmul.f32 %v4399, %v4396
    %v4406 = vadd.f32 %v4404, %v4405
    %v4407 = vtanh.pop %v4406
    %v4408 = vmul.f32 %v4403, %v4407
    %v4410 = vlaneseq
    %v4411 = vshrl.u32 %v4410, 7
    %v4412 = vsub.s32 0, %v4411
    %v4413 = vrot.slane %v426, %v4412
    %4414 = vset.pattern.permute.xlu0 0
    %4415 = vperm.xlu0 %4414, %v4413
    %v4416 = vpop.permute.xlu0 %4415
    %4418 = vmatprep.subr.mxu0 0.0
    %4419 = vmatpush1.msra.mxu0 %v234
    %4420 = vmatprep.subr.mxu0 0.0
    %4421 = vmatpush1.msra.mxu0 %v235
    %4422 = vmatprep.subr.mxu0 0.0
    %4423 = vmatpush1.msra.mxu0 %v236
    %4424 = vmatprep.subr.mxu0 0.0
    %4425 = vmatpush1.msra.mxu0 %v237
    %4426 = vmatprep.subr.mxu0 0.0
    %4427 = vmatpush1.msra.mxu0 %v238
    %4428 = vmatprep.subr.mxu0 0.0
    %4429 = vmatpush1.msra.mxu0 %v239
    %4430 = vmatprep.subr.mxu0 0.0
    %4431 = vmatpush1.msra.mxu0 %v240
    %4432 = vmatprep.subr.mxu0 0.0
    %4433 = vmatpush1.msra.mxu0 %v241
    %4434 = vmatprep.subr.mxu0 0.0
    %4435 = vmatpush1.msra.mxu0 %v242
    %4436 = vmatprep.subr.mxu0 0.0
    %4437 = vmatpush1.msra.mxu0 %v243
    %4438 = vmatprep.subr.mxu0 0.0
    %4439 = vmatpush1.msra.mxu0 %v244
    %4440 = vmatprep.subr.mxu0 0.0
    %4441 = vmatpush1.msra.mxu0 %v245
    %4442 = vmatprep.subr.mxu0 0.0
    %4443 = vmatpush1.msra.mxu0 %v246
    %4444 = vmatprep.subr.mxu0 0.0
    %4445 = vmatpush1.msra.mxu0 %v247
    %4446 = vmatprep.subr.mxu0 0.0
    %4447 = vmatpush1.msra.mxu0 %v248
    %4448 = vmatprep.subr.mxu0 0.0
    %4449 = vmatpush1.msra.mxu0 %v249
    %4450 = vmatprep.subr.mxu0 0.0
    %4451 = vmatpush1.msra.mxu0 %v250
    %4452 = vmatprep.subr.mxu0 0.0
    %4453 = vmatpush1.msra.mxu0 %v251
    %4454 = vmatprep.subr.mxu0 0.0
    %4455 = vmatpush1.msra.mxu0 %v252
    %4456 = vmatprep.subr.mxu0 0.0
    %4457 = vmatpush1.msra.mxu0 %v253
    %4458 = vmatprep.subr.mxu0 0.0
    %4459 = vmatpush1.msra.mxu0 %v254
    %4460 = vmatprep.subr.mxu0 0.0
    %4461 = vmatpush1.msra.mxu0 %v255
    %4462 = vmatprep.subr.mxu0 0.0
    %4463 = vmatpush1.msra.mxu0 %v256
    %4464 = vmatprep.subr.mxu0 0.0
    %4465 = vmatpush1.msra.mxu0 %v257
    %4466 = vmatprep.subr.mxu0 0.0
    %4467 = vmatpush1.msra.mxu0 %v258
    %4468 = vmatprep.subr.mxu0 0.0
    %4469 = vmatpush1.msra.mxu0 %v259
    %4470 = vmatprep.subr.mxu0 0.0
    %4471 = vmatpush1.msra.mxu0 %v260
    %4472 = vmatprep.subr.mxu0 0.0
    %4473 = vmatpush1.msra.mxu0 %v261
    %4474 = vmatprep.subr.mxu0 0.0
    %4475 = vmatpush1.msra.mxu0 %v262
    %4476 = vmatprep.subr.mxu0 0.0
    %4477 = vmatpush1.msra.mxu0 %v263
    %4478 = vmatprep.subr.mxu0 0.0
    %4479 = vmatpush1.msra.mxu0 %v264
    %4480 = vmatprep.subr.mxu0 0.0
    %4481 = vmatpush1.msra.mxu0 %v265
    %4482 = vmatprep.mubr.f32.mxu0 %v1223
    %4483 = vmatmul.mubr.f32.gmra.mrb[0].mxu0 %v905
    %v4484 = vpop.f32.mrb[0].mxu0
    %v4485 = vadd.f32 %v4416, %v4484
    %v4486 = vpop.f32.mrb[0].mxu0
    %4487 = vdwg.mxu0
    %4488 = vmatprep.subr.mxu0 0.0
    %4489 = vmatpush1.msra.mxu0 %v266
    %4490 = vmatprep.subr.mxu0 0.0
    %4491 = vmatpush1.msra.mxu0 %v267
    %4492 = vmatprep.subr.mxu0 0.0
    %4493 = vmatpush1.msra.mxu0 %v268
    %4494 = vmatprep.subr.mxu0 0.0
    %4495 = vmatpush1.msra.mxu0 %v269
    %4496 = vmatprep.subr.mxu0 0.0
    %4497 = vmatpush1.msra.mxu0 %v270
    %4498 = vmatprep.subr.mxu0 0.0
    %4499 = vmatpush1.msra.mxu0 %v271
    %4500 = vmatprep.subr.mxu0 0.0
    %4501 = vmatpush1.msra.mxu0 %v272
    %4502 = vmatprep.subr.mxu0 0.0
    %4503 = vmatpush1.msra.mxu0 %v273
    %4504 = vmatprep.subr.mxu0 0.0
    %4505 = vmatpush1.msra.mxu0 %v274
    %4506 = vmatprep.subr.mxu0 0.0
    %4507 = vmatpush1.msra.mxu0 %v275
    %4508 = vmatprep.subr.mxu0 0.0
    %4509 = vmatpush1.msra.mxu0 %v276
    %4510 = vmatprep.subr.mxu0 0.0
    %4511 = vmatpush1.msra.mxu0 %v277
    %4512 = vmatprep.subr.mxu0 0.0
    %4513 = vmatpush1.msra.mxu0 %v278
    %4514 = vmatprep.subr.mxu0 0.0
    %4515 = vmatpush1.msra.mxu0 %v279
    %4516 = vmatprep.subr.mxu0 0.0
    %4517 = vmatpush1.msra.mxu0 %v280
    %4518 = vmatprep.subr.mxu0 0.0
    %4519 = vmatpush1.msra.mxu0 %v281
    %4520 = vmatprep.subr.mxu0 0.0
    %4521 = vmatpush1.msra.mxu0 %v282
    %4522 = vmatprep.subr.mxu0 0.0
    %4523 = vmatpush1.msra.mxu0 %v283
    %4524 = vmatprep.subr.mxu0 0.0
    %4525 = vmatpush1.msra.mxu0 %v284
    %4526 = vmatprep.subr.mxu0 0.0
    %4527 = vmatpush1.msra.mxu0 %v285
    %4528 = vmatprep.subr.mxu0 0.0
    %4529 = vmatpush1.msra.mxu0 %v286
    %4530 = vmatprep.subr.mxu0 0.0
    %4531 = vmatpush1.msra.mxu0 %v287
    %4532 = vmatprep.subr.mxu0 0.0
    %4533 = vmatpush1.msra.mxu0 %v288
    %4534 = vmatprep.subr.mxu0 0.0
    %4535 = vmatpush1.msra.mxu0 %v289
    %4536 = vmatprep.subr.mxu0 0.0
    %4537 = vmatpush1.msra.mxu0 %v290
    %4538 = vmatprep.subr.mxu0 0.0
    %4539 = vmatpush1.msra.mxu0 %v291
    %4540 = vmatprep.subr.mxu0 0.0
    %4541 = vmatpush1.msra.mxu0 %v292
    %4542 = vmatprep.subr.mxu0 0.0
    %4543 = vmatpush1.msra.mxu0 %v293
    %4544 = vmatprep.subr.mxu0 0.0
    %4545 = vmatpush1.msra.mxu0 %v294
    %4546 = vmatprep.subr.mxu0 0.0
    %4547 = vmatpush1.msra.mxu0 %v295
    %4548 = vmatprep.subr.mxu0 0.0
    %4549 = vmatpush1.msra.mxu0 %v296
    %4550 = vmatprep.subr.mxu0 0.0
    %4551 = vmatpush1.msra.mxu0 %v297
    %4552 = vmatprep.mubr.f32.mxu0 %v1859
    %4553 = vmatmul.mubr.f32.gmra.mrb[0].mxu0 %v1541
    %v4554 = vpop.f32.mrb[0].mxu0
    %v4555 = vadd.f32 %v4485, %v4554
    %v4556 = vpop.f32.mrb[0].mxu0
    %4557 = vdwg.mxu0
    %4558 = vmatprep.subr.mxu0 0.0
    %4559 = vmatpush1.msra.mxu0 %v298
    %4560 = vmatprep.subr.mxu0 0.0
    %4561 = vmatpush1.msra.mxu0 %v299
    %4562 = vmatprep.subr.mxu0 0.0
    %4563 = vmatpush1.msra.mxu0 %v300
    %4564 = vmatprep.subr.mxu0 0.0
    %4565 = vmatpush1.msra.mxu0 %v301
    %4566 = vmatprep.subr.mxu0 0.0
    %4567 = vmatpush1.msra.mxu0 %v302
    %4568 = vmatprep.subr.mxu0 0.0
    %4569 = vmatpush1.msra.mxu0 %v303
    %4570 = vmatprep.subr.mxu0 0.0
    %4571 = vmatpush1.msra.mxu0 %v304
    %4572 = vmatprep.subr.mxu0 0.0
    %4573 = vmatpush1.msra.mxu0 %v305
    %4574 = vmatprep.subr.mxu0 0.0
    %4575 = vmatpush1.msra.mxu0 %v306
    %4576 = vmatprep.subr.mxu0 0.0
    %4577 = vmatpush1.msra.mxu0 %v307
    %4578 = vmatprep.subr.mxu0 0.0
    %4579 = vmatpush1.msra.mxu0 %v308
    %4580 = vmatprep.subr.mxu0 0.0
    %4581 = vmatpush1.msra.mxu0 %v309
    %4582 = vmatprep.subr.mxu0 0.0
    %4583 = vmatpush1.msra.mxu0 %v310
    %4584 = vmatprep.subr.mxu0 0.0
    %4585 = vmatpush1.msra.mxu0 %v311
    %4586 = vmatprep.subr.mxu0 0.0
    %4587 = vmatpush1.msra.mxu0 %v312
    %4588 = vmatprep.subr.mxu0 0.0
    %4589 = vmatpush1.msra.mxu0 %v313
    %4590 = vmatprep.subr.mxu0 0.0
    %4591 = vmatpush1.msra.mxu0 %v314
    %4592 = vmatprep.subr.mxu0 0.0
    %4593 = vmatpush1.msra.mxu0 %v315
    %4594 = vmatprep.subr.mxu0 0.0
    %4595 = vmatpush1.msra.mxu0 %v316
    %4596 = vmatprep.subr.mxu0 0.0
    %4597 = vmatpush1.msra.mxu0 %v317
    %4598 = vmatprep.subr.mxu0 0.0
    %4599 = vmatpush1.msra.mxu0 %v318
    %4600 = vmatprep.subr.mxu0 0.0
    %4601 = vmatpush1.msra.mxu0 %v319
    %4602 = vmatprep.subr.mxu0 0.0
    %4603 = vmatpush1.msra.mxu0 %v320
    %4604 = vmatprep.subr.mxu0 0.0
    %4605 = vmatpush1.msra.mxu0 %v321
    %4606 = vmatprep.subr.mxu0 0.0
    %4607 = vmatpush1.msra.mxu0 %v322
    %4608 = vmatprep.subr.mxu0 0.0
    %4609 = vmatpush1.msra.mxu0 %v323
    %4610 = vmatprep.subr.mxu0 0.0
    %4611 = vmatpush1.msra.mxu0 %v324
    %4612 = vmatprep.subr.mxu0 0.0
    %4613 = vmatpush1.msra.mxu0 %v325
    %4614 = vmatprep.subr.mxu0 0.0
    %4615 = vmatpush1.msra.mxu0 %v326
    %4616 = vmatprep.subr.mxu0 0.0
    %4617 = vmatpush1.msra.mxu0 %v327
    %4618 = vmatprep.subr.mxu0 0.0
    %4619 = vmatpush1.msra.mxu0 %v328
    %4620 = vmatprep.subr.mxu0 0.0
    %4621 = vmatpush1.msra.mxu0 %v329
    %4622 = vmatprep.mubr.f32.mxu0 %v2495
    %4623 = vmatmul.mubr.f32.gmra.mrb[0].mxu0 %v2177
    %v4624 = vpop.f32.mrb[0].mxu0
    %v4625 = vadd.f32 %v4555, %v4624
    %v4626 = vpop.f32.mrb[0].mxu0
    %4627 = vdwg.mxu0
    %4628 = vmatprep.subr.mxu0 0.0
    %4629 = vmatpush1.msra.mxu0 %v330
    %4630 = vmatprep.subr.mxu0 0.0
    %4631 = vmatpush1.msra.mxu0 %v331
    %4632 = vmatprep.subr.mxu0 0.0
    %4633 = vmatpush1.msra.mxu0 %v332
    %4634 = vmatprep.subr.mxu0 0.0
    %4635 = vmatpush1.msra.mxu0 %v333
    %4636 = vmatprep.subr.mxu0 0.0
    %4637 = vmatpush1.msra.mxu0 %v334
    %4638 = vmatprep.subr.mxu0 0.0
    %4639 = vmatpush1.msra.mxu0 %v335
    %4640 = vmatprep.subr.mxu0 0.0
    %4641 = vmatpush1.msra.mxu0 %v336
    %4642 = vmatprep.subr.mxu0 0.0
    %4643 = vmatpush1.msra.mxu0 %v337
    %4644 = vmatprep.subr.mxu0 0.0
    %4645 = vmatpush1.msra.mxu0 %v338
    %4646 = vmatprep.subr.mxu0 0.0
    %4647 = vmatpush1.msra.mxu0 %v339
    %4648 = vmatprep.subr.mxu0 0.0
    %4649 = vmatpush1.msra.mxu0 %v340
    %4650 = vmatprep.subr.mxu0 0.0
    %4651 = vmatpush1.msra.mxu0 %v341
    %4652 = vmatprep.subr.mxu0 0.0
    %4653 = vmatpush1.msra.mxu0 %v342
    %4654 = vmatprep.subr.mxu0 0.0
    %4655 = vmatpush1.msra.mxu0 %v343
    %4656 = vmatprep.subr.mxu0 0.0
    %4657 = vmatpush1.msra.mxu0 %v344
    %4658 = vmatprep.subr.mxu0 0.0
    %4659 = vmatpush1.msra.mxu0 %v345
    %4660 = vmatprep.subr.mxu0 0.0
    %4661 = vmatpush1.msra.mxu0 %v346
    %4662 = vmatprep.subr.mxu0 0.0
    %4663 = vmatpush1.msra.mxu0 %v347
    %4664 = vmatprep.subr.mxu0 0.0
    %4665 = vmatpush1.msra.mxu0 %v348
    %4666 = vmatprep.subr.mxu0 0.0
    %4667 = vmatpush1.msra.mxu0 %v349
    %4668 = vmatprep.subr.mxu0 0.0
    %4669 = vmatpush1.msra.mxu0 %v350
    %4670 = vmatprep.subr.mxu0 0.0
    %4671 = vmatpush1.msra.mxu0 %v351
    %4672 = vmatprep.subr.mxu0 0.0
    %4673 = vmatpush1.msra.mxu0 %v352
    %4674 = vmatprep.subr.mxu0 0.0
    %4675 = vmatpush1.msra.mxu0 %v353
    %4676 = vmatprep.subr.mxu0 0.0
    %4677 = vmatpush1.msra.mxu0 %v354
    %4678 = vmatprep.subr.mxu0 0.0
    %4679 = vmatpush1.msra.mxu0 %v355
    %4680 = vmatprep.subr.mxu0 0.0
    %4681 = vmatpush1.msra.mxu0 %v356
    %4682 = vmatprep.subr.mxu0 0.0
    %4683 = vmatpush1.msra.mxu0 %v357
    %4684 = vmatprep.subr.mxu0 0.0
    %4685 = vmatpush1.msra.mxu0 %v358
    %4686 = vmatprep.subr.mxu0 0.0
    %4687 = vmatpush1.msra.mxu0 %v359
    %4688 = vmatprep.subr.mxu0 0.0
    %4689 = vmatpush1.msra.mxu0 %v360
    %4690 = vmatprep.subr.mxu0 0.0
    %4691 = vmatpush1.msra.mxu0 %v361
    %4692 = vmatprep.mubr.f32.mxu0 %v3131
    %4693 = vmatmul.mubr.f32.gmra.mrb[0].mxu0 %v2813
    %v4694 = vpop.f32.mrb[0].mxu0
    %v4695 = vadd.f32 %v4625, %v4694
    %v4696 = vpop.f32.mrb[0].mxu0
    %4697 = vdwg.mxu0
    %4698 = vmatprep.subr.mxu0 0.0
    %4699 = vmatpush1.msra.mxu0 %v362
    %4700 = vmatprep.subr.mxu0 0.0
    %4701 = vmatpush1.msra.mxu0 %v363
    %4702 = vmatprep.subr.mxu0 0.0
    %4703 = vmatpush1.msra.mxu0 %v364
    %4704 = vmatprep.subr.mxu0 0.0
    %4705 = vmatpush1.msra.mxu0 %v365
    %4706 = vmatprep.subr.mxu0 0.0
    %4707 = vmatpush1.msra.mxu0 %v366
    %4708 = vmatprep.subr.mxu0 0.0
    %4709 = vmatpush1.msra.mxu0 %v367
    %4710 = vmatprep.subr.mxu0 0.0
    %4711 = vmatpush1.msra.mxu0 %v368
    %4712 = vmatprep.subr.mxu0 0.0
    %4713 = vmatpush1.msra.mxu0 %v369
    %4714 = vmatprep.subr.mxu0 0.0
    %4715 = vmatpush1.msra.mxu0 %v370
    %4716 = vmatprep.subr.mxu0 0.0
    %4717 = vmatpush1.msra.mxu0 %v371
    %4718 = vmatprep.subr.mxu0 0.0
    %4719 = vmatpush1.msra.mxu0 %v372
    %4720 = vmatprep.subr.mxu0 0.0
    %4721 = vmatpush1.msra.mxu0 %v373
    %4722 = vmatprep.subr.mxu0 0.0
    %4723 = vmatpush1.msra.mxu0 %v374
    %4724 = vmatprep.subr.mxu0 0.0
    %4725 = vmatpush1.msra.mxu0 %v375
    %4726 = vmatprep.subr.mxu0 0.0
    %4727 = vmatpush1.msra.mxu0 %v376
    %4728 = vmatprep.subr.mxu0 0.0
    %4729 = vmatpush1.msra.mxu0 %v377
    %4730 = vmatprep.subr.mxu0 0.0
    %4731 = vmatpush1.msra.mxu0 %v378
    %4732 = vmatprep.subr.mxu0 0.0
    %4733 = vmatpush1.msra.mxu0 %v379
    %4734 = vmatprep.subr.mxu0 0.0
    %4735 = vmatpush1.msra.mxu0 %v380
    %4736 = vmatprep.subr.mxu0 0.0
    %4737 = vmatpush1.msra.mxu0 %v381
    %4738 = vmatprep.subr.mxu0 0.0
    %4739 = vmatpush1.msra.mxu0 %v382
    %4740 = vmatprep.subr.mxu0 0.0
    %4741 = vmatpush1.msra.mxu0 %v383
    %4742 = vmatprep.subr.mxu0 0.0
    %4743 = vmatpush1.msra.mxu0 %v384
    %4744 = vmatprep.subr.mxu0 0.0
    %4745 = vmatpush1.msra.mxu0 %v385
    %4746 = vmatprep.subr.mxu0 0.0
    %4747 = vmatpush1.msra.mxu0 %v386
    %4748 = vmatprep.subr.mxu0 0.0
    %4749 = vmatpush1.msra.mxu0 %v387
    %4750 = vmatprep.subr.mxu0 0.0
    %4751 = vmatpush1.msra.mxu0 %v388
    %4752 = vmatprep.subr.mxu0 0.0
    %4753 = vmatpush1.msra.mxu0 %v389
    %4754 = vmatprep.subr.mxu0 0.0
    %4755 = vmatpush1.msra.mxu0 %v390
    %4756 = vmatprep.subr.mxu0 0.0
    %4757 = vmatpush1.msra.mxu0 %v391
    %4758 = vmatprep.subr.mxu0 0.0
    %4759 = vmatpush1.msra.mxu0 %v392
    %4760 = vmatprep.subr.mxu0 0.0
    %4761 = vmatpush1.msra.mxu0 %v393
    %4762 = vmatprep.mubr.f32.mxu0 %v3780
    %4763 = vmatmul.mubr.f32.gmra.mrb[0].mxu0 %v3466
    %v4764 = vpop.f32.mrb[0].mxu0
    %v4765 = vadd.f32 %v4695, %v4764
    %v4766 = vpop.f32.mrb[0].mxu0
    %4767 = vdwg.mxu0
    %4768 = vmatprep.subr.mxu0 0.0
    %4769 = vmatpush1.msra.mxu0 %v394
    %4770 = vmatprep.subr.mxu0 0.0
    %4771 = vmatpush1.msra.mxu0 %v395
    %4772 = vmatprep.subr.mxu0 0.0
    %4773 = vmatpush1.msra.mxu0 %v396
    %4774 = vmatprep.subr.mxu0 0.0
    %4775 = vmatpush1.msra.mxu0 %v397
    %4776 = vmatprep.subr.mxu0 0.0
    %4777 = vmatpush1.msra.mxu0 %v398
    %4778 = vmatprep.subr.mxu0 0.0
    %4779 = vmatpush1.msra.mxu0 %v399
    %4780 = vmatprep.subr.mxu0 0.0
    %4781 = vmatpush1.msra.mxu0 %v400
    %4782 = vmatprep.subr.mxu0 0.0
    %4783 = vmatpush1.msra.mxu0 %v401
    %4784 = vmatprep.subr.mxu0 0.0
    %4785 = vmatpush1.msra.mxu0 %v402
    %4786 = vmatprep.subr.mxu0 0.0
    %4787 = vmatpush1.msra.mxu0 %v403
    %4788 = vmatprep.subr.mxu0 0.0
    %4789 = vmatpush1.msra.mxu0 %v404
    %4790 = vmatprep.subr.mxu0 0.0
    %4791 = vmatpush1.msra.mxu0 %v405
    %4792 = vmatprep.subr.mxu0 0.0
    %4793 = vmatpush1.msra.mxu0 %v406
    %4794 = vmatprep.subr.mxu0 0.0
    %4795 = vmatpush1.msra.mxu0 %v407
    %4796 = vmatprep.subr.mxu0 0.0
    %4797 = vmatpush1.msra.mxu0 %v408
    %4798 = vmatprep.subr.mxu0 0.0
    %4799 = vmatpush1.msra.mxu0 %v409
    %4800 = vmatprep.subr.mxu0 0.0
    %4801 = vmatpush1.msra.mxu0 %v410
    %4802 = vmatprep.subr.mxu0 0.0
    %4803 = vmatpush1.msra.mxu0 %v411
    %4804 = vmatprep.subr.mxu0 0.0
    %4805 = vmatpush1.msra.mxu0 %v412
    %4806 = vmatprep.subr.mxu0 0.0
    %4807 = vmatpush1.msra.mxu0 %v413
    %4808 = vmatprep.subr.mxu0 0.0
    %4809 = vmatpush1.msra.mxu0 %v414
    %4810 = vmatprep.subr.mxu0 0.0
    %4811 = vmatpush1.msra.mxu0 %v415
    %4812 = vmatprep.subr.mxu0 0.0
    %4813 = vmatpush1.msra.mxu0 %v416
    %4814 = vmatprep.subr.mxu0 0.0
    %4815 = vmatpush1.msra.mxu0 %v417
    %4816 = vmatprep.subr.mxu0 0.0
    %4817 = vmatpush1.msra.mxu0 %v418
    %4818 = vmatprep.subr.mxu0 0.0
    %4819 = vmatpush1.msra.mxu0 %v419
    %4820 = vmatprep.subr.mxu0 0.0
    %4821 = vmatpush1.msra.mxu0 %v420
    %4822 = vmatprep.subr.mxu0 0.0
    %4823 = vmatpush1.msra.mxu0 %v421
    %4824 = vmatprep.subr.mxu0 0.0
    %4825 = vmatpush1.msra.mxu0 %v422
    %4826 = vmatprep.subr.mxu0 0.0
    %4827 = vmatpush1.msra.mxu0 %v423
    %4828 = vmatprep.subr.mxu0 0.0
    %4829 = vmatpush1.msra.mxu0 %v424
    %4830 = vmatprep.subr.mxu0 0.0
    %4831 = vmatpush1.msra.mxu0 %v425
    %4832 = vmatprep.mubr.f32.mxu0 %v4408
    %4833 = vmatmul.mubr.f32.gmra.mrb[0].mxu0 %v4094
    %v4834 = vpop.f32.mrb[0].mxu0
    %v4835 = vadd.f32 %v4765, %v4834
    %v4836 = vpop.f32.mrb[0].mxu0
    %4837 = vdwg.mxu0
    %vm4838 = vcmask 91136
    %4839 = vst.msk [vmem:[#allocation3] sm:$0x3] %vm4838, %v4835
    // Predicated region
    $region42: #{tpu_custom_call.1} parent=1 // pred_check
      _
    $region43: #{tpu_custom_call.1} parent=1 // pred_check_branch
      %4841 = sbr.rel (0) target = $region45
    $region44: #{tpu_custom_call.1} parent=1 // pred_region
      %s4843 = ssub.s32 32, 32
      %4844 = vsyncadd [#allocation4], %s4843
      %s4846 = sshll.u32 [#allocation3], 4
      %s4847 = int_to_ptr.vmem [resolvable:$true] %s4846
      %4849 = dma.vmem_to_hbm [thread:$0]  %s4847, 32, %s10, [#allocation4]
    $region45: #{tpu_custom_call.1} parent=1 // pred_fallthru
      _
    // Predicated region
    $region46: #{tpu_custom_call.1} parent=1 // pred_check
      _
    $region47: #{tpu_custom_call.1} parent=1 // pred_check_branch
      %4851 = sbr.rel (0) target = $region49
    $region48: #{tpu_custom_call.1} parent=1 // pred_region
      %4852 = dma.done [#allocation4], 32
    $region49: #{tpu_custom_call.1} parent=1 // pred_fallthru
      _
    %4853 = vsyncpa [#allocation4], 1

</llo_original>
